<compile_context>
chip_gen: v5e
topology: v5e:2x2
jax: 0.10.0
libtpu: 0.0.40
codegen_flags: <defaults>
</compile_context>

<pallas_src>
import functools

import jax
import jax.numpy as jnp
from jax.experimental import pallas as pl
from jax.experimental.pallas import tpu as pltpu

KSIZE = 7
PAD = 3


def _round_up(n, m):
    return ((n + m - 1) // m) * m


def _cbam_kernel(x_ref, w1t_ref, w2_ref, cw_ref, cb_ref, o_ref, pad_ref,
                 *, Bt, C, W, HW, LPAD, PADDED):
    # x_ref  : (Bt, C, HW) VMEM        w1t_ref/w2_ref : (C, Cr) VMEM
    # cw_ref : (2, 49)     VMEM        cb_ref         : (1,)    SMEM
    # o_ref  : (Bt, C, HW) VMEM        pad_ref        : (2, PADDED) VMEM scratch

    # Loop-invariant values: weights and the per-column index (built in-kernel,
    # no host-side mask operand needed).
    w1t_v = w1t_ref[...]                                   # (C, Cr)
    w2_v = w2_ref[...]                                     # (C, Cr)
    cwv = cw_ref[...]                                      # (2, 49) conv weights
    bias = cb_ref[0]
    col = jnp.mod(jax.lax.broadcasted_iota(jnp.int32, (1, HW), 1), W)  # (1, HW)

    # Zero only the scratch halo, once per grid step (the interior is fully
    # rewritten per batch element).  Done every step -- never gated on
    # program_id == 0 -- so each TensorCore's private scratch is always clean.
    pad_ref[:, 0:LPAD] = jnp.zeros((2, LPAD), jnp.float32)
    pad_ref[:, LPAD + HW:PADDED] = jnp.zeros((2, PADDED - LPAD - HW), jnp.float32)

    for bi in range(Bt):
        xb = x_ref[bi].astype(jnp.float32)                 # (C, HW) lane-dense

        # ---------------- Channel attention ----------------
        avg_c = jnp.mean(xb, axis=1, keepdims=True)        # (C, 1)
        max_c = jnp.max(xb, axis=1, keepdims=True)         # (C, 1)
        # layer 1: h[j] = relu(sum_c pooled[c] * W1[j, c])          -> (1, Cr)
        h_a = jnp.maximum(jnp.sum(avg_c * w1t_v, axis=0, keepdims=True), 0.0)
        h_m = jnp.maximum(jnp.sum(max_c * w1t_v, axis=0, keepdims=True), 0.0)
        # layer 2: o[c] = sum_j W2[c, j] * h[j]                     -> (C, 1)
        o_a = jnp.sum(w2_v * h_a, axis=1, keepdims=True)
        o_m = jnp.sum(w2_v * h_m, axis=1, keepdims=True)
        ca = jax.nn.sigmoid(o_a + o_m)                     # (C, 1)

        # ------------- Spatial pooling of the scaled activation -------------
        # x*ca is only needed for these two channel reductions; it is NOT kept
        # live across the conv, and the final store recomputes the product.
        scaled = xb * ca                                   # short-lived (C, HW)
        avg_s = jnp.mean(scaled, axis=0, keepdims=True)    # (1, HW)
        max_s = jnp.max(scaled, axis=0, keepdims=True)     # (1, HW)

        # Lane-aligned writes into the zero-padded flat planes [halo|data|halo].
        pad_ref[0:1, LPAD:LPAD + HW] = avg_s
        pad_ref[1:2, LPAD:LPAD + HW] = max_s
        planes = pad_ref[...]                              # single (2, PADDED) load

        # ------------- 7x7 conv (2 in-planes -> 1), flat domain -------------
        # One lane-shift slice per tap serves BOTH planes; per-plane weights are a
        # (2,1) lane slice of the preloaded (2,49) weight value; the per-kx column
        # mask kills taps that would wrap across a row boundary.
        acc2 = jnp.zeros((2, HW), jnp.float32)
        for kx in range(KSIZE):
            part = jnp.zeros((2, HW), jnp.float32)
            for ky in range(KSIZE):
                k = ky * KSIZE + kx
                s = LPAD + (ky - PAD) * W + (kx - PAD)     # static lane offset
                part = part + planes[:, s:s + HW] * cwv[:, k:k + 1]
            cshift = col + (kx - PAD)
            maskf = jnp.where((cshift >= 0) & (cshift < W), 1.0, 0.0)  # (1, HW)
            acc2 = acc2 + part * maskf
        conv = jnp.sum(acc2, axis=0, keepdims=True) + bias  # (1, HW)
        sa = jax.nn.sigmoid(conv)

        # Final scale: recompute from the resident input block (one extra VPU mul
        # riding under the vst-limited store pass) instead of re-reading out1.
        o_ref[bi] = (x_ref[bi] * sa * ca).astype(o_ref.dtype)


def cbam(x, mlp_w1, mlp_w2, conv_w, conv_b):
    """Full CBAM forward.

    x       : (B, C, H, W) float32
    mlp_w1  : (C//r, C, 1, 1)  -- ChannelAttention shared_MLP[0] (no bias)
    mlp_w2  : (C, C//r, 1, 1)  -- ChannelAttention shared_MLP[2] (no bias)
    conv_w  : (1, 2, 7, 7)     -- SpatialAttention conv2d weight
    conv_b  : (1,)             -- SpatialAttention conv2d bias
    returns : (B, C, H, W)
    """
    B, C, H, W = x.shape
    HW = H * W
    HALO = PAD * W + PAD                          # worst-case tap reach
    LPAD = _round_up(HALO, 128)                   # lane-aligned left halo
    PADDED = _round_up(LPAD + HW + HALO, 128)     # padded flat-row length

    # Batch-block size: amortize per-step overhead at small shapes, but keep >= 2
    # grid steps when possible so v7x's two TensorCores both get work.
    Bt = 1
    for cand in (8, 4, 2):
        if B % cand == 0 and B // cand >= 2:
            Bt = cand
            break
    grid_b = B // Bt

    x2 = x.reshape(B, C, HW)                                        # lane-dense layout
    w1 = mlp_w1.reshape(mlp_w1.shape[0], C).astype(jnp.float32)     # (Cr, C)
    w1t = jnp.transpose(w1)                                         # (C, Cr)
    w2 = mlp_w2.reshape(C, -1).astype(jnp.float32)                  # (C, Cr)
    Cr = w2.shape[1]
    cw2 = conv_w.reshape(2, KSIZE * KSIZE).astype(jnp.float32)      # (2, 49) [c, ky*7+kx]
    cb = conv_b.reshape(-1).astype(jnp.float32)                     # (1,)

    kernel = functools.partial(_cbam_kernel, Bt=Bt, C=C, W=W,
                               HW=HW, LPAD=LPAD, PADDED=PADDED)

    out2 = pl.pallas_call(
        kernel,
        out_shape=jax.ShapeDtypeStruct((B, C, HW), x.dtype),
        grid_spec=pltpu.PrefetchScalarGridSpec(
            num_scalar_prefetch=0,
            grid=(grid_b,),
            in_specs=[
                pl.BlockSpec((Bt, C, HW), lambda b: (b, 0, 0)),
                pl.BlockSpec((C, Cr), lambda b: (0, 0)),
                pl.BlockSpec((C, Cr), lambda b: (0, 0)),
                pl.BlockSpec((2, KSIZE * KSIZE), lambda b: (0, 0)),
                pl.BlockSpec(memory_space=pltpu.MemorySpace.SMEM),
            ],
            out_specs=pl.BlockSpec((Bt, C, HW), lambda b: (b, 0, 0)),
            scratch_shapes=[pltpu.VMEM((2, PADDED), jnp.float32)],
        ),
        compiler_params=pltpu.CompilerParams(
            dimension_semantics=("parallel",),
            vmem_limit_bytes=64 * 1024 * 1024,
        ),
    )(x2, w1t, w2, cw2, cb)

    return out2.reshape(B, C, H, W)


def cbam_ref(x, mlp_w1, mlp_w2, conv_w, conv_b):
    """Pure-JAX reference matching the PyTorch CBAM forward."""
    B, C, H, W = x.shape
    w1 = mlp_w1.reshape(mlp_w1.shape[0], C)           # (Cr, C)
    w2 = mlp_w2.reshape(C, -1)                        # (C, Cr)

    avg = jnp.mean(x, axis=(2, 3))                    # (B, C)
    mx = jnp.max(x, axis=(2, 3))                      # (B, C)

    def mlp(v):
        return jnp.maximum(v @ w1.T, 0.0) @ w2.T      # (B, C)

    ca = jax.nn.sigmoid(mlp(avg) + mlp(mx))
    out1 = x * ca[:, :, None, None]

    avg_s = jnp.mean(out1, axis=1, keepdims=True)
    max_s = jnp.max(out1, axis=1, keepdims=True)
    cat = jnp.concatenate([avg_s, max_s], axis=1)     # (B, 2, H, W)
    conv = jax.lax.conv_general_dilated(
        cat, conv_w, window_strides=(1, 1), padding=((PAD, PAD), (PAD, PAD)),
        dimension_numbers=("NCHW", "OIHW", "NCHW"))
    sa = jax.nn.sigmoid(conv + conv_b.reshape(1, 1, 1, 1))
    return out1 * sa


if __name__ == "__main__":
    key = jax.random.PRNGKey(0)
    kx_, k1, k2, kw, kb = jax.random.split(key, 5)

    B, C, H, W = 4, 32, 16, 16       # ratio=16 -> hidden channels C//16 = 2
    RATIO = 16
    Cr = C // RATIO

    x = jax.random.normal(kx_, (B, C, H, W), dtype=jnp.float32)
    mlp_w1 = jax.random.normal(k1, (Cr, C, 1, 1), dtype=jnp.float32) * 0.1
    mlp_w2 = jax.random.normal(k2, (C, Cr, 1, 1), dtype=jnp.float32) * 0.1
    conv_w = jax.random.normal(kw, (1, 2, KSIZE, KSIZE), dtype=jnp.float32) * 0.1
    conv_b = jax.random.normal(kb, (1,), dtype=jnp.float32) * 0.1

    out = cbam(x, mlp_w1, mlp_w2, conv_w, conv_b)
    out = jax.block_until_ready(out)

    ref = cbam_ref(x, mlp_w1, mlp_w2, conv_w, conv_b)
    assert out.shape == (B, C, H, W)
    assert jnp.max(jnp.abs(out - ref)) < 2e-5

    print("KERNEL_OK")
</pallas_src>

<mosaic_0001>
module attributes {stable_mosaic.version = 11 : i64} {
  func.func @_cbam_kernel(%arg0: i32, %arg1: memref<2x32x256xf32, #tpu.memory_space<vmem>>, %arg2: memref<32x2xf32, #tpu.memory_space<vmem>>, %arg3: memref<32x2xf32, #tpu.memory_space<vmem>>, %arg4: memref<2x49xf32, #tpu.memory_space<vmem>>, %arg5: memref<1xf32, #tpu.memory_space<smem>>, %arg6: memref<2x32x256xf32, #tpu.memory_space<vmem>>, %arg7: memref<2x512xf32, #tpu.memory_space<vmem>>) attributes {dimension_semantics = [#tpu.dimension_semantics<parallel>], iteration_bounds = array<i64: 2>, scalar_prefetch = 0 : i64, scratch_operands = 1 : i64, tpu.core_type = #tpu.core_type<tc>, window_params = [{transform_indices = @transform_0, window_bounds = array<i64: 2, 32, 256>}, {pipeline_mode = #tpu.pipeline_mode<synchronous>, transform_indices = @transform_1, window_bounds = array<i64: 32, 2>}, {pipeline_mode = #tpu.pipeline_mode<synchronous>, transform_indices = @transform_2, window_bounds = array<i64: 32, 2>}, {pipeline_mode = #tpu.pipeline_mode<synchronous>, transform_indices = @transform_3, window_bounds = array<i64: 2, 49>}, {transform_indices = @transform_4, window_bounds = array<i64: 1>}, {transform_indices = @transform_5, window_bounds = array<i64: 2, 32, 256>}]} {
    %c0 = arith.constant 0 : index
    %c0_0 = arith.constant 0 : index
    %0 = vector.load %arg2[%c0, %c0_0] : memref<32x2xf32, #tpu.memory_space<vmem>>, vector<32x2xf32>
    %c0_1 = arith.constant 0 : index
    %c0_2 = arith.constant 0 : index
    %1 = vector.load %arg3[%c0_1, %c0_2] : memref<32x2xf32, #tpu.memory_space<vmem>>, vector<32x2xf32>
    %c0_3 = arith.constant 0 : index
    %c0_4 = arith.constant 0 : index
    %2 = vector.load %arg4[%c0_3, %c0_4] : memref<2x49xf32, #tpu.memory_space<vmem>>, vector<2x49xf32>
    %c0_5 = arith.constant 0 : index
    %3 = memref.load %arg5[%c0_5] : memref<1xf32, #tpu.memory_space<smem>>
    %4 = tpu.iota {dimensions = array<i32: 1>} : vector<1x256xi32>
    %c16_i32 = arith.constant 16 : i32
    %c0_i32 = arith.constant 0 : i32
    %5 = arith.cmpi eq, %c16_i32, %c0_i32 : i32
    %c1_i32 = arith.constant 1 : i32
    %6 = arith.select %5, %c1_i32, %c16_i32 : i32
    %7 = vector.broadcast %6 : i32 to vector<1x256xi32>
    %8 = arith.remsi %4, %7 : vector<1x256xi32>
    %c0_i32_6 = arith.constant 0 : i32
    %9 = vector.broadcast %c0_i32_6 : i32 to vector<1x256xi32>
    %10 = arith.cmpi ne, %8, %9 : vector<1x256xi32>
    %c0_i32_7 = arith.constant 0 : i32
    %11 = vector.broadcast %c0_i32_7 : i32 to vector<1x256xi32>
    %12 = arith.cmpi slt, %8, %11 : vector<1x256xi32>
    %c0_i32_8 = arith.constant 0 : i32
    %13 = arith.cmpi slt, %6, %c0_i32_8 : i32
    %14 = vector.broadcast %13 : i1 to vector<1x256xi1>
    %15 = vector.broadcast %14 : vector<1x256xi1> to vector<1x256xi1>
    %16 = arith.xori %12, %15 : vector<1x256xi1>
    %17 = arith.andi %16, %10 : vector<1x256xi1>
    %18 = vector.broadcast %6 : i32 to vector<1x256xi32>
    %19 = arith.addi %8, %18 : vector<1x256xi32>
    %20 = arith.select %17, %19, %8 : vector<1x256xi1>, vector<1x256xi32>
    %cst = arith.constant 0.000000e+00 : f32
    %21 = vector.broadcast %cst : f32 to vector<2x128xf32>
    %c0_9 = arith.constant 0 : index
    %c0_10 = arith.constant 0 : index
    %22 = vector.load %arg7[%c0_9, %c0_10] : memref<2x512xf32, #tpu.memory_space<vmem>>, vector<2x128xf32>
    tpu.vector_store %arg7[%c0_9, %c0_10], %21 {strides = array<i32>} : memref<2x512xf32, #tpu.memory_space<vmem>>, vector<2x128xf32>,
    %cst_11 = arith.constant 0.000000e+00 : f32
    %23 = vector.broadcast %cst_11 : f32 to vector<2x128xf32>
    %c0_12 = arith.constant 0 : index
    %c384 = arith.constant 384 : index
    %24 = vector.load %arg7[%c0_12, %c384] : memref<2x512xf32, #tpu.memory_space<vmem>>, vector<2x128xf32>
    tpu.vector_store %arg7[%c0_12, %c384], %23 {strides = array<i32>} : memref<2x512xf32, #tpu.memory_space<vmem>>, vector<2x128xf32>,
    %c0_13 = arith.constant 0 : index
    %c0_14 = arith.constant 0 : index
    %c0_15 = arith.constant 0 : index
    %25 = vector.load %arg1[%c0_13, %c0_14, %c0_15] : memref<2x32x256xf32, #tpu.memory_space<vmem>>, vector<1x32x256xf32>
    %26 = vector.shape_cast %25 : vector<1x32x256xf32> to vector<32x256xf32>
    %cst_16 = arith.constant dense<0.000000e+00> : vector<32xf32>
    %27 = vector.multi_reduction <add>, %26, %cst_16 [1] : vector<32x256xf32> to vector<32xf32>
    %28 = vector.shape_cast %27 : vector<32xf32> to vector<32x1xf32>
    %cst_17 = arith.constant 2.560000e+02 : f32
    %29 = vector.broadcast %cst_17 : f32 to vector<32x1xf32>
    %30 = arith.divf %28, %29 : vector<32x1xf32>
    %cst_18 = arith.constant dense<0xFF800000> : vector<32xf32>
    %31 = vector.multi_reduction <maximumf>, %26, %cst_18 [1] : vector<32x256xf32> to vector<32xf32>
    %32 = vector.shape_cast %31 : vector<32xf32> to vector<32x1xf32>
    %33 = vector.broadcast %30 : vector<32x1xf32> to vector<32x2xf32>
    %34 = arith.mulf %33, %0 : vector<32x2xf32>
    %cst_19 = arith.constant dense<0.000000e+00> : vector<2xf32>
    %35 = vector.multi_reduction <add>, %34, %cst_19 [0] : vector<32x2xf32> to vector<2xf32>
    %36 = vector.shape_cast %35 : vector<2xf32> to vector<1x2xf32>
    %cst_20 = arith.constant 0.000000e+00 : f32
    %37 = vector.broadcast %cst_20 : f32 to vector<1x2xf32>
    %38 = arith.maximumf %36, %37 : vector<1x2xf32>
    %39 = vector.broadcast %32 : vector<32x1xf32> to vector<32x2xf32>
    %40 = arith.mulf %39, %0 : vector<32x2xf32>
    %cst_21 = arith.constant dense<0.000000e+00> : vector<2xf32>
    %41 = vector.multi_reduction <add>, %40, %cst_21 [0] : vector<32x2xf32> to vector<2xf32>
    %42 = vector.shape_cast %41 : vector<2xf32> to vector<1x2xf32>
    %cst_22 = arith.constant 0.000000e+00 : f32
    %43 = vector.broadcast %cst_22 : f32 to vector<1x2xf32>
    %44 = arith.maximumf %42, %43 : vector<1x2xf32>
    %45 = vector.broadcast %38 : vector<1x2xf32> to vector<32x2xf32>
    %46 = arith.mulf %1, %45 : vector<32x2xf32>
    %cst_23 = arith.constant dense<0.000000e+00> : vector<32xf32>
    %47 = vector.multi_reduction <add>, %46, %cst_23 [1] : vector<32x2xf32> to vector<32xf32>
    %48 = vector.shape_cast %47 : vector<32xf32> to vector<32x1xf32>
    %49 = vector.broadcast %44 : vector<1x2xf32> to vector<32x2xf32>
    %50 = arith.mulf %1, %49 : vector<32x2xf32>
    %cst_24 = arith.constant dense<0.000000e+00> : vector<32xf32>
    %51 = vector.multi_reduction <add>, %50, %cst_24 [1] : vector<32x2xf32> to vector<32xf32>
    %52 = vector.shape_cast %51 : vector<32xf32> to vector<32x1xf32>
    %53 = arith.addf %48, %52 : vector<32x1xf32>
    %54 = arith.negf %53 : vector<32x1xf32>
    %55 = math.exp %54 : vector<32x1xf32>
    %cst_25 = arith.constant 1.000000e+00 : f32
    %56 = vector.broadcast %cst_25 : f32 to vector<32x1xf32>
    %57 = arith.addf %56, %55 : vector<32x1xf32>
    %58 = arith.divf %56, %57 : vector<32x1xf32>
    %59 = vector.broadcast %58 : vector<32x1xf32> to vector<32x256xf32>
    %60 = arith.mulf %26, %59 : vector<32x256xf32>
    %cst_26 = arith.constant dense<0.000000e+00> : vector<256xf32>
    %61 = vector.multi_reduction <add>, %60, %cst_26 [0] : vector<32x256xf32> to vector<256xf32>
    %62 = vector.shape_cast %61 : vector<256xf32> to vector<1x256xf32>
    %cst_27 = arith.constant 3.200000e+01 : f32
    %63 = vector.broadcast %cst_27 : f32 to vector<1x256xf32>
    %64 = arith.divf %62, %63 : vector<1x256xf32>
    %cst_28 = arith.constant dense<0xFF800000> : vector<256xf32>
    %65 = vector.multi_reduction <maximumf>, %60, %cst_28 [0] : vector<32x256xf32> to vector<256xf32>
    %66 = vector.shape_cast %65 : vector<256xf32> to vector<1x256xf32>
    %c0_29 = arith.constant 0 : index
    %c128 = arith.constant 128 : index
    %67 = vector.load %arg7[%c0_29, %c128] : memref<2x512xf32, #tpu.memory_space<vmem>>, vector<1x256xf32>
    tpu.vector_store %arg7[%c0_29, %c128], %64 {strides = array<i32>} : memref<2x512xf32, #tpu.memory_space<vmem>>, vector<1x256xf32>,
    %c1 = arith.constant 1 : index
    %c128_30 = arith.constant 128 : index
    %68 = vector.load %arg7[%c1, %c128_30] : memref<2x512xf32, #tpu.memory_space<vmem>>, vector<1x256xf32>
    tpu.vector_store %arg7[%c1, %c128_30], %66 {strides = array<i32>} : memref<2x512xf32, #tpu.memory_space<vmem>>, vector<1x256xf32>,
    %c0_31 = arith.constant 0 : index
    %c0_32 = arith.constant 0 : index
    %69 = vector.load %arg7[%c0_31, %c0_32] : memref<2x512xf32, #tpu.memory_space<vmem>>, vector<2x512xf32>
    %cst_33 = arith.constant 0.000000e+00 : f32
    %70 = vector.broadcast %cst_33 : f32 to vector<2x256xf32>
    %cst_34 = arith.constant 0.000000e+00 : f32
    %71 = vector.broadcast %cst_34 : f32 to vector<2x256xf32>
    %72 = vector.extract_strided_slice %69 {offsets = [0, 77], sizes = [2, 256], strides = [1, 1]} : vector<2x512xf32> to vector<2x256xf32>
    %73 = vector.extract_strided_slice %2 {offsets = [0, 0], sizes = [2, 1], strides = [1, 1]} : vector<2x49xf32> to vector<2x1xf32>
    %74 = vector.broadcast %73 : vector<2x1xf32> to vector<2x256xf32>
    %75 = arith.mulf %72, %74 : vector<2x256xf32>
    %76 = arith.addf %71, %75 : vector<2x256xf32>
    %77 = vector.extract_strided_slice %69 {offsets = [0, 93], sizes = [2, 256], strides = [1, 1]} : vector<2x512xf32> to vector<2x256xf32>
    %78 = vector.extract_strided_slice %2 {offsets = [0, 7], sizes = [2, 1], strides = [1, 1]} : vector<2x49xf32> to vector<2x1xf32>
    %79 = vector.broadcast %78 : vector<2x1xf32> to vector<2x256xf32>
    %80 = arith.mulf %77, %79 : vector<2x256xf32>
    %81 = arith.addf %76, %80 : vector<2x256xf32>
    %82 = vector.extract_strided_slice %69 {offsets = [0, 109], sizes = [2, 256], strides = [1, 1]} : vector<2x512xf32> to vector<2x256xf32>
    %83 = vector.extract_strided_slice %2 {offsets = [0, 14], sizes = [2, 1], strides = [1, 1]} : vector<2x49xf32> to vector<2x1xf32>
    %84 = vector.broadcast %83 : vector<2x1xf32> to vector<2x256xf32>
    %85 = arith.mulf %82, %84 : vector<2x256xf32>
    %86 = arith.addf %81, %85 : vector<2x256xf32>
    %87 = vector.extract_strided_slice %69 {offsets = [0, 125], sizes = [2, 256], strides = [1, 1]} : vector<2x512xf32> to vector<2x256xf32>
    %88 = vector.extract_strided_slice %2 {offsets = [0, 21], sizes = [2, 1], strides = [1, 1]} : vector<2x49xf32> to vector<2x1xf32>
    %89 = vector.broadcast %88 : vector<2x1xf32> to vector<2x256xf32>
    %90 = arith.mulf %87, %89 : vector<2x256xf32>
    %91 = arith.addf %86, %90 : vector<2x256xf32>
    %92 = vector.extract_strided_slice %69 {offsets = [0, 141], sizes = [2, 256], strides = [1, 1]} : vector<2x512xf32> to vector<2x256xf32>
    %93 = vector.extract_strided_slice %2 {offsets = [0, 28], sizes = [2, 1], strides = [1, 1]} : vector<2x49xf32> to vector<2x1xf32>
    %94 = vector.broadcast %93 : vector<2x1xf32> to vector<2x256xf32>
    %95 = arith.mulf %92, %94 : vector<2x256xf32>
    %96 = arith.addf %91, %95 : vector<2x256xf32>
    %97 = vector.extract_strided_slice %69 {offsets = [0, 157], sizes = [2, 256], strides = [1, 1]} : vector<2x512xf32> to vector<2x256xf32>
    %98 = vector.extract_strided_slice %2 {offsets = [0, 35], sizes = [2, 1], strides = [1, 1]} : vector<2x49xf32> to vector<2x1xf32>
    %99 = vector.broadcast %98 : vector<2x1xf32> to vector<2x256xf32>
    %100 = arith.mulf %97, %99 : vector<2x256xf32>
    %101 = arith.addf %96, %100 : vector<2x256xf32>
    %102 = vector.extract_strided_slice %69 {offsets = [0, 173], sizes = [2, 256], strides = [1, 1]} : vector<2x512xf32> to vector<2x256xf32>
    %103 = vector.extract_strided_slice %2 {offsets = [0, 42], sizes = [2, 1], strides = [1, 1]} : vector<2x49xf32> to vector<2x1xf32>
    %104 = vector.broadcast %103 : vector<2x1xf32> to vector<2x256xf32>
    %105 = arith.mulf %102, %104 : vector<2x256xf32>
    %106 = arith.addf %101, %105 : vector<2x256xf32>
    %c-3_i32 = arith.constant -3 : i32
    %107 = vector.broadcast %c-3_i32 : i32 to vector<1x256xi32>
    %108 = arith.addi %20, %107 : vector<1x256xi32>
    %c0_i32_35 = arith.constant 0 : i32
    %109 = vector.broadcast %c0_i32_35 : i32 to vector<1x256xi32>
    %110 = arith.cmpi sge, %108, %109 : vector<1x256xi32>
    %c16_i32_36 = arith.constant 16 : i32
    %111 = vector.broadcast %c16_i32_36 : i32 to vector<1x256xi32>
    %112 = arith.cmpi slt, %108, %111 : vector<1x256xi32>
    %113 = arith.andi %110, %112 : vector<1x256xi1>
    %cst_37 = arith.constant 1.000000e+00 : f32
    %cst_38 = arith.constant 0.000000e+00 : f32
    %114 = vector.broadcast %cst_37 : f32 to vector<1x256xf32>
    %115 = vector.broadcast %cst_38 : f32 to vector<1x256xf32>
    %116 = arith.select %113, %114, %115 : vector<1x256xi1>, vector<1x256xf32>
    %117 = vector.broadcast %116 : vector<1x256xf32> to vector<2x256xf32>
    %118 = arith.mulf %106, %117 : vector<2x256xf32>
    %119 = arith.addf %70, %118 : vector<2x256xf32>
    %cst_39 = arith.constant 0.000000e+00 : f32
    %120 = vector.broadcast %cst_39 : f32 to vector<2x256xf32>
    %121 = vector.extract_strided_slice %69 {offsets = [0, 78], sizes = [2, 256], strides = [1, 1]} : vector<2x512xf32> to vector<2x256xf32>
    %122 = vector.extract_strided_slice %2 {offsets = [0, 1], sizes = [2, 1], strides = [1, 1]} : vector<2x49xf32> to vector<2x1xf32>
    %123 = vector.broadcast %122 : vector<2x1xf32> to vector<2x256xf32>
    %124 = arith.mulf %121, %123 : vector<2x256xf32>
    %125 = arith.addf %120, %124 : vector<2x256xf32>
    %126 = vector.extract_strided_slice %69 {offsets = [0, 94], sizes = [2, 256], strides = [1, 1]} : vector<2x512xf32> to vector<2x256xf32>
    %127 = vector.extract_strided_slice %2 {offsets = [0, 8], sizes = [2, 1], strides = [1, 1]} : vector<2x49xf32> to vector<2x1xf32>
    %128 = vector.broadcast %127 : vector<2x1xf32> to vector<2x256xf32>
    %129 = arith.mulf %126, %128 : vector<2x256xf32>
    %130 = arith.addf %125, %129 : vector<2x256xf32>
    %131 = vector.extract_strided_slice %69 {offsets = [0, 110], sizes = [2, 256], strides = [1, 1]} : vector<2x512xf32> to vector<2x256xf32>
    %132 = vector.extract_strided_slice %2 {offsets = [0, 15], sizes = [2, 1], strides = [1, 1]} : vector<2x49xf32> to vector<2x1xf32>
    %133 = vector.broadcast %132 : vector<2x1xf32> to vector<2x256xf32>
    %134 = arith.mulf %131, %133 : vector<2x256xf32>
    %135 = arith.addf %130, %134 : vector<2x256xf32>
    %136 = vector.extract_strided_slice %69 {offsets = [0, 126], sizes = [2, 256], strides = [1, 1]} : vector<2x512xf32> to vector<2x256xf32>
    %137 = vector.extract_strided_slice %2 {offsets = [0, 22], sizes = [2, 1], strides = [1, 1]} : vector<2x49xf32> to vector<2x1xf32>
    %138 = vector.broadcast %137 : vector<2x1xf32> to vector<2x256xf32>
    %139 = arith.mulf %136, %138 : vector<2x256xf32>
    %140 = arith.addf %135, %139 : vector<2x256xf32>
    %141 = vector.extract_strided_slice %69 {offsets = [0, 142], sizes = [2, 256], strides = [1, 1]} : vector<2x512xf32> to vector<2x256xf32>
    %142 = vector.extract_strided_slice %2 {offsets = [0, 29], sizes = [2, 1], strides = [1, 1]} : vector<2x49xf32> to vector<2x1xf32>
    %143 = vector.broadcast %142 : vector<2x1xf32> to vector<2x256xf32>
    %144 = arith.mulf %141, %143 : vector<2x256xf32>
    %145 = arith.addf %140, %144 : vector<2x256xf32>
    %146 = vector.extract_strided_slice %69 {offsets = [0, 158], sizes = [2, 256], strides = [1, 1]} : vector<2x512xf32> to vector<2x256xf32>
    %147 = vector.extract_strided_slice %2 {offsets = [0, 36], sizes = [2, 1], strides = [1, 1]} : vector<2x49xf32> to vector<2x1xf32>
    %148 = vector.broadcast %147 : vector<2x1xf32> to vector<2x256xf32>
    %149 = arith.mulf %146, %148 : vector<2x256xf32>
    %150 = arith.addf %145, %149 : vector<2x256xf32>
    %151 = vector.extract_strided_slice %69 {offsets = [0, 174], sizes = [2, 256], strides = [1, 1]} : vector<2x512xf32> to vector<2x256xf32>
    %152 = vector.extract_strided_slice %2 {offsets = [0, 43], sizes = [2, 1], strides = [1, 1]} : vector<2x49xf32> to vector<2x1xf32>
    %153 = vector.broadcast %152 : vector<2x1xf32> to vector<2x256xf32>
    %154 = arith.mulf %151, %153 : vector<2x256xf32>
    %155 = arith.addf %150, %154 : vector<2x256xf32>
    %c-2_i32 = arith.constant -2 : i32
    %156 = vector.broadcast %c-2_i32 : i32 to vector<1x256xi32>
    %157 = arith.addi %20, %156 : vector<1x256xi32>
    %c0_i32_40 = arith.constant 0 : i32
    %158 = vector.broadcast %c0_i32_40 : i32 to vector<1x256xi32>
    %159 = arith.cmpi sge, %157, %158 : vector<1x256xi32>
    %c16_i32_41 = arith.constant 16 : i32
    %160 = vector.broadcast %c16_i32_41 : i32 to vector<1x256xi32>
    %161 = arith.cmpi slt, %157, %160 : vector<1x256xi32>
    %162 = arith.andi %159, %161 : vector<1x256xi1>
    %cst_42 = arith.constant 1.000000e+00 : f32
    %cst_43 = arith.constant 0.000000e+00 : f32
    %163 = vector.broadcast %cst_42 : f32 to vector<1x256xf32>
    %164 = vector.broadcast %cst_43 : f32 to vector<1x256xf32>
    %165 = arith.select %162, %163, %164 : vector<1x256xi1>, vector<1x256xf32>
    %166 = vector.broadcast %165 : vector<1x256xf32> to vector<2x256xf32>
    %167 = arith.mulf %155, %166 : vector<2x256xf32>
    %168 = arith.addf %119, %167 : vector<2x256xf32>
    %cst_44 = arith.constant 0.000000e+00 : f32
    %169 = vector.broadcast %cst_44 : f32 to vector<2x256xf32>
    %170 = vector.extract_strided_slice %69 {offsets = [0, 79], sizes = [2, 256], strides = [1, 1]} : vector<2x512xf32> to vector<2x256xf32>
    %171 = vector.extract_strided_slice %2 {offsets = [0, 2], sizes = [2, 1], strides = [1, 1]} : vector<2x49xf32> to vector<2x1xf32>
    %172 = vector.broadcast %171 : vector<2x1xf32> to vector<2x256xf32>
    %173 = arith.mulf %170, %172 : vector<2x256xf32>
    %174 = arith.addf %169, %173 : vector<2x256xf32>
    %175 = vector.extract_strided_slice %69 {offsets = [0, 95], sizes = [2, 256], strides = [1, 1]} : vector<2x512xf32> to vector<2x256xf32>
    %176 = vector.extract_strided_slice %2 {offsets = [0, 9], sizes = [2, 1], strides = [1, 1]} : vector<2x49xf32> to vector<2x1xf32>
    %177 = vector.broadcast %176 : vector<2x1xf32> to vector<2x256xf32>
    %178 = arith.mulf %175, %177 : vector<2x256xf32>
    %179 = arith.addf %174, %178 : vector<2x256xf32>
    %180 = vector.extract_strided_slice %69 {offsets = [0, 111], sizes = [2, 256], strides = [1, 1]} : vector<2x512xf32> to vector<2x256xf32>
    %181 = vector.extract_strided_slice %2 {offsets = [0, 16], sizes = [2, 1], strides = [1, 1]} : vector<2x49xf32> to vector<2x1xf32>
    %182 = vector.broadcast %181 : vector<2x1xf32> to vector<2x256xf32>
    %183 = arith.mulf %180, %182 : vector<2x256xf32>
    %184 = arith.addf %179, %183 : vector<2x256xf32>
    %185 = vector.extract_strided_slice %69 {offsets = [0, 127], sizes = [2, 256], strides = [1, 1]} : vector<2x512xf32> to vector<2x256xf32>
    %186 = vector.extract_strided_slice %2 {offsets = [0, 23], sizes = [2, 1], strides = [1, 1]} : vector<2x49xf32> to vector<2x1xf32>
    %187 = vector.broadcast %186 : vector<2x1xf32> to vector<2x256xf32>
    %188 = arith.mulf %185, %187 : vector<2x256xf32>
    %189 = arith.addf %184, %188 : vector<2x256xf32>
    %190 = vector.extract_strided_slice %69 {offsets = [0, 143], sizes = [2, 256], strides = [1, 1]} : vector<2x512xf32> to vector<2x256xf32>
    %191 = vector.extract_strided_slice %2 {offsets = [0, 30], sizes = [2, 1], strides = [1, 1]} : vector<2x49xf32> to vector<2x1xf32>
    %192 = vector.broadcast %191 : vector<2x1xf32> to vector<2x256xf32>
    %193 = arith.mulf %190, %192 : vector<2x256xf32>
    %194 = arith.addf %189, %193 : vector<2x256xf32>
    %195 = vector.extract_strided_slice %69 {offsets = [0, 159], sizes = [2, 256], strides = [1, 1]} : vector<2x512xf32> to vector<2x256xf32>
    %196 = vector.extract_strided_slice %2 {offsets = [0, 37], sizes = [2, 1], strides = [1, 1]} : vector<2x49xf32> to vector<2x1xf32>
    %197 = vector.broadcast %196 : vector<2x1xf32> to vector<2x256xf32>
    %198 = arith.mulf %195, %197 : vector<2x256xf32>
    %199 = arith.addf %194, %198 : vector<2x256xf32>
    %200 = vector.extract_strided_slice %69 {offsets = [0, 175], sizes = [2, 256], strides = [1, 1]} : vector<2x512xf32> to vector<2x256xf32>
    %201 = vector.extract_strided_slice %2 {offsets = [0, 44], sizes = [2, 1], strides = [1, 1]} : vector<2x49xf32> to vector<2x1xf32>
    %202 = vector.broadcast %201 : vector<2x1xf32> to vector<2x256xf32>
    %203 = arith.mulf %200, %202 : vector<2x256xf32>
    %204 = arith.addf %199, %203 : vector<2x256xf32>
    %c-1_i32 = arith.constant -1 : i32
    %205 = vector.broadcast %c-1_i32 : i32 to vector<1x256xi32>
    %206 = arith.addi %20, %205 : vector<1x256xi32>
    %c0_i32_45 = arith.constant 0 : i32
    %207 = vector.broadcast %c0_i32_45 : i32 to vector<1x256xi32>
    %208 = arith.cmpi sge, %206, %207 : vector<1x256xi32>
    %c16_i32_46 = arith.constant 16 : i32
    %209 = vector.broadcast %c16_i32_46 : i32 to vector<1x256xi32>
    %210 = arith.cmpi slt, %206, %209 : vector<1x256xi32>
    %211 = arith.andi %208, %210 : vector<1x256xi1>
    %cst_47 = arith.constant 1.000000e+00 : f32
    %cst_48 = arith.constant 0.000000e+00 : f32
    %212 = vector.broadcast %cst_47 : f32 to vector<1x256xf32>
    %213 = vector.broadcast %cst_48 : f32 to vector<1x256xf32>
    %214 = arith.select %211, %212, %213 : vector<1x256xi1>, vector<1x256xf32>
    %215 = vector.broadcast %214 : vector<1x256xf32> to vector<2x256xf32>
    %216 = arith.mulf %204, %215 : vector<2x256xf32>
    %217 = arith.addf %168, %216 : vector<2x256xf32>
    %cst_49 = arith.constant 0.000000e+00 : f32
    %218 = vector.broadcast %cst_49 : f32 to vector<2x256xf32>
    %219 = vector.extract_strided_slice %69 {offsets = [0, 80], sizes = [2, 256], strides = [1, 1]} : vector<2x512xf32> to vector<2x256xf32>
    %220 = vector.extract_strided_slice %2 {offsets = [0, 3], sizes = [2, 1], strides = [1, 1]} : vector<2x49xf32> to vector<2x1xf32>
    %221 = vector.broadcast %220 : vector<2x1xf32> to vector<2x256xf32>
    %222 = arith.mulf %219, %221 : vector<2x256xf32>
    %223 = arith.addf %218, %222 : vector<2x256xf32>
    %224 = vector.extract_strided_slice %69 {offsets = [0, 96], sizes = [2, 256], strides = [1, 1]} : vector<2x512xf32> to vector<2x256xf32>
    %225 = vector.extract_strided_slice %2 {offsets = [0, 10], sizes = [2, 1], strides = [1, 1]} : vector<2x49xf32> to vector<2x1xf32>
    %226 = vector.broadcast %225 : vector<2x1xf32> to vector<2x256xf32>
    %227 = arith.mulf %224, %226 : vector<2x256xf32>
    %228 = arith.addf %223, %227 : vector<2x256xf32>
    %229 = vector.extract_strided_slice %69 {offsets = [0, 112], sizes = [2, 256], strides = [1, 1]} : vector<2x512xf32> to vector<2x256xf32>
    %230 = vector.extract_strided_slice %2 {offsets = [0, 17], sizes = [2, 1], strides = [1, 1]} : vector<2x49xf32> to vector<2x1xf32>
    %231 = vector.broadcast %230 : vector<2x1xf32> to vector<2x256xf32>
    %232 = arith.mulf %229, %231 : vector<2x256xf32>
    %233 = arith.addf %228, %232 : vector<2x256xf32>
    %234 = vector.extract_strided_slice %69 {offsets = [0, 128], sizes = [2, 256], strides = [1, 1]} : vector<2x512xf32> to vector<2x256xf32>
    %235 = vector.extract_strided_slice %2 {offsets = [0, 24], sizes = [2, 1], strides = [1, 1]} : vector<2x49xf32> to vector<2x1xf32>
    %236 = vector.broadcast %235 : vector<2x1xf32> to vector<2x256xf32>
    %237 = arith.mulf %234, %236 : vector<2x256xf32>
    %238 = arith.addf %233, %237 : vector<2x256xf32>
    %239 = vector.extract_strided_slice %69 {offsets = [0, 144], sizes = [2, 256], strides = [1, 1]} : vector<2x512xf32> to vector<2x256xf32>
    %240 = vector.extract_strided_slice %2 {offsets = [0, 31], sizes = [2, 1], strides = [1, 1]} : vector<2x49xf32> to vector<2x1xf32>
    %241 = vector.broadcast %240 : vector<2x1xf32> to vector<2x256xf32>
    %242 = arith.mulf %239, %241 : vector<2x256xf32>
    %243 = arith.addf %238, %242 : vector<2x256xf32>
    %244 = vector.extract_strided_slice %69 {offsets = [0, 160], sizes = [2, 256], strides = [1, 1]} : vector<2x512xf32> to vector<2x256xf32>
    %245 = vector.extract_strided_slice %2 {offsets = [0, 38], sizes = [2, 1], strides = [1, 1]} : vector<2x49xf32> to vector<2x1xf32>
    %246 = vector.broadcast %245 : vector<2x1xf32> to vector<2x256xf32>
    %247 = arith.mulf %244, %246 : vector<2x256xf32>
    %248 = arith.addf %243, %247 : vector<2x256xf32>
    %249 = vector.extract_strided_slice %69 {offsets = [0, 176], sizes = [2, 256], strides = [1, 1]} : vector<2x512xf32> to vector<2x256xf32>
    %250 = vector.extract_strided_slice %2 {offsets = [0, 45], sizes = [2, 1], strides = [1, 1]} : vector<2x49xf32> to vector<2x1xf32>
    %251 = vector.broadcast %250 : vector<2x1xf32> to vector<2x256xf32>
    %252 = arith.mulf %249, %251 : vector<2x256xf32>
    %253 = arith.addf %248, %252 : vector<2x256xf32>
    %c0_i32_50 = arith.constant 0 : i32
    %254 = vector.broadcast %c0_i32_50 : i32 to vector<1x256xi32>
    %255 = arith.addi %20, %254 : vector<1x256xi32>
    %c0_i32_51 = arith.constant 0 : i32
    %256 = vector.broadcast %c0_i32_51 : i32 to vector<1x256xi32>
    %257 = arith.cmpi sge, %255, %256 : vector<1x256xi32>
    %c16_i32_52 = arith.constant 16 : i32
    %258 = vector.broadcast %c16_i32_52 : i32 to vector<1x256xi32>
    %259 = arith.cmpi slt, %255, %258 : vector<1x256xi32>
    %260 = arith.andi %257, %259 : vector<1x256xi1>
    %cst_53 = arith.constant 1.000000e+00 : f32
    %cst_54 = arith.constant 0.000000e+00 : f32
    %261 = vector.broadcast %cst_53 : f32 to vector<1x256xf32>
    %262 = vector.broadcast %cst_54 : f32 to vector<1x256xf32>
    %263 = arith.select %260, %261, %262 : vector<1x256xi1>, vector<1x256xf32>
    %264 = vector.broadcast %263 : vector<1x256xf32> to vector<2x256xf32>
    %265 = arith.mulf %253, %264 : vector<2x256xf32>
    %266 = arith.addf %217, %265 : vector<2x256xf32>
    %cst_55 = arith.constant 0.000000e+00 : f32
    %267 = vector.broadcast %cst_55 : f32 to vector<2x256xf32>
    %268 = vector.extract_strided_slice %69 {offsets = [0, 81], sizes = [2, 256], strides = [1, 1]} : vector<2x512xf32> to vector<2x256xf32>
    %269 = vector.extract_strided_slice %2 {offsets = [0, 4], sizes = [2, 1], strides = [1, 1]} : vector<2x49xf32> to vector<2x1xf32>
    %270 = vector.broadcast %269 : vector<2x1xf32> to vector<2x256xf32>
    %271 = arith.mulf %268, %270 : vector<2x256xf32>
    %272 = arith.addf %267, %271 : vector<2x256xf32>
    %273 = vector.extract_strided_slice %69 {offsets = [0, 97], sizes = [2, 256], strides = [1, 1]} : vector<2x512xf32> to vector<2x256xf32>
    %274 = vector.extract_strided_slice %2 {offsets = [0, 11], sizes = [2, 1], strides = [1, 1]} : vector<2x49xf32> to vector<2x1xf32>
    %275 = vector.broadcast %274 : vector<2x1xf32> to vector<2x256xf32>
    %276 = arith.mulf %273, %275 : vector<2x256xf32>
    %277 = arith.addf %272, %276 : vector<2x256xf32>
    %278 = vector.extract_strided_slice %69 {offsets = [0, 113], sizes = [2, 256], strides = [1, 1]} : vector<2x512xf32> to vector<2x256xf32>
    %279 = vector.extract_strided_slice %2 {offsets = [0, 18], sizes = [2, 1], strides = [1, 1]} : vector<2x49xf32> to vector<2x1xf32>
    %280 = vector.broadcast %279 : vector<2x1xf32> to vector<2x256xf32>
    %281 = arith.mulf %278, %280 : vector<2x256xf32>
    %282 = arith.addf %277, %281 : vector<2x256xf32>
    %283 = vector.extract_strided_slice %69 {offsets = [0, 129], sizes = [2, 256], strides = [1, 1]} : vector<2x512xf32> to vector<2x256xf32>
    %284 = vector.extract_strided_slice %2 {offsets = [0, 25], sizes = [2, 1], strides = [1, 1]} : vector<2x49xf32> to vector<2x1xf32>
    %285 = vector.broadcast %284 : vector<2x1xf32> to vector<2x256xf32>
    %286 = arith.mulf %283, %285 : vector<2x256xf32>
    %287 = arith.addf %282, %286 : vector<2x256xf32>
    %288 = vector.extract_strided_slice %69 {offsets = [0, 145], sizes = [2, 256], strides = [1, 1]} : vector<2x512xf32> to vector<2x256xf32>
    %289 = vector.extract_strided_slice %2 {offsets = [0, 32], sizes = [2, 1], strides = [1, 1]} : vector<2x49xf32> to vector<2x1xf32>
    %290 = vector.broadcast %289 : vector<2x1xf32> to vector<2x256xf32>
    %291 = arith.mulf %288, %290 : vector<2x256xf32>
    %292 = arith.addf %287, %291 : vector<2x256xf32>
    %293 = vector.extract_strided_slice %69 {offsets = [0, 161], sizes = [2, 256], strides = [1, 1]} : vector<2x512xf32> to vector<2x256xf32>
    %294 = vector.extract_strided_slice %2 {offsets = [0, 39], sizes = [2, 1], strides = [1, 1]} : vector<2x49xf32> to vector<2x1xf32>
    %295 = vector.broadcast %294 : vector<2x1xf32> to vector<2x256xf32>
    %296 = arith.mulf %293, %295 : vector<2x256xf32>
    %297 = arith.addf %292, %296 : vector<2x256xf32>
    %298 = vector.extract_strided_slice %69 {offsets = [0, 177], sizes = [2, 256], strides = [1, 1]} : vector<2x512xf32> to vector<2x256xf32>
    %299 = vector.extract_strided_slice %2 {offsets = [0, 46], sizes = [2, 1], strides = [1, 1]} : vector<2x49xf32> to vector<2x1xf32>
    %300 = vector.broadcast %299 : vector<2x1xf32> to vector<2x256xf32>
    %301 = arith.mulf %298, %300 : vector<2x256xf32>
    %302 = arith.addf %297, %301 : vector<2x256xf32>
    %c1_i32_56 = arith.constant 1 : i32
    %303 = vector.broadcast %c1_i32_56 : i32 to vector<1x256xi32>
    %304 = arith.addi %20, %303 : vector<1x256xi32>
    %c0_i32_57 = arith.constant 0 : i32
    %305 = vector.broadcast %c0_i32_57 : i32 to vector<1x256xi32>
    %306 = arith.cmpi sge, %304, %305 : vector<1x256xi32>
    %c16_i32_58 = arith.constant 16 : i32
    %307 = vector.broadcast %c16_i32_58 : i32 to vector<1x256xi32>
    %308 = arith.cmpi slt, %304, %307 : vector<1x256xi32>
    %309 = arith.andi %306, %308 : vector<1x256xi1>
    %cst_59 = arith.constant 1.000000e+00 : f32
    %cst_60 = arith.constant 0.000000e+00 : f32
    %310 = vector.broadcast %cst_59 : f32 to vector<1x256xf32>
    %311 = vector.broadcast %cst_60 : f32 to vector<1x256xf32>
    %312 = arith.select %309, %310, %311 : vector<1x256xi1>, vector<1x256xf32>
    %313 = vector.broadcast %312 : vector<1x256xf32> to vector<2x256xf32>
    %314 = arith.mulf %302, %313 : vector<2x256xf32>
    %315 = arith.addf %266, %314 : vector<2x256xf32>
    %cst_61 = arith.constant 0.000000e+00 : f32
    %316 = vector.broadcast %cst_61 : f32 to vector<2x256xf32>
    %317 = vector.extract_strided_slice %69 {offsets = [0, 82], sizes = [2, 256], strides = [1, 1]} : vector<2x512xf32> to vector<2x256xf32>
    %318 = vector.extract_strided_slice %2 {offsets = [0, 5], sizes = [2, 1], strides = [1, 1]} : vector<2x49xf32> to vector<2x1xf32>
    %319 = vector.broadcast %318 : vector<2x1xf32> to vector<2x256xf32>
    %320 = arith.mulf %317, %319 : vector<2x256xf32>
    %321 = arith.addf %316, %320 : vector<2x256xf32>
    %322 = vector.extract_strided_slice %69 {offsets = [0, 98], sizes = [2, 256], strides = [1, 1]} : vector<2x512xf32> to vector<2x256xf32>
    %323 = vector.extract_strided_slice %2 {offsets = [0, 12], sizes = [2, 1], strides = [1, 1]} : vector<2x49xf32> to vector<2x1xf32>
    %324 = vector.broadcast %323 : vector<2x1xf32> to vector<2x256xf32>
    %325 = arith.mulf %322, %324 : vector<2x256xf32>
    %326 = arith.addf %321, %325 : vector<2x256xf32>
    %327 = vector.extract_strided_slice %69 {offsets = [0, 114], sizes = [2, 256], strides = [1, 1]} : vector<2x512xf32> to vector<2x256xf32>
    %328 = vector.extract_strided_slice %2 {offsets = [0, 19], sizes = [2, 1], strides = [1, 1]} : vector<2x49xf32> to vector<2x1xf32>
    %329 = vector.broadcast %328 : vector<2x1xf32> to vector<2x256xf32>
    %330 = arith.mulf %327, %329 : vector<2x256xf32>
    %331 = arith.addf %326, %330 : vector<2x256xf32>
    %332 = vector.extract_strided_slice %69 {offsets = [0, 130], sizes = [2, 256], strides = [1, 1]} : vector<2x512xf32> to vector<2x256xf32>
    %333 = vector.extract_strided_slice %2 {offsets = [0, 26], sizes = [2, 1], strides = [1, 1]} : vector<2x49xf32> to vector<2x1xf32>
    %334 = vector.broadcast %333 : vector<2x1xf32> to vector<2x256xf32>
    %335 = arith.mulf %332, %334 : vector<2x256xf32>
    %336 = arith.addf %331, %335 : vector<2x256xf32>
    %337 = vector.extract_strided_slice %69 {offsets = [0, 146], sizes = [2, 256], strides = [1, 1]} : vector<2x512xf32> to vector<2x256xf32>
    %338 = vector.extract_strided_slice %2 {offsets = [0, 33], sizes = [2, 1], strides = [1, 1]} : vector<2x49xf32> to vector<2x1xf32>
    %339 = vector.broadcast %338 : vector<2x1xf32> to vector<2x256xf32>
    %340 = arith.mulf %337, %339 : vector<2x256xf32>
    %341 = arith.addf %336, %340 : vector<2x256xf32>
    %342 = vector.extract_strided_slice %69 {offsets = [0, 162], sizes = [2, 256], strides = [1, 1]} : vector<2x512xf32> to vector<2x256xf32>
    %343 = vector.extract_strided_slice %2 {offsets = [0, 40], sizes = [2, 1], strides = [1, 1]} : vector<2x49xf32> to vector<2x1xf32>
    %344 = vector.broadcast %343 : vector<2x1xf32> to vector<2x256xf32>
    %345 = arith.mulf %342, %344 : vector<2x256xf32>
    %346 = arith.addf %341, %345 : vector<2x256xf32>
    %347 = vector.extract_strided_slice %69 {offsets = [0, 178], sizes = [2, 256], strides = [1, 1]} : vector<2x512xf32> to vector<2x256xf32>
    %348 = vector.extract_strided_slice %2 {offsets = [0, 47], sizes = [2, 1], strides = [1, 1]} : vector<2x49xf32> to vector<2x1xf32>
    %349 = vector.broadcast %348 : vector<2x1xf32> to vector<2x256xf32>
    %350 = arith.mulf %347, %349 : vector<2x256xf32>
    %351 = arith.addf %346, %350 : vector<2x256xf32>
    %c2_i32 = arith.constant 2 : i32
    %352 = vector.broadcast %c2_i32 : i32 to vector<1x256xi32>
    %353 = arith.addi %20, %352 : vector<1x256xi32>
    %c0_i32_62 = arith.constant 0 : i32
    %354 = vector.broadcast %c0_i32_62 : i32 to vector<1x256xi32>
    %355 = arith.cmpi sge, %353, %354 : vector<1x256xi32>
    %c16_i32_63 = arith.constant 16 : i32
    %356 = vector.broadcast %c16_i32_63 : i32 to vector<1x256xi32>
    %357 = arith.cmpi slt, %353, %356 : vector<1x256xi32>
    %358 = arith.andi %355, %357 : vector<1x256xi1>
    %cst_64 = arith.constant 1.000000e+00 : f32
    %cst_65 = arith.constant 0.000000e+00 : f32
    %359 = vector.broadcast %cst_64 : f32 to vector<1x256xf32>
    %360 = vector.broadcast %cst_65 : f32 to vector<1x256xf32>
    %361 = arith.select %358, %359, %360 : vector<1x256xi1>, vector<1x256xf32>
    %362 = vector.broadcast %361 : vector<1x256xf32> to vector<2x256xf32>
    %363 = arith.mulf %351, %362 : vector<2x256xf32>
    %364 = arith.addf %315, %363 : vector<2x256xf32>
    %cst_66 = arith.constant 0.000000e+00 : f32
    %365 = vector.broadcast %cst_66 : f32 to vector<2x256xf32>
    %366 = vector.extract_strided_slice %69 {offsets = [0, 83], sizes = [2, 256], strides = [1, 1]} : vector<2x512xf32> to vector<2x256xf32>
    %367 = vector.extract_strided_slice %2 {offsets = [0, 6], sizes = [2, 1], strides = [1, 1]} : vector<2x49xf32> to vector<2x1xf32>
    %368 = vector.broadcast %367 : vector<2x1xf32> to vector<2x256xf32>
    %369 = arith.mulf %366, %368 : vector<2x256xf32>
    %370 = arith.addf %365, %369 : vector<2x256xf32>
    %371 = vector.extract_strided_slice %69 {offsets = [0, 99], sizes = [2, 256], strides = [1, 1]} : vector<2x512xf32> to vector<2x256xf32>
    %372 = vector.extract_strided_slice %2 {offsets = [0, 13], sizes = [2, 1], strides = [1, 1]} : vector<2x49xf32> to vector<2x1xf32>
    %373 = vector.broadcast %372 : vector<2x1xf32> to vector<2x256xf32>
    %374 = arith.mulf %371, %373 : vector<2x256xf32>
    %375 = arith.addf %370, %374 : vector<2x256xf32>
    %376 = vector.extract_strided_slice %69 {offsets = [0, 115], sizes = [2, 256], strides = [1, 1]} : vector<2x512xf32> to vector<2x256xf32>
    %377 = vector.extract_strided_slice %2 {offsets = [0, 20], sizes = [2, 1], strides = [1, 1]} : vector<2x49xf32> to vector<2x1xf32>
    %378 = vector.broadcast %377 : vector<2x1xf32> to vector<2x256xf32>
    %379 = arith.mulf %376, %378 : vector<2x256xf32>
    %380 = arith.addf %375, %379 : vector<2x256xf32>
    %381 = vector.extract_strided_slice %69 {offsets = [0, 131], sizes = [2, 256], strides = [1, 1]} : vector<2x512xf32> to vector<2x256xf32>
    %382 = vector.extract_strided_slice %2 {offsets = [0, 27], sizes = [2, 1], strides = [1, 1]} : vector<2x49xf32> to vector<2x1xf32>
    %383 = vector.broadcast %382 : vector<2x1xf32> to vector<2x256xf32>
    %384 = arith.mulf %381, %383 : vector<2x256xf32>
    %385 = arith.addf %380, %384 : vector<2x256xf32>
    %386 = vector.extract_strided_slice %69 {offsets = [0, 147], sizes = [2, 256], strides = [1, 1]} : vector<2x512xf32> to vector<2x256xf32>
    %387 = vector.extract_strided_slice %2 {offsets = [0, 34], sizes = [2, 1], strides = [1, 1]} : vector<2x49xf32> to vector<2x1xf32>
    %388 = vector.broadcast %387 : vector<2x1xf32> to vector<2x256xf32>
    %389 = arith.mulf %386, %388 : vector<2x256xf32>
    %390 = arith.addf %385, %389 : vector<2x256xf32>
    %391 = vector.extract_strided_slice %69 {offsets = [0, 163], sizes = [2, 256], strides = [1, 1]} : vector<2x512xf32> to vector<2x256xf32>
    %392 = vector.extract_strided_slice %2 {offsets = [0, 41], sizes = [2, 1], strides = [1, 1]} : vector<2x49xf32> to vector<2x1xf32>
    %393 = vector.broadcast %392 : vector<2x1xf32> to vector<2x256xf32>
    %394 = arith.mulf %391, %393 : vector<2x256xf32>
    %395 = arith.addf %390, %394 : vector<2x256xf32>
    %396 = vector.extract_strided_slice %69 {offsets = [0, 179], sizes = [2, 256], strides = [1, 1]} : vector<2x512xf32> to vector<2x256xf32>
    %397 = vector.extract_strided_slice %2 {offsets = [0, 48], sizes = [2, 1], strides = [1, 1]} : vector<2x49xf32> to vector<2x1xf32>
    %398 = vector.broadcast %397 : vector<2x1xf32> to vector<2x256xf32>
    %399 = arith.mulf %396, %398 : vector<2x256xf32>
    %400 = arith.addf %395, %399 : vector<2x256xf32>
    %c3_i32 = arith.constant 3 : i32
    %401 = vector.broadcast %c3_i32 : i32 to vector<1x256xi32>
    %402 = arith.addi %20, %401 : vector<1x256xi32>
    %c0_i32_67 = arith.constant 0 : i32
    %403 = vector.broadcast %c0_i32_67 : i32 to vector<1x256xi32>
    %404 = arith.cmpi sge, %402, %403 : vector<1x256xi32>
    %c16_i32_68 = arith.constant 16 : i32
    %405 = vector.broadcast %c16_i32_68 : i32 to vector<1x256xi32>
    %406 = arith.cmpi slt, %402, %405 : vector<1x256xi32>
    %407 = arith.andi %404, %406 : vector<1x256xi1>
    %cst_69 = arith.constant 1.000000e+00 : f32
    %cst_70 = arith.constant 0.000000e+00 : f32
    %408 = vector.broadcast %cst_69 : f32 to vector<1x256xf32>
    %409 = vector.broadcast %cst_70 : f32 to vector<1x256xf32>
    %410 = arith.select %407, %408, %409 : vector<1x256xi1>, vector<1x256xf32>
    %411 = vector.broadcast %410 : vector<1x256xf32> to vector<2x256xf32>
    %412 = arith.mulf %400, %411 : vector<2x256xf32>
    %413 = arith.addf %364, %412 : vector<2x256xf32>
    %cst_71 = arith.constant dense<0.000000e+00> : vector<256xf32>
    %414 = vector.multi_reduction <add>, %413, %cst_71 [0] : vector<2x256xf32> to vector<256xf32>
    %415 = vector.shape_cast %414 : vector<256xf32> to vector<1x256xf32>
    %416 = vector.broadcast %3 : f32 to vector<1x256xf32>
    %417 = arith.addf %415, %416 : vector<1x256xf32>
    %418 = arith.negf %417 : vector<1x256xf32>
    %419 = math.exp %418 : vector<1x256xf32>
    %cst_72 = arith.constant 1.000000e+00 : f32
    %420 = vector.broadcast %cst_72 : f32 to vector<1x256xf32>
    %421 = arith.addf %420, %419 : vector<1x256xf32>
    %422 = arith.divf %420, %421 : vector<1x256xf32>
    %c0_73 = arith.constant 0 : index
    %c0_74 = arith.constant 0 : index
    %c0_75 = arith.constant 0 : index
    %423 = vector.load %arg1[%c0_73, %c0_74, %c0_75] : memref<2x32x256xf32, #tpu.memory_space<vmem>>, vector<1x32x256xf32>
    %424 = vector.shape_cast %423 : vector<1x32x256xf32> to vector<32x256xf32>
    %425 = vector.broadcast %422 : vector<1x256xf32> to vector<32x256xf32>
    %426 = arith.mulf %424, %425 : vector<32x256xf32>
    %427 = vector.broadcast %58 : vector<32x1xf32> to vector<32x256xf32>
    %428 = arith.mulf %426, %427 : vector<32x256xf32>
    %c0_76 = arith.constant 0 : index
    %c0_77 = arith.constant 0 : index
    %c0_78 = arith.constant 0 : index
    %429 = vector.load %arg6[%c0_76, %c0_77, %c0_78] : memref<2x32x256xf32, #tpu.memory_space<vmem>>, vector<1x32x256xf32>
    %430 = vector.shape_cast %429 : vector<1x32x256xf32> to vector<32x256xf32>
    %431 = vector.shape_cast %428 : vector<32x256xf32> to vector<1x32x256xf32>
    tpu.vector_store %arg6[%c0_76, %c0_77, %c0_78], %431 {strides = array<i32>} : memref<2x32x256xf32, #tpu.memory_space<vmem>>, vector<1x32x256xf32>,
    %c1_79 = arith.constant 1 : index
    %c0_80 = arith.constant 0 : index
    %c0_81 = arith.constant 0 : index
    %432 = vector.load %arg1[%c1_79, %c0_80, %c0_81] : memref<2x32x256xf32, #tpu.memory_space<vmem>>, vector<1x32x256xf32>
    %433 = vector.shape_cast %432 : vector<1x32x256xf32> to vector<32x256xf32>
    %cst_82 = arith.constant dense<0.000000e+00> : vector<32xf32>
    %434 = vector.multi_reduction <add>, %433, %cst_82 [1] : vector<32x256xf32> to vector<32xf32>
    %435 = vector.shape_cast %434 : vector<32xf32> to vector<32x1xf32>
    %cst_83 = arith.constant 2.560000e+02 : f32
    %436 = vector.broadcast %cst_83 : f32 to vector<32x1xf32>
    %437 = arith.divf %435, %436 : vector<32x1xf32>
    %cst_84 = arith.constant dense<0xFF800000> : vector<32xf32>
    %438 = vector.multi_reduction <maximumf>, %433, %cst_84 [1] : vector<32x256xf32> to vector<32xf32>
    %439 = vector.shape_cast %438 : vector<32xf32> to vector<32x1xf32>
    %440 = vector.broadcast %437 : vector<32x1xf32> to vector<32x2xf32>
    %441 = arith.mulf %440, %0 : vector<32x2xf32>
    %cst_85 = arith.constant dense<0.000000e+00> : vector<2xf32>
    %442 = vector.multi_reduction <add>, %441, %cst_85 [0] : vector<32x2xf32> to vector<2xf32>
    %443 = vector.shape_cast %442 : vector<2xf32> to vector<1x2xf32>
    %cst_86 = arith.constant 0.000000e+00 : f32
    %444 = vector.broadcast %cst_86 : f32 to vector<1x2xf32>
    %445 = arith.maximumf %443, %444 : vector<1x2xf32>
    %446 = vector.broadcast %439 : vector<32x1xf32> to vector<32x2xf32>
    %447 = arith.mulf %446, %0 : vector<32x2xf32>
    %cst_87 = arith.constant dense<0.000000e+00> : vector<2xf32>
    %448 = vector.multi_reduction <add>, %447, %cst_87 [0] : vector<32x2xf32> to vector<2xf32>
    %449 = vector.shape_cast %448 : vector<2xf32> to vector<1x2xf32>
    %cst_88 = arith.constant 0.000000e+00 : f32
    %450 = vector.broadcast %cst_88 : f32 to vector<1x2xf32>
    %451 = arith.maximumf %449, %450 : vector<1x2xf32>
    %452 = vector.broadcast %445 : vector<1x2xf32> to vector<32x2xf32>
    %453 = arith.mulf %1, %452 : vector<32x2xf32>
    %cst_89 = arith.constant dense<0.000000e+00> : vector<32xf32>
    %454 = vector.multi_reduction <add>, %453, %cst_89 [1] : vector<32x2xf32> to vector<32xf32>
    %455 = vector.shape_cast %454 : vector<32xf32> to vector<32x1xf32>
    %456 = vector.broadcast %451 : vector<1x2xf32> to vector<32x2xf32>
    %457 = arith.mulf %1, %456 : vector<32x2xf32>
    %cst_90 = arith.constant dense<0.000000e+00> : vector<32xf32>
    %458 = vector.multi_reduction <add>, %457, %cst_90 [1] : vector<32x2xf32> to vector<32xf32>
    %459 = vector.shape_cast %458 : vector<32xf32> to vector<32x1xf32>
    %460 = arith.addf %455, %459 : vector<32x1xf32>
    %461 = arith.negf %460 : vector<32x1xf32>
    %462 = math.exp %461 : vector<32x1xf32>
    %cst_91 = arith.constant 1.000000e+00 : f32
    %463 = vector.broadcast %cst_91 : f32 to vector<32x1xf32>
    %464 = arith.addf %463, %462 : vector<32x1xf32>
    %465 = arith.divf %463, %464 : vector<32x1xf32>
    %466 = vector.broadcast %465 : vector<32x1xf32> to vector<32x256xf32>
    %467 = arith.mulf %433, %466 : vector<32x256xf32>
    %cst_92 = arith.constant dense<0.000000e+00> : vector<256xf32>
    %468 = vector.multi_reduction <add>, %467, %cst_92 [0] : vector<32x256xf32> to vector<256xf32>
    %469 = vector.shape_cast %468 : vector<256xf32> to vector<1x256xf32>
    %cst_93 = arith.constant 3.200000e+01 : f32
    %470 = vector.broadcast %cst_93 : f32 to vector<1x256xf32>
    %471 = arith.divf %469, %470 : vector<1x256xf32>
    %cst_94 = arith.constant dense<0xFF800000> : vector<256xf32>
    %472 = vector.multi_reduction <maximumf>, %467, %cst_94 [0] : vector<32x256xf32> to vector<256xf32>
    %473 = vector.shape_cast %472 : vector<256xf32> to vector<1x256xf32>
    %c0_95 = arith.constant 0 : index
    %c128_96 = arith.constant 128 : index
    %474 = vector.load %arg7[%c0_95, %c128_96] : memref<2x512xf32, #tpu.memory_space<vmem>>, vector<1x256xf32>
    tpu.vector_store %arg7[%c0_95, %c128_96], %471 {strides = array<i32>} : memref<2x512xf32, #tpu.memory_space<vmem>>, vector<1x256xf32>,
    %c1_97 = arith.constant 1 : index
    %c128_98 = arith.constant 128 : index
    %475 = vector.load %arg7[%c1_97, %c128_98] : memref<2x512xf32, #tpu.memory_space<vmem>>, vector<1x256xf32>
    tpu.vector_store %arg7[%c1_97, %c128_98], %473 {strides = array<i32>} : memref<2x512xf32, #tpu.memory_space<vmem>>, vector<1x256xf32>,
    %c0_99 = arith.constant 0 : index
    %c0_100 = arith.constant 0 : index
    %476 = vector.load %arg7[%c0_99, %c0_100] : memref<2x512xf32, #tpu.memory_space<vmem>>, vector<2x512xf32>
    %cst_101 = arith.constant 0.000000e+00 : f32
    %477 = vector.broadcast %cst_101 : f32 to vector<2x256xf32>
    %cst_102 = arith.constant 0.000000e+00 : f32
    %478 = vector.broadcast %cst_102 : f32 to vector<2x256xf32>
    %479 = vector.extract_strided_slice %476 {offsets = [0, 77], sizes = [2, 256], strides = [1, 1]} : vector<2x512xf32> to vector<2x256xf32>
    %480 = vector.extract_strided_slice %2 {offsets = [0, 0], sizes = [2, 1], strides = [1, 1]} : vector<2x49xf32> to vector<2x1xf32>
    %481 = vector.broadcast %480 : vector<2x1xf32> to vector<2x256xf32>
    %482 = arith.mulf %479, %481 : vector<2x256xf32>
    %483 = arith.addf %478, %482 : vector<2x256xf32>
    %484 = vector.extract_strided_slice %476 {offsets = [0, 93], sizes = [2, 256], strides = [1, 1]} : vector<2x512xf32> to vector<2x256xf32>
    %485 = vector.extract_strided_slice %2 {offsets = [0, 7], sizes = [2, 1], strides = [1, 1]} : vector<2x49xf32> to vector<2x1xf32>
    %486 = vector.broadcast %485 : vector<2x1xf32> to vector<2x256xf32>
    %487 = arith.mulf %484, %486 : vector<2x256xf32>
    %488 = arith.addf %483, %487 : vector<2x256xf32>
    %489 = vector.extract_strided_slice %476 {offsets = [0, 109], sizes = [2, 256], strides = [1, 1]} : vector<2x512xf32> to vector<2x256xf32>
    %490 = vector.extract_strided_slice %2 {offsets = [0, 14], sizes = [2, 1], strides = [1, 1]} : vector<2x49xf32> to vector<2x1xf32>
    %491 = vector.broadcast %490 : vector<2x1xf32> to vector<2x256xf32>
    %492 = arith.mulf %489, %491 : vector<2x256xf32>
    %493 = arith.addf %488, %492 : vector<2x256xf32>
    %494 = vector.extract_strided_slice %476 {offsets = [0, 125], sizes = [2, 256], strides = [1, 1]} : vector<2x512xf32> to vector<2x256xf32>
    %495 = vector.extract_strided_slice %2 {offsets = [0, 21], sizes = [2, 1], strides = [1, 1]} : vector<2x49xf32> to vector<2x1xf32>
    %496 = vector.broadcast %495 : vector<2x1xf32> to vector<2x256xf32>
    %497 = arith.mulf %494, %496 : vector<2x256xf32>
    %498 = arith.addf %493, %497 : vector<2x256xf32>
    %499 = vector.extract_strided_slice %476 {offsets = [0, 141], sizes = [2, 256], strides = [1, 1]} : vector<2x512xf32> to vector<2x256xf32>
    %500 = vector.extract_strided_slice %2 {offsets = [0, 28], sizes = [2, 1], strides = [1, 1]} : vector<2x49xf32> to vector<2x1xf32>
    %501 = vector.broadcast %500 : vector<2x1xf32> to vector<2x256xf32>
    %502 = arith.mulf %499, %501 : vector<2x256xf32>
    %503 = arith.addf %498, %502 : vector<2x256xf32>
    %504 = vector.extract_strided_slice %476 {offsets = [0, 157], sizes = [2, 256], strides = [1, 1]} : vector<2x512xf32> to vector<2x256xf32>
    %505 = vector.extract_strided_slice %2 {offsets = [0, 35], sizes = [2, 1], strides = [1, 1]} : vector<2x49xf32> to vector<2x1xf32>
    %506 = vector.broadcast %505 : vector<2x1xf32> to vector<2x256xf32>
    %507 = arith.mulf %504, %506 : vector<2x256xf32>
    %508 = arith.addf %503, %507 : vector<2x256xf32>
    %509 = vector.extract_strided_slice %476 {offsets = [0, 173], sizes = [2, 256], strides = [1, 1]} : vector<2x512xf32> to vector<2x256xf32>
    %510 = vector.extract_strided_slice %2 {offsets = [0, 42], sizes = [2, 1], strides = [1, 1]} : vector<2x49xf32> to vector<2x1xf32>
    %511 = vector.broadcast %510 : vector<2x1xf32> to vector<2x256xf32>
    %512 = arith.mulf %509, %511 : vector<2x256xf32>
    %513 = arith.addf %508, %512 : vector<2x256xf32>
    %c-3_i32_103 = arith.constant -3 : i32
    %514 = vector.broadcast %c-3_i32_103 : i32 to vector<1x256xi32>
    %515 = arith.addi %20, %514 : vector<1x256xi32>
    %c0_i32_104 = arith.constant 0 : i32
    %516 = vector.broadcast %c0_i32_104 : i32 to vector<1x256xi32>
    %517 = arith.cmpi sge, %515, %516 : vector<1x256xi32>
    %c16_i32_105 = arith.constant 16 : i32
    %518 = vector.broadcast %c16_i32_105 : i32 to vector<1x256xi32>
    %519 = arith.cmpi slt, %515, %518 : vector<1x256xi32>
    %520 = arith.andi %517, %519 : vector<1x256xi1>
    %cst_106 = arith.constant 1.000000e+00 : f32
    %cst_107 = arith.constant 0.000000e+00 : f32
    %521 = vector.broadcast %cst_106 : f32 to vector<1x256xf32>
    %522 = vector.broadcast %cst_107 : f32 to vector<1x256xf32>
    %523 = arith.select %520, %521, %522 : vector<1x256xi1>, vector<1x256xf32>
    %524 = vector.broadcast %523 : vector<1x256xf32> to vector<2x256xf32>
    %525 = arith.mulf %513, %524 : vector<2x256xf32>
    %526 = arith.addf %477, %525 : vector<2x256xf32>
    %cst_108 = arith.constant 0.000000e+00 : f32
    %527 = vector.broadcast %cst_108 : f32 to vector<2x256xf32>
    %528 = vector.extract_strided_slice %476 {offsets = [0, 78], sizes = [2, 256], strides = [1, 1]} : vector<2x512xf32> to vector<2x256xf32>
    %529 = vector.extract_strided_slice %2 {offsets = [0, 1], sizes = [2, 1], strides = [1, 1]} : vector<2x49xf32> to vector<2x1xf32>
    %530 = vector.broadcast %529 : vector<2x1xf32> to vector<2x256xf32>
    %531 = arith.mulf %528, %530 : vector<2x256xf32>
    %532 = arith.addf %527, %531 : vector<2x256xf32>
    %533 = vector.extract_strided_slice %476 {offsets = [0, 94], sizes = [2, 256], strides = [1, 1]} : vector<2x512xf32> to vector<2x256xf32>
    %534 = vector.extract_strided_slice %2 {offsets = [0, 8], sizes = [2, 1], strides = [1, 1]} : vector<2x49xf32> to vector<2x1xf32>
    %535 = vector.broadcast %534 : vector<2x1xf32> to vector<2x256xf32>
    %536 = arith.mulf %533, %535 : vector<2x256xf32>
    %537 = arith.addf %532, %536 : vector<2x256xf32>
    %538 = vector.extract_strided_slice %476 {offsets = [0, 110], sizes = [2, 256], strides = [1, 1]} : vector<2x512xf32> to vector<2x256xf32>
    %539 = vector.extract_strided_slice %2 {offsets = [0, 15], sizes = [2, 1], strides = [1, 1]} : vector<2x49xf32> to vector<2x1xf32>
    %540 = vector.broadcast %539 : vector<2x1xf32> to vector<2x256xf32>
    %541 = arith.mulf %538, %540 : vector<2x256xf32>
    %542 = arith.addf %537, %541 : vector<2x256xf32>
    %543 = vector.extract_strided_slice %476 {offsets = [0, 126], sizes = [2, 256], strides = [1, 1]} : vector<2x512xf32> to vector<2x256xf32>
    %544 = vector.extract_strided_slice %2 {offsets = [0, 22], sizes = [2, 1], strides = [1, 1]} : vector<2x49xf32> to vector<2x1xf32>
    %545 = vector.broadcast %544 : vector<2x1xf32> to vector<2x256xf32>
    %546 = arith.mulf %543, %545 : vector<2x256xf32>
    %547 = arith.addf %542, %546 : vector<2x256xf32>
    %548 = vector.extract_strided_slice %476 {offsets = [0, 142], sizes = [2, 256], strides = [1, 1]} : vector<2x512xf32> to vector<2x256xf32>
    %549 = vector.extract_strided_slice %2 {offsets = [0, 29], sizes = [2, 1], strides = [1, 1]} : vector<2x49xf32> to vector<2x1xf32>
    %550 = vector.broadcast %549 : vector<2x1xf32> to vector<2x256xf32>
    %551 = arith.mulf %548, %550 : vector<2x256xf32>
    %552 = arith.addf %547, %551 : vector<2x256xf32>
    %553 = vector.extract_strided_slice %476 {offsets = [0, 158], sizes = [2, 256], strides = [1, 1]} : vector<2x512xf32> to vector<2x256xf32>
    %554 = vector.extract_strided_slice %2 {offsets = [0, 36], sizes = [2, 1], strides = [1, 1]} : vector<2x49xf32> to vector<2x1xf32>
    %555 = vector.broadcast %554 : vector<2x1xf32> to vector<2x256xf32>
    %556 = arith.mulf %553, %555 : vector<2x256xf32>
    %557 = arith.addf %552, %556 : vector<2x256xf32>
    %558 = vector.extract_strided_slice %476 {offsets = [0, 174], sizes = [2, 256], strides = [1, 1]} : vector<2x512xf32> to vector<2x256xf32>
    %559 = vector.extract_strided_slice %2 {offsets = [0, 43], sizes = [2, 1], strides = [1, 1]} : vector<2x49xf32> to vector<2x1xf32>
    %560 = vector.broadcast %559 : vector<2x1xf32> to vector<2x256xf32>
    %561 = arith.mulf %558, %560 : vector<2x256xf32>
    %562 = arith.addf %557, %561 : vector<2x256xf32>
    %c-2_i32_109 = arith.constant -2 : i32
    %563 = vector.broadcast %c-2_i32_109 : i32 to vector<1x256xi32>
    %564 = arith.addi %20, %563 : vector<1x256xi32>
    %c0_i32_110 = arith.constant 0 : i32
    %565 = vector.broadcast %c0_i32_110 : i32 to vector<1x256xi32>
    %566 = arith.cmpi sge, %564, %565 : vector<1x256xi32>
    %c16_i32_111 = arith.constant 16 : i32
    %567 = vector.broadcast %c16_i32_111 : i32 to vector<1x256xi32>
    %568 = arith.cmpi slt, %564, %567 : vector<1x256xi32>
    %569 = arith.andi %566, %568 : vector<1x256xi1>
    %cst_112 = arith.constant 1.000000e+00 : f32
    %cst_113 = arith.constant 0.000000e+00 : f32
    %570 = vector.broadcast %cst_112 : f32 to vector<1x256xf32>
    %571 = vector.broadcast %cst_113 : f32 to vector<1x256xf32>
    %572 = arith.select %569, %570, %571 : vector<1x256xi1>, vector<1x256xf32>
    %573 = vector.broadcast %572 : vector<1x256xf32> to vector<2x256xf32>
    %574 = arith.mulf %562, %573 : vector<2x256xf32>
    %575 = arith.addf %526, %574 : vector<2x256xf32>
    %cst_114 = arith.constant 0.000000e+00 : f32
    %576 = vector.broadcast %cst_114 : f32 to vector<2x256xf32>
    %577 = vector.extract_strided_slice %476 {offsets = [0, 79], sizes = [2, 256], strides = [1, 1]} : vector<2x512xf32> to vector<2x256xf32>
    %578 = vector.extract_strided_slice %2 {offsets = [0, 2], sizes = [2, 1], strides = [1, 1]} : vector<2x49xf32> to vector<2x1xf32>
    %579 = vector.broadcast %578 : vector<2x1xf32> to vector<2x256xf32>
    %580 = arith.mulf %577, %579 : vector<2x256xf32>
    %581 = arith.addf %576, %580 : vector<2x256xf32>
    %582 = vector.extract_strided_slice %476 {offsets = [0, 95], sizes = [2, 256], strides = [1, 1]} : vector<2x512xf32> to vector<2x256xf32>
    %583 = vector.extract_strided_slice %2 {offsets = [0, 9], sizes = [2, 1], strides = [1, 1]} : vector<2x49xf32> to vector<2x1xf32>
    %584 = vector.broadcast %583 : vector<2x1xf32> to vector<2x256xf32>
    %585 = arith.mulf %582, %584 : vector<2x256xf32>
    %586 = arith.addf %581, %585 : vector<2x256xf32>
    %587 = vector.extract_strided_slice %476 {offsets = [0, 111], sizes = [2, 256], strides = [1, 1]} : vector<2x512xf32> to vector<2x256xf32>
    %588 = vector.extract_strided_slice %2 {offsets = [0, 16], sizes = [2, 1], strides = [1, 1]} : vector<2x49xf32> to vector<2x1xf32>
    %589 = vector.broadcast %588 : vector<2x1xf32> to vector<2x256xf32>
    %590 = arith.mulf %587, %589 : vector<2x256xf32>
    %591 = arith.addf %586, %590 : vector<2x256xf32>
    %592 = vector.extract_strided_slice %476 {offsets = [0, 127], sizes = [2, 256], strides = [1, 1]} : vector<2x512xf32> to vector<2x256xf32>
    %593 = vector.extract_strided_slice %2 {offsets = [0, 23], sizes = [2, 1], strides = [1, 1]} : vector<2x49xf32> to vector<2x1xf32>
    %594 = vector.broadcast %593 : vector<2x1xf32> to vector<2x256xf32>
    %595 = arith.mulf %592, %594 : vector<2x256xf32>
    %596 = arith.addf %591, %595 : vector<2x256xf32>
    %597 = vector.extract_strided_slice %476 {offsets = [0, 143], sizes = [2, 256], strides = [1, 1]} : vector<2x512xf32> to vector<2x256xf32>
    %598 = vector.extract_strided_slice %2 {offsets = [0, 30], sizes = [2, 1], strides = [1, 1]} : vector<2x49xf32> to vector<2x1xf32>
    %599 = vector.broadcast %598 : vector<2x1xf32> to vector<2x256xf32>
    %600 = arith.mulf %597, %599 : vector<2x256xf32>
    %601 = arith.addf %596, %600 : vector<2x256xf32>
    %602 = vector.extract_strided_slice %476 {offsets = [0, 159], sizes = [2, 256], strides = [1, 1]} : vector<2x512xf32> to vector<2x256xf32>
    %603 = vector.extract_strided_slice %2 {offsets = [0, 37], sizes = [2, 1], strides = [1, 1]} : vector<2x49xf32> to vector<2x1xf32>
    %604 = vector.broadcast %603 : vector<2x1xf32> to vector<2x256xf32>
    %605 = arith.mulf %602, %604 : vector<2x256xf32>
    %606 = arith.addf %601, %605 : vector<2x256xf32>
    %607 = vector.extract_strided_slice %476 {offsets = [0, 175], sizes = [2, 256], strides = [1, 1]} : vector<2x512xf32> to vector<2x256xf32>
    %608 = vector.extract_strided_slice %2 {offsets = [0, 44], sizes = [2, 1], strides = [1, 1]} : vector<2x49xf32> to vector<2x1xf32>
    %609 = vector.broadcast %608 : vector<2x1xf32> to vector<2x256xf32>
    %610 = arith.mulf %607, %609 : vector<2x256xf32>
    %611 = arith.addf %606, %610 : vector<2x256xf32>
    %c-1_i32_115 = arith.constant -1 : i32
    %612 = vector.broadcast %c-1_i32_115 : i32 to vector<1x256xi32>
    %613 = arith.addi %20, %612 : vector<1x256xi32>
    %c0_i32_116 = arith.constant 0 : i32
    %614 = vector.broadcast %c0_i32_116 : i32 to vector<1x256xi32>
    %615 = arith.cmpi sge, %613, %614 : vector<1x256xi32>
    %c16_i32_117 = arith.constant 16 : i32
    %616 = vector.broadcast %c16_i32_117 : i32 to vector<1x256xi32>
    %617 = arith.cmpi slt, %613, %616 : vector<1x256xi32>
    %618 = arith.andi %615, %617 : vector<1x256xi1>
    %cst_118 = arith.constant 1.000000e+00 : f32
    %cst_119 = arith.constant 0.000000e+00 : f32
    %619 = vector.broadcast %cst_118 : f32 to vector<1x256xf32>
    %620 = vector.broadcast %cst_119 : f32 to vector<1x256xf32>
    %621 = arith.select %618, %619, %620 : vector<1x256xi1>, vector<1x256xf32>
    %622 = vector.broadcast %621 : vector<1x256xf32> to vector<2x256xf32>
    %623 = arith.mulf %611, %622 : vector<2x256xf32>
    %624 = arith.addf %575, %623 : vector<2x256xf32>
    %cst_120 = arith.constant 0.000000e+00 : f32
    %625 = vector.broadcast %cst_120 : f32 to vector<2x256xf32>
    %626 = vector.extract_strided_slice %476 {offsets = [0, 80], sizes = [2, 256], strides = [1, 1]} : vector<2x512xf32> to vector<2x256xf32>
    %627 = vector.extract_strided_slice %2 {offsets = [0, 3], sizes = [2, 1], strides = [1, 1]} : vector<2x49xf32> to vector<2x1xf32>
    %628 = vector.broadcast %627 : vector<2x1xf32> to vector<2x256xf32>
    %629 = arith.mulf %626, %628 : vector<2x256xf32>
    %630 = arith.addf %625, %629 : vector<2x256xf32>
    %631 = vector.extract_strided_slice %476 {offsets = [0, 96], sizes = [2, 256], strides = [1, 1]} : vector<2x512xf32> to vector<2x256xf32>
    %632 = vector.extract_strided_slice %2 {offsets = [0, 10], sizes = [2, 1], strides = [1, 1]} : vector<2x49xf32> to vector<2x1xf32>
    %633 = vector.broadcast %632 : vector<2x1xf32> to vector<2x256xf32>
    %634 = arith.mulf %631, %633 : vector<2x256xf32>
    %635 = arith.addf %630, %634 : vector<2x256xf32>
    %636 = vector.extract_strided_slice %476 {offsets = [0, 112], sizes = [2, 256], strides = [1, 1]} : vector<2x512xf32> to vector<2x256xf32>
    %637 = vector.extract_strided_slice %2 {offsets = [0, 17], sizes = [2, 1], strides = [1, 1]} : vector<2x49xf32> to vector<2x1xf32>
    %638 = vector.broadcast %637 : vector<2x1xf32> to vector<2x256xf32>
    %639 = arith.mulf %636, %638 : vector<2x256xf32>
    %640 = arith.addf %635, %639 : vector<2x256xf32>
    %641 = vector.extract_strided_slice %476 {offsets = [0, 128], sizes = [2, 256], strides = [1, 1]} : vector<2x512xf32> to vector<2x256xf32>
    %642 = vector.extract_strided_slice %2 {offsets = [0, 24], sizes = [2, 1], strides = [1, 1]} : vector<2x49xf32> to vector<2x1xf32>
    %643 = vector.broadcast %642 : vector<2x1xf32> to vector<2x256xf32>
    %644 = arith.mulf %641, %643 : vector<2x256xf32>
    %645 = arith.addf %640, %644 : vector<2x256xf32>
    %646 = vector.extract_strided_slice %476 {offsets = [0, 144], sizes = [2, 256], strides = [1, 1]} : vector<2x512xf32> to vector<2x256xf32>
    %647 = vector.extract_strided_slice %2 {offsets = [0, 31], sizes = [2, 1], strides = [1, 1]} : vector<2x49xf32> to vector<2x1xf32>
    %648 = vector.broadcast %647 : vector<2x1xf32> to vector<2x256xf32>
    %649 = arith.mulf %646, %648 : vector<2x256xf32>
    %650 = arith.addf %645, %649 : vector<2x256xf32>
    %651 = vector.extract_strided_slice %476 {offsets = [0, 160], sizes = [2, 256], strides = [1, 1]} : vector<2x512xf32> to vector<2x256xf32>
    %652 = vector.extract_strided_slice %2 {offsets = [0, 38], sizes = [2, 1], strides = [1, 1]} : vector<2x49xf32> to vector<2x1xf32>
    %653 = vector.broadcast %652 : vector<2x1xf32> to vector<2x256xf32>
    %654 = arith.mulf %651, %653 : vector<2x256xf32>
    %655 = arith.addf %650, %654 : vector<2x256xf32>
    %656 = vector.extract_strided_slice %476 {offsets = [0, 176], sizes = [2, 256], strides = [1, 1]} : vector<2x512xf32> to vector<2x256xf32>
    %657 = vector.extract_strided_slice %2 {offsets = [0, 45], sizes = [2, 1], strides = [1, 1]} : vector<2x49xf32> to vector<2x1xf32>
    %658 = vector.broadcast %657 : vector<2x1xf32> to vector<2x256xf32>
    %659 = arith.mulf %656, %658 : vector<2x256xf32>
    %660 = arith.addf %655, %659 : vector<2x256xf32>
    %c0_i32_121 = arith.constant 0 : i32
    %661 = vector.broadcast %c0_i32_121 : i32 to vector<1x256xi32>
    %662 = arith.addi %20, %661 : vector<1x256xi32>
    %c0_i32_122 = arith.constant 0 : i32
    %663 = vector.broadcast %c0_i32_122 : i32 to vector<1x256xi32>
    %664 = arith.cmpi sge, %662, %663 : vector<1x256xi32>
    %c16_i32_123 = arith.constant 16 : i32
    %665 = vector.broadcast %c16_i32_123 : i32 to vector<1x256xi32>
    %666 = arith.cmpi slt, %662, %665 : vector<1x256xi32>
    %667 = arith.andi %664, %666 : vector<1x256xi1>
    %cst_124 = arith.constant 1.000000e+00 : f32
    %cst_125 = arith.constant 0.000000e+00 : f32
    %668 = vector.broadcast %cst_124 : f32 to vector<1x256xf32>
    %669 = vector.broadcast %cst_125 : f32 to vector<1x256xf32>
    %670 = arith.select %667, %668, %669 : vector<1x256xi1>, vector<1x256xf32>
    %671 = vector.broadcast %670 : vector<1x256xf32> to vector<2x256xf32>
    %672 = arith.mulf %660, %671 : vector<2x256xf32>
    %673 = arith.addf %624, %672 : vector<2x256xf32>
    %cst_126 = arith.constant 0.000000e+00 : f32
    %674 = vector.broadcast %cst_126 : f32 to vector<2x256xf32>
    %675 = vector.extract_strided_slice %476 {offsets = [0, 81], sizes = [2, 256], strides = [1, 1]} : vector<2x512xf32> to vector<2x256xf32>
    %676 = vector.extract_strided_slice %2 {offsets = [0, 4], sizes = [2, 1], strides = [1, 1]} : vector<2x49xf32> to vector<2x1xf32>
    %677 = vector.broadcast %676 : vector<2x1xf32> to vector<2x256xf32>
    %678 = arith.mulf %675, %677 : vector<2x256xf32>
    %679 = arith.addf %674, %678 : vector<2x256xf32>
    %680 = vector.extract_strided_slice %476 {offsets = [0, 97], sizes = [2, 256], strides = [1, 1]} : vector<2x512xf32> to vector<2x256xf32>
    %681 = vector.extract_strided_slice %2 {offsets = [0, 11], sizes = [2, 1], strides = [1, 1]} : vector<2x49xf32> to vector<2x1xf32>
    %682 = vector.broadcast %681 : vector<2x1xf32> to vector<2x256xf32>
    %683 = arith.mulf %680, %682 : vector<2x256xf32>
    %684 = arith.addf %679, %683 : vector<2x256xf32>
    %685 = vector.extract_strided_slice %476 {offsets = [0, 113], sizes = [2, 256], strides = [1, 1]} : vector<2x512xf32> to vector<2x256xf32>
    %686 = vector.extract_strided_slice %2 {offsets = [0, 18], sizes = [2, 1], strides = [1, 1]} : vector<2x49xf32> to vector<2x1xf32>
    %687 = vector.broadcast %686 : vector<2x1xf32> to vector<2x256xf32>
    %688 = arith.mulf %685, %687 : vector<2x256xf32>
    %689 = arith.addf %684, %688 : vector<2x256xf32>
    %690 = vector.extract_strided_slice %476 {offsets = [0, 129], sizes = [2, 256], strides = [1, 1]} : vector<2x512xf32> to vector<2x256xf32>
    %691 = vector.extract_strided_slice %2 {offsets = [0, 25], sizes = [2, 1], strides = [1, 1]} : vector<2x49xf32> to vector<2x1xf32>
    %692 = vector.broadcast %691 : vector<2x1xf32> to vector<2x256xf32>
    %693 = arith.mulf %690, %692 : vector<2x256xf32>
    %694 = arith.addf %689, %693 : vector<2x256xf32>
    %695 = vector.extract_strided_slice %476 {offsets = [0, 145], sizes = [2, 256], strides = [1, 1]} : vector<2x512xf32> to vector<2x256xf32>
    %696 = vector.extract_strided_slice %2 {offsets = [0, 32], sizes = [2, 1], strides = [1, 1]} : vector<2x49xf32> to vector<2x1xf32>
    %697 = vector.broadcast %696 : vector<2x1xf32> to vector<2x256xf32>
    %698 = arith.mulf %695, %697 : vector<2x256xf32>
    %699 = arith.addf %694, %698 : vector<2x256xf32>
    %700 = vector.extract_strided_slice %476 {offsets = [0, 161], sizes = [2, 256], strides = [1, 1]} : vector<2x512xf32> to vector<2x256xf32>
    %701 = vector.extract_strided_slice %2 {offsets = [0, 39], sizes = [2, 1], strides = [1, 1]} : vector<2x49xf32> to vector<2x1xf32>
    %702 = vector.broadcast %701 : vector<2x1xf32> to vector<2x256xf32>
    %703 = arith.mulf %700, %702 : vector<2x256xf32>
    %704 = arith.addf %699, %703 : vector<2x256xf32>
    %705 = vector.extract_strided_slice %476 {offsets = [0, 177], sizes = [2, 256], strides = [1, 1]} : vector<2x512xf32> to vector<2x256xf32>
    %706 = vector.extract_strided_slice %2 {offsets = [0, 46], sizes = [2, 1], strides = [1, 1]} : vector<2x49xf32> to vector<2x1xf32>
    %707 = vector.broadcast %706 : vector<2x1xf32> to vector<2x256xf32>
    %708 = arith.mulf %705, %707 : vector<2x256xf32>
    %709 = arith.addf %704, %708 : vector<2x256xf32>
    %c1_i32_127 = arith.constant 1 : i32
    %710 = vector.broadcast %c1_i32_127 : i32 to vector<1x256xi32>
    %711 = arith.addi %20, %710 : vector<1x256xi32>
    %c0_i32_128 = arith.constant 0 : i32
    %712 = vector.broadcast %c0_i32_128 : i32 to vector<1x256xi32>
    %713 = arith.cmpi sge, %711, %712 : vector<1x256xi32>
    %c16_i32_129 = arith.constant 16 : i32
    %714 = vector.broadcast %c16_i32_129 : i32 to vector<1x256xi32>
    %715 = arith.cmpi slt, %711, %714 : vector<1x256xi32>
    %716 = arith.andi %713, %715 : vector<1x256xi1>
    %cst_130 = arith.constant 1.000000e+00 : f32
    %cst_131 = arith.constant 0.000000e+00 : f32
    %717 = vector.broadcast %cst_130 : f32 to vector<1x256xf32>
    %718 = vector.broadcast %cst_131 : f32 to vector<1x256xf32>
    %719 = arith.select %716, %717, %718 : vector<1x256xi1>, vector<1x256xf32>
    %720 = vector.broadcast %719 : vector<1x256xf32> to vector<2x256xf32>
    %721 = arith.mulf %709, %720 : vector<2x256xf32>
    %722 = arith.addf %673, %721 : vector<2x256xf32>
    %cst_132 = arith.constant 0.000000e+00 : f32
    %723 = vector.broadcast %cst_132 : f32 to vector<2x256xf32>
    %724 = vector.extract_strided_slice %476 {offsets = [0, 82], sizes = [2, 256], strides = [1, 1]} : vector<2x512xf32> to vector<2x256xf32>
    %725 = vector.extract_strided_slice %2 {offsets = [0, 5], sizes = [2, 1], strides = [1, 1]} : vector<2x49xf32> to vector<2x1xf32>
    %726 = vector.broadcast %725 : vector<2x1xf32> to vector<2x256xf32>
    %727 = arith.mulf %724, %726 : vector<2x256xf32>
    %728 = arith.addf %723, %727 : vector<2x256xf32>
    %729 = vector.extract_strided_slice %476 {offsets = [0, 98], sizes = [2, 256], strides = [1, 1]} : vector<2x512xf32> to vector<2x256xf32>
    %730 = vector.extract_strided_slice %2 {offsets = [0, 12], sizes = [2, 1], strides = [1, 1]} : vector<2x49xf32> to vector<2x1xf32>
    %731 = vector.broadcast %730 : vector<2x1xf32> to vector<2x256xf32>
    %732 = arith.mulf %729, %731 : vector<2x256xf32>
    %733 = arith.addf %728, %732 : vector<2x256xf32>
    %734 = vector.extract_strided_slice %476 {offsets = [0, 114], sizes = [2, 256], strides = [1, 1]} : vector<2x512xf32> to vector<2x256xf32>
    %735 = vector.extract_strided_slice %2 {offsets = [0, 19], sizes = [2, 1], strides = [1, 1]} : vector<2x49xf32> to vector<2x1xf32>
    %736 = vector.broadcast %735 : vector<2x1xf32> to vector<2x256xf32>
    %737 = arith.mulf %734, %736 : vector<2x256xf32>
    %738 = arith.addf %733, %737 : vector<2x256xf32>
    %739 = vector.extract_strided_slice %476 {offsets = [0, 130], sizes = [2, 256], strides = [1, 1]} : vector<2x512xf32> to vector<2x256xf32>
    %740 = vector.extract_strided_slice %2 {offsets = [0, 26], sizes = [2, 1], strides = [1, 1]} : vector<2x49xf32> to vector<2x1xf32>
    %741 = vector.broadcast %740 : vector<2x1xf32> to vector<2x256xf32>
    %742 = arith.mulf %739, %741 : vector<2x256xf32>
    %743 = arith.addf %738, %742 : vector<2x256xf32>
    %744 = vector.extract_strided_slice %476 {offsets = [0, 146], sizes = [2, 256], strides = [1, 1]} : vector<2x512xf32> to vector<2x256xf32>
    %745 = vector.extract_strided_slice %2 {offsets = [0, 33], sizes = [2, 1], strides = [1, 1]} : vector<2x49xf32> to vector<2x1xf32>
    %746 = vector.broadcast %745 : vector<2x1xf32> to vector<2x256xf32>
    %747 = arith.mulf %744, %746 : vector<2x256xf32>
    %748 = arith.addf %743, %747 : vector<2x256xf32>
    %749 = vector.extract_strided_slice %476 {offsets = [0, 162], sizes = [2, 256], strides = [1, 1]} : vector<2x512xf32> to vector<2x256xf32>
    %750 = vector.extract_strided_slice %2 {offsets = [0, 40], sizes = [2, 1], strides = [1, 1]} : vector<2x49xf32> to vector<2x1xf32>
    %751 = vector.broadcast %750 : vector<2x1xf32> to vector<2x256xf32>
    %752 = arith.mulf %749, %751 : vector<2x256xf32>
    %753 = arith.addf %748, %752 : vector<2x256xf32>
    %754 = vector.extract_strided_slice %476 {offsets = [0, 178], sizes = [2, 256], strides = [1, 1]} : vector<2x512xf32> to vector<2x256xf32>
    %755 = vector.extract_strided_slice %2 {offsets = [0, 47], sizes = [2, 1], strides = [1, 1]} : vector<2x49xf32> to vector<2x1xf32>
    %756 = vector.broadcast %755 : vector<2x1xf32> to vector<2x256xf32>
    %757 = arith.mulf %754, %756 : vector<2x256xf32>
    %758 = arith.addf %753, %757 : vector<2x256xf32>
    %c2_i32_133 = arith.constant 2 : i32
    %759 = vector.broadcast %c2_i32_133 : i32 to vector<1x256xi32>
    %760 = arith.addi %20, %759 : vector<1x256xi32>
    %c0_i32_134 = arith.constant 0 : i32
    %761 = vector.broadcast %c0_i32_134 : i32 to vector<1x256xi32>
    %762 = arith.cmpi sge, %760, %761 : vector<1x256xi32>
    %c16_i32_135 = arith.constant 16 : i32
    %763 = vector.broadcast %c16_i32_135 : i32 to vector<1x256xi32>
    %764 = arith.cmpi slt, %760, %763 : vector<1x256xi32>
    %765 = arith.andi %762, %764 : vector<1x256xi1>
    %cst_136 = arith.constant 1.000000e+00 : f32
    %cst_137 = arith.constant 0.000000e+00 : f32
    %766 = vector.broadcast %cst_136 : f32 to vector<1x256xf32>
    %767 = vector.broadcast %cst_137 : f32 to vector<1x256xf32>
    %768 = arith.select %765, %766, %767 : vector<1x256xi1>, vector<1x256xf32>
    %769 = vector.broadcast %768 : vector<1x256xf32> to vector<2x256xf32>
    %770 = arith.mulf %758, %769 : vector<2x256xf32>
    %771 = arith.addf %722, %770 : vector<2x256xf32>
    %cst_138 = arith.constant 0.000000e+00 : f32
    %772 = vector.broadcast %cst_138 : f32 to vector<2x256xf32>
    %773 = vector.extract_strided_slice %476 {offsets = [0, 83], sizes = [2, 256], strides = [1, 1]} : vector<2x512xf32> to vector<2x256xf32>
    %774 = vector.extract_strided_slice %2 {offsets = [0, 6], sizes = [2, 1], strides = [1, 1]} : vector<2x49xf32> to vector<2x1xf32>
    %775 = vector.broadcast %774 : vector<2x1xf32> to vector<2x256xf32>
    %776 = arith.mulf %773, %775 : vector<2x256xf32>
    %777 = arith.addf %772, %776 : vector<2x256xf32>
    %778 = vector.extract_strided_slice %476 {offsets = [0, 99], sizes = [2, 256], strides = [1, 1]} : vector<2x512xf32> to vector<2x256xf32>
    %779 = vector.extract_strided_slice %2 {offsets = [0, 13], sizes = [2, 1], strides = [1, 1]} : vector<2x49xf32> to vector<2x1xf32>
    %780 = vector.broadcast %779 : vector<2x1xf32> to vector<2x256xf32>
    %781 = arith.mulf %778, %780 : vector<2x256xf32>
    %782 = arith.addf %777, %781 : vector<2x256xf32>
    %783 = vector.extract_strided_slice %476 {offsets = [0, 115], sizes = [2, 256], strides = [1, 1]} : vector<2x512xf32> to vector<2x256xf32>
    %784 = vector.extract_strided_slice %2 {offsets = [0, 20], sizes = [2, 1], strides = [1, 1]} : vector<2x49xf32> to vector<2x1xf32>
    %785 = vector.broadcast %784 : vector<2x1xf32> to vector<2x256xf32>
    %786 = arith.mulf %783, %785 : vector<2x256xf32>
    %787 = arith.addf %782, %786 : vector<2x256xf32>
    %788 = vector.extract_strided_slice %476 {offsets = [0, 131], sizes = [2, 256], strides = [1, 1]} : vector<2x512xf32> to vector<2x256xf32>
    %789 = vector.extract_strided_slice %2 {offsets = [0, 27], sizes = [2, 1], strides = [1, 1]} : vector<2x49xf32> to vector<2x1xf32>
    %790 = vector.broadcast %789 : vector<2x1xf32> to vector<2x256xf32>
    %791 = arith.mulf %788, %790 : vector<2x256xf32>
    %792 = arith.addf %787, %791 : vector<2x256xf32>
    %793 = vector.extract_strided_slice %476 {offsets = [0, 147], sizes = [2, 256], strides = [1, 1]} : vector<2x512xf32> to vector<2x256xf32>
    %794 = vector.extract_strided_slice %2 {offsets = [0, 34], sizes = [2, 1], strides = [1, 1]} : vector<2x49xf32> to vector<2x1xf32>
    %795 = vector.broadcast %794 : vector<2x1xf32> to vector<2x256xf32>
    %796 = arith.mulf %793, %795 : vector<2x256xf32>
    %797 = arith.addf %792, %796 : vector<2x256xf32>
    %798 = vector.extract_strided_slice %476 {offsets = [0, 163], sizes = [2, 256], strides = [1, 1]} : vector<2x512xf32> to vector<2x256xf32>
    %799 = vector.extract_strided_slice %2 {offsets = [0, 41], sizes = [2, 1], strides = [1, 1]} : vector<2x49xf32> to vector<2x1xf32>
    %800 = vector.broadcast %799 : vector<2x1xf32> to vector<2x256xf32>
    %801 = arith.mulf %798, %800 : vector<2x256xf32>
    %802 = arith.addf %797, %801 : vector<2x256xf32>
    %803 = vector.extract_strided_slice %476 {offsets = [0, 179], sizes = [2, 256], strides = [1, 1]} : vector<2x512xf32> to vector<2x256xf32>
    %804 = vector.extract_strided_slice %2 {offsets = [0, 48], sizes = [2, 1], strides = [1, 1]} : vector<2x49xf32> to vector<2x1xf32>
    %805 = vector.broadcast %804 : vector<2x1xf32> to vector<2x256xf32>
    %806 = arith.mulf %803, %805 : vector<2x256xf32>
    %807 = arith.addf %802, %806 : vector<2x256xf32>
    %c3_i32_139 = arith.constant 3 : i32
    %808 = vector.broadcast %c3_i32_139 : i32 to vector<1x256xi32>
    %809 = arith.addi %20, %808 : vector<1x256xi32>
    %c0_i32_140 = arith.constant 0 : i32
    %810 = vector.broadcast %c0_i32_140 : i32 to vector<1x256xi32>
    %811 = arith.cmpi sge, %809, %810 : vector<1x256xi32>
    %c16_i32_141 = arith.constant 16 : i32
    %812 = vector.broadcast %c16_i32_141 : i32 to vector<1x256xi32>
    %813 = arith.cmpi slt, %809, %812 : vector<1x256xi32>
    %814 = arith.andi %811, %813 : vector<1x256xi1>
    %cst_142 = arith.constant 1.000000e+00 : f32
    %cst_143 = arith.constant 0.000000e+00 : f32
    %815 = vector.broadcast %cst_142 : f32 to vector<1x256xf32>
    %816 = vector.broadcast %cst_143 : f32 to vector<1x256xf32>
    %817 = arith.select %814, %815, %816 : vector<1x256xi1>, vector<1x256xf32>
    %818 = vector.broadcast %817 : vector<1x256xf32> to vector<2x256xf32>
    %819 = arith.mulf %807, %818 : vector<2x256xf32>
    %820 = arith.addf %771, %819 : vector<2x256xf32>
    %cst_144 = arith.constant dense<0.000000e+00> : vector<256xf32>
    %821 = vector.multi_reduction <add>, %820, %cst_144 [0] : vector<2x256xf32> to vector<256xf32>
    %822 = vector.shape_cast %821 : vector<256xf32> to vector<1x256xf32>
    %823 = vector.broadcast %3 : f32 to vector<1x256xf32>
    %824 = arith.addf %822, %823 : vector<1x256xf32>
    %825 = arith.negf %824 : vector<1x256xf32>
    %826 = math.exp %825 : vector<1x256xf32>
    %cst_145 = arith.constant 1.000000e+00 : f32
    %827 = vector.broadcast %cst_145 : f32 to vector<1x256xf32>
    %828 = arith.addf %827, %826 : vector<1x256xf32>
    %829 = arith.divf %827, %828 : vector<1x256xf32>
    %c1_146 = arith.constant 1 : index
    %c0_147 = arith.constant 0 : index
    %c0_148 = arith.constant 0 : index
    %830 = vector.load %arg1[%c1_146, %c0_147, %c0_148] : memref<2x32x256xf32, #tpu.memory_space<vmem>>, vector<1x32x256xf32>
    %831 = vector.shape_cast %830 : vector<1x32x256xf32> to vector<32x256xf32>
    %832 = vector.broadcast %829 : vector<1x256xf32> to vector<32x256xf32>
    %833 = arith.mulf %831, %832 : vector<32x256xf32>
    %834 = vector.broadcast %465 : vector<32x1xf32> to vector<32x256xf32>
    %835 = arith.mulf %833, %834 : vector<32x256xf32>
    %c1_149 = arith.constant 1 : index
    %c0_150 = arith.constant 0 : index
    %c0_151 = arith.constant 0 : index
    %836 = vector.load %arg6[%c1_149, %c0_150, %c0_151] : memref<2x32x256xf32, #tpu.memory_space<vmem>>, vector<1x32x256xf32>
    %837 = vector.shape_cast %836 : vector<1x32x256xf32> to vector<32x256xf32>
    %838 = vector.shape_cast %835 : vector<32x256xf32> to vector<1x32x256xf32>
    tpu.vector_store %arg6[%c1_149, %c0_150, %c0_151], %838 {strides = array<i32>} : memref<2x32x256xf32, #tpu.memory_space<vmem>>, vector<1x32x256xf32>,
    return
  }
  func.func @transform_0(%arg0: i32) -> (i32, i32, i32) {
    %c0_i32 = arith.constant 0 : i32
    %c0_i32_0 = arith.constant 0 : i32
    %c0_i32_1 = arith.constant 0 : i32
    return %arg0, %c0_i32, %c0_i32_0 : i32, i32, i32
  }
  func.func @transform_1(%arg0: i32) -> (i32, i32) {
    %c0_i32 = arith.constant 0 : i32
    %c0_i32_0 = arith.constant 0 : i32
    %c0_i32_1 = arith.constant 0 : i32
    return %c0_i32, %c0_i32_0 : i32, i32
  }
  func.func @transform_2(%arg0: i32) -> (i32, i32) {
    %c0_i32 = arith.constant 0 : i32
    %c0_i32_0 = arith.constant 0 : i32
    %c0_i32_1 = arith.constant 0 : i32
    return %c0_i32, %c0_i32_0 : i32, i32
  }
  func.func @transform_3(%arg0: i32) -> (i32, i32) {
    %c0_i32 = arith.constant 0 : i32
    %c0_i32_0 = arith.constant 0 : i32
    %c0_i32_1 = arith.constant 0 : i32
    return %c0_i32, %c0_i32_0 : i32, i32
  }
  func.func @transform_4(%arg0: i32) -> i32 {
    %c0_i32 = arith.constant 0 : i32
    %c0_i32_0 = arith.constant 0 : i32
    return %c0_i32 : i32
  }
  func.func @transform_5(%arg0: i32) -> (i32, i32, i32) {
    %c0_i32 = arith.constant 0 : i32
    %c0_i32_0 = arith.constant 0 : i32
    %c0_i32_1 = arith.constant 0 : i32
    return %arg0, %c0_i32, %c0_i32_0 : i32, i32, i32
  }
}

</mosaic_0001>

<llo_original>
// kernel: tpu_custom_call.1
$region0: #{tpu_custom_call.1}
  #allocation0 [shape = 'u32[]', space=smem, size = 0x4, offset = 0x4, fixed_abs, tag = 'smem constant byte address 0x4 - core index']
  #allocation1 [shape = 'u32[72,128]{1,0:T(1,128)}', space=vmem, size = 0x9000, scoped, tag = 'internal scratch']
  #allocation2 [shape = 'f32[2,512]{1,0:T(2,128)}', space=vmem, size = 0x1000, scoped, tag = 'scratch operand']
  #allocation3 [shape = 'f32[1]{0:T(128)S(6)}', space=smem, size = 0x200, scoped, tag = 'scoped memory for tpu_custom_call.1']
  %s0 = inlined_call_operand.hbm [shape: f32[4,32,256], index: 0, kind: input, shape index: {}]
  %s1 = inlined_call_operand.vmem [shape: f32[32,2], index: 1, kind: input, shape index: {}]
  %s2 = inlined_call_operand.vmem [shape: f32[32,2], index: 2, kind: input, shape index: {}]
  %s3 = inlined_call_operand.vmem [shape: f32[2,49], index: 3, kind: input, shape index: {}]
  %s4 = inlined_call_operand.<no memory space> [shape: f32[1], index: 4, kind: input, shape index: {}]
  %s5 = inlined_call_operand.hbm [shape: f32[4,32,256], index: 5, kind: output, shape index: {}]
  %s6 = sld [smem:[#allocation0]]
  $region57: #{tpu_custom_call.1} parent=0
    _
  %s8 = ssub.s32 1, %s6
  %s9 = scalar_select 0, %s8, %s6
  %10 = sst [smem:[#allocation3]] %s4
  $region1: #{tpu_custom_call.1} parent=0
    #allocation4 [shape = 'u8[131072]{0}', space=vmem, size = 0x20000, scoped, tag = 'input window, operand 0']
    #allocation5 [shape = 's32[2]{0}', space=sflag, size = 0x8, scoped, tag = 'scoped memory for tpu_custom_call.1']
    #allocation6 [shape = 's32[2]{0}', space=sflag, size = 0x8, scoped, tag = 'scoped memory for tpu_custom_call.1']
    #allocation7 [shape = 'u8[131072]{0}', space=vmem, size = 0x20000, scoped, tag = 'output window, operand 0']
    %11 = vsyncpa [#allocation5], 0
    %s12 = scalar_lea.sflag [#allocation5], 1
    %13 = vsyncpa %s12, 0
    %14 = vsyncpa [#allocation6], 0
    %s15 = scalar_lea.sflag [#allocation6], 1
    %16 = vsyncpa %s15, 0
    loop: start=0, step=1, limit=4
    $region2: #{tpu_custom_call.1} parent=1 // loop_pre_header
      _
    $region3: #{tpu_custom_call.1} parent=1 // loop_header
      %s18 = sphi 0, %s22
      %p19 = scmp.ge.s32.totalorder %s18, 4
      %s28 = sphi 0, %s30
      %s31 = sphi 0, %s28
      %s32 = sphi 0, %s31
      %s48 = sphi 0, %s32
      %s52 = sphi 0, %s52
      %s54 = sphi 0, %s52
      %s55 = sphi 0, %s54
      %s69 = sphi 0, %s55
      %s73 = sphi 0, %s73
      %s75 = sphi 0, %s73
      %s76 = sphi 0, %s75
      %s90 = sphi 0, %s76
      %s94 = sphi 0, %s94
      %s96 = sphi 0, %s94
      %s97 = sphi 0, %s96
      %s111 = sphi 0, %s97
      %s115 = sphi 0, %s115
      %s117 = sphi 0, %s115
      %s118 = sphi 0, %s117
      %s132 = sphi 0, %s118
      %s138 = sphi 0, %s140
      %s141 = sphi 0, %s138
      %s142 = sphi 0, %s141
      %s158 = sphi 0, %s142
    $region4: #{tpu_custom_call.1} parent=1 // loop_header_branch
      %21 = sbr.rel (%p19) target = $region8
    $region5: #{tpu_custom_call.1} parent=1 // loop_body
      %s23 = ssub.s32 %s18, 1
      %s24 = ssub.s32 %s18, 2
      %s25 = sadd.s32 %s18, 1
      %s26 = ssub.s32 %s18, %s25
      %p27 = scmp.eq.s32.totalorder %s26, 0
      %s29 = sadd.s32 %s28, 1
      %s30 = scalar_select %p27, %s28, %s29
      %p33 = pneg %p27
      %p34 = scmp.eq.s32.totalorder %s18, 1
      %p35 = por %p33, %p34
      %p36 = scmp.ne.s32.totalorder %s28, %s31
      %p37 = scmp.eq.s32.totalorder %s18, 0
      %p38 = por %p36, %p37
      %p39 = scmp.ne.s32.totalorder %s28, %s31
      %p40 = scmp.eq.s32.totalorder %s23, 1
      %p41 = por %p39, %p40
      %p42 = scmp.ne.s32.totalorder %s31, %s32
      %p43 = scmp.eq.s32.totalorder %s23, 0
      %p44 = por %p42, %p43
      %p45 = scmp.ne.s32.totalorder %s31, %s32
      %p46 = scmp.eq.s32.totalorder %s24, 1
      %p47 = por %p45, %p46
      %p49 = scmp.ne.s32.totalorder %s32, %s48
      %p50 = scmp.eq.s32.totalorder %s24, 0
      %p51 = por %p49, %p50
      %s53 = sadd.s32 %s52, 1
      %p56 = scmp.eq.s32.totalorder %s18, 1
      %p57 = scmp.ne.s32.totalorder %s52, %s54
      %p58 = scmp.eq.s32.totalorder %s18, 0
      %p59 = por %p57, %p58
      %p60 = scmp.ne.s32.totalorder %s52, %s54
      %p61 = scmp.eq.s32.totalorder %s23, 1
      %p62 = por %p60, %p61
      %p63 = scmp.ne.s32.totalorder %s54, %s55
      %p64 = scmp.eq.s32.totalorder %s23, 0
      %p65 = por %p63, %p64
      %p66 = scmp.ne.s32.totalorder %s54, %s55
      %p67 = scmp.eq.s32.totalorder %s24, 1
      %p68 = por %p66, %p67
      %p70 = scmp.ne.s32.totalorder %s55, %s69
      %p71 = scmp.eq.s32.totalorder %s24, 0
      %p72 = por %p70, %p71
      %s74 = sadd.s32 %s73, 1
      %p77 = scmp.eq.s32.totalorder %s18, 1
      %p78 = scmp.ne.s32.totalorder %s73, %s75
      %p79 = scmp.eq.s32.totalorder %s18, 0
      %p80 = por %p78, %p79
      %p81 = scmp.ne.s32.totalorder %s73, %s75
      %p82 = scmp.eq.s32.totalorder %s23, 1
      %p83 = por %p81, %p82
      %p84 = scmp.ne.s32.totalorder %s75, %s76
      %p85 = scmp.eq.s32.totalorder %s23, 0
      %p86 = por %p84, %p85
      %p87 = scmp.ne.s32.totalorder %s75, %s76
      %p88 = scmp.eq.s32.totalorder %s24, 1
      %p89 = por %p87, %p88
      %p91 = scmp.ne.s32.totalorder %s76, %s90
      %p92 = scmp.eq.s32.totalorder %s24, 0
      %p93 = por %p91, %p92
      %s95 = sadd.s32 %s94, 1
      %p98 = scmp.eq.s32.totalorder %s18, 1
      %p99 = scmp.ne.s32.totalorder %s94, %s96
      %p100 = scmp.eq.s32.totalorder %s18, 0
      %p101 = por %p99, %p100
      %p102 = scmp.ne.s32.totalorder %s94, %s96
      %p103 = scmp.eq.s32.totalorder %s23, 1
      %p104 = por %p102, %p103
      %p105 = scmp.ne.s32.totalorder %s96, %s97
      %p106 = scmp.eq.s32.totalorder %s23, 0
      %p107 = por %p105, %p106
      %p108 = scmp.ne.s32.totalorder %s96, %s97
      %p109 = scmp.eq.s32.totalorder %s24, 1
      %p110 = por %p108, %p109
      %p112 = scmp.ne.s32.totalorder %s97, %s111
      %p113 = scmp.eq.s32.totalorder %s24, 0
      %p114 = por %p112, %p113
      %s116 = sadd.s32 %s115, 1
      %p119 = scmp.eq.s32.totalorder %s18, 1
      %p120 = scmp.ne.s32.totalorder %s115, %s117
      %p121 = scmp.eq.s32.totalorder %s18, 0
      %p122 = por %p120, %p121
      %p123 = scmp.ne.s32.totalorder %s115, %s117
      %p124 = scmp.eq.s32.totalorder %s23, 1
      %p125 = por %p123, %p124
      %p126 = scmp.ne.s32.totalorder %s117, %s118
      %p127 = scmp.eq.s32.totalorder %s23, 0
      %p128 = por %p126, %p127
      %p129 = scmp.ne.s32.totalorder %s117, %s118
      %p130 = scmp.eq.s32.totalorder %s24, 1
      %p131 = por %p129, %p130
      %p133 = scmp.ne.s32.totalorder %s118, %s132
      %p134 = scmp.eq.s32.totalorder %s24, 0
      %p135 = por %p133, %p134
      %s136 = ssub.s32 %s18, %s25
      %p137 = scmp.eq.s32.totalorder %s136, 0
      %s139 = sadd.s32 %s138, 1
      %s140 = scalar_select %p137, %s138, %s139
      %p143 = pneg %p137
      %p144 = scmp.eq.s32.totalorder %s18, 1
      %p145 = por %p143, %p144
      %p146 = scmp.ne.s32.totalorder %s138, %s141
      %p147 = scmp.eq.s32.totalorder %s18, 0
      %p148 = por %p146, %p147
      %p149 = scmp.ne.s32.totalorder %s138, %s141
      %p150 = scmp.eq.s32.totalorder %s23, 1
      %p151 = por %p149, %p150
      %p152 = scmp.ne.s32.totalorder %s141, %s142
      %p153 = scmp.eq.s32.totalorder %s23, 0
      %p154 = por %p152, %p153
      %p155 = scmp.ne.s32.totalorder %s141, %s142
      %p156 = scmp.eq.s32.totalorder %s24, 1
      %p157 = por %p155, %p156
      %p159 = scmp.ne.s32.totalorder %s142, %s158
      %p160 = scmp.eq.s32.totalorder %s24, 0
      %p161 = por %p159, %p160
      %p162 = scmp.le.s32.totalorder 1, %s18
      %p163 = scmp.lt.s32.totalorder %s18, 3
      %p164 = pnand %p162, %p163
      %p165 = pneg %p164
      // Predicated region
      $region9: #{tpu_custom_call.1} parent=5 // pred_check
        _
      $region10: #{tpu_custom_call.1} parent=5 // pred_check_branch
        %167 = sbr.rel (%p164) target = $region12
      $region11: #{tpu_custom_call.1} parent=5 // pred_region
        %s168 = ssub.s32 %s18, 1
        // Predicated region
        $region13: #{tpu_custom_call.1} parent=11 // pred_check
          %p169 = pneg %p65
        $region14: #{tpu_custom_call.1} parent=11 // pred_check_branch
          %171 = sbr.rel (%p169) target = $region16
        $region15: #{tpu_custom_call.1} parent=11 // pred_region
          _
        $region16: #{tpu_custom_call.1} parent=11 // pred_fallthru
          _
        // Predicated region
        $region17: #{tpu_custom_call.1} parent=11 // pred_check
          %p172 = pneg %p86
        $region18: #{tpu_custom_call.1} parent=11 // pred_check_branch
          %174 = sbr.rel (%p172) target = $region20
        $region19: #{tpu_custom_call.1} parent=11 // pred_region
          _
        $region20: #{tpu_custom_call.1} parent=11 // pred_fallthru
          _
        // Predicated region
        $region21: #{tpu_custom_call.1} parent=11 // pred_check
          %p175 = pneg %p107
        $region22: #{tpu_custom_call.1} parent=11 // pred_check_branch
          %177 = sbr.rel (%p175) target = $region24
        $region23: #{tpu_custom_call.1} parent=11 // pred_region
          _
        $region24: #{tpu_custom_call.1} parent=11 // pred_fallthru
          _
        // Predicated region
        $region25: #{tpu_custom_call.1} parent=11 // pred_check
          %p178 = pneg %p128
        $region26: #{tpu_custom_call.1} parent=11 // pred_check_branch
          %180 = sbr.rel (%p178) target = $region28
        $region27: #{tpu_custom_call.1} parent=11 // pred_region
          _
        $region28: #{tpu_custom_call.1} parent=11 // pred_fallthru
          _
      $region12: #{tpu_custom_call.1} parent=5 // pred_fallthru
        _
      %p181 = scmp.lt.s32.totalorder %s18, 2
      // Predicated region
      $region29: #{tpu_custom_call.1} parent=5 // pred_check
        %p182 = pneg %p181
      $region30: #{tpu_custom_call.1} parent=5 // pred_check_branch
        %184 = sbr.rel (%p182) target = $region32
      $region31: #{tpu_custom_call.1} parent=5 // pred_region
        // Predicated region
        $region33: #{tpu_custom_call.1} parent=31 // pred_check
          %p185 = pneg %p38
        $region34: #{tpu_custom_call.1} parent=31 // pred_check_branch
          %187 = sbr.rel (%p185) target = $region36
        $region35: #{tpu_custom_call.1} parent=31 // pred_region
          %s188 = sand.u32 %s28, 1
          %s189 = scalar_lea.sflag [#allocation5], %s188
          %s190 = sand.u32 %s28, 1
          %s191 = smul.addr %s190, 128
          %s192 = scalar_lea.vmem [#allocation4], %s191
          %s193 = smul.u32 2, %s18
          %195 = vsyncadd %s189, 0
          %s196 = smul.addr %s193, 8
          %s197 = smul.addr %s196, 8
          %s198 = scalar_lea.hbm %s0, %s197
          %s199 = sshll.u32 %s198, 4
          %s200 = int_to_ptr.hbm [resolvable:$true] %s199
          %s201 = sshll.u32 %s192, 4
          %s202 = int_to_ptr.vmem [resolvable:$true] %s201
          %207 = dma.hbm_to_vmem [thread:$0]  %s200, 2048, %s202, %s189, 256, 256, 16
        $region36: #{tpu_custom_call.1} parent=31 // pred_fallthru
          _
      $region32: #{tpu_custom_call.1} parent=5 // pred_fallthru
        _
      %p208 = scmp.le.s32.totalorder 1, %s18
      %p209 = scmp.lt.s32.totalorder %s18, 3
      %p210 = pnand %p208, %p209
      %p211 = pneg %p210
      // Predicated region
      $region37: #{tpu_custom_call.1} parent=5 // pred_check
        _
      $region38: #{tpu_custom_call.1} parent=5 // pred_check_branch
        %213 = sbr.rel (%p210) target = $region40
      $region39: #{tpu_custom_call.1} parent=5 // pred_region
        %s214 = ssub.s32 %s18, 1
        %s215 = sand.u32 %s31, 1
        %s216 = scalar_lea.sflag [#allocation5], %s215
        %s217 = sand.u32 %s31, 1
        %s218 = smul.addr %s217, 128
        %s219 = scalar_lea.vmem [#allocation4], %s218
        // Predicated region
        $region41: #{tpu_custom_call.1} parent=39 // pred_check
          %p220 = pneg %p44
        $region42: #{tpu_custom_call.1} parent=39 // pred_check_branch
          %222 = sbr.rel (%p220) target = $region44
        $region43: #{tpu_custom_call.1} parent=39 // pred_region
          %224 = dma.done %s216, 2048
        $region44: #{tpu_custom_call.1} parent=39 // pred_fallthru
          _
        %s225 = sand.u32 %s31, 1
        %s226 = scalar_lea.sflag [#allocation5], %s225
        %s227 = sand.u32 %s31, 1
        %s228 = smul.addr %s227, 128
        %s229 = scalar_lea.vmem [#allocation4], %s228
        %p230 = pneg %p44
        %p231 = pneg %p41
        %p232 = pneg %p65
        %p233 = pneg %p62
        %p234 = pneg %p86
        %p235 = pneg %p83
        %p236 = pneg %p107
        %p237 = pneg %p104
        %p238 = pneg %p128
        %p239 = pneg %p125
        %p240 = pneg %p154
        %p241 = pneg %p151
        %s242 = sand.u32 %s141, 1
        %s243 = scalar_lea.sflag [#allocation6], %s242
        %s244 = sand.u32 %s141, 1
        %s245 = smul.addr %s244, 128
        %s246 = scalar_lea.vmem [#allocation7], %s245
        %s247 = smul.u32 2, %s23
        %s248 = smul.u32 2, %s23
        %v249 = vld [vmem:[%s1] sm:$0xff]
        %v250 = vld [vmem:[%s1 + $0x8] sm:$0xff]
        %v251 = vld [vmem:[%s1 + $0x10] sm:$0xff]
        %v252 = vld [vmem:[%s1 + $0x18] sm:$0xff]
        %v253 = vld [vmem:[%s2] sm:$0xff]
        %v254 = vld [vmem:[%s2 + $0x8] sm:$0xff]
        %v255 = vld [vmem:[%s2 + $0x10] sm:$0xff]
        %v256 = vld [vmem:[%s2 + $0x18] sm:$0xff]
        %v257 = vld [vmem:[%s3] sm:$0x3]
        %s258 = sld [smem:[#allocation3]]
        %v259 = vlaneseq
        %v260 = vand.u32 %v259, 127
        %v261 = vadd.s32 %v260, 128
        %vm262 = vcmp.lt.s32.totalorder %v260, 0
        %v263 = vsub.s32 0, %v260
        %v264 = vsel %vm262, %v263, %v260
        %v265 = vshrl.u32 %v264, 4
        %v266 = vand.u32 %v264, 15
        %v267 = vsub.s32 0, %v266
        %v268 = vsel %vm262, %v267, %v266
        %vm269 = vcmp.lt.s32.totalorder %v261, 0
        %v270 = vsub.s32 0, %v261
        %v271 = vsel %vm269, %v270, %v261
        %v272 = vshrl.u32 %v271, 4
        %v273 = vand.u32 %v271, 15
        %v274 = vsub.s32 0, %v273
        %v275 = vsel %vm269, %v274, %v273
        %vm276 = vcmp.ne.s32.totalorder %v268, 0
        %vm277 = vcmp.ne.s32.totalorder %v275, 0
        %vm278 = vcmp.lt.s32.totalorder %v268, 0
        %vm279 = vcmp.lt.s32.totalorder %v275, 0
        %vm280 = vmand %vm278, %vm276
        %vm281 = vmand %vm279, %vm277
        %v282 = vadd.s32 %v268, 16
        %v283 = vadd.s32 %v275, 16
        %v284 = vsel %vm280, %v282, %v268
        %v285 = vsel %vm281, %v283, %v275
        %286 = vst [vmem:[#allocation2] sm:$0x3] 0.0
        %287 = vst [vmem:[#allocation2 + $0x6] sm:$0x3] 0.0
        %v288 = vld [vmem:[%s219] sm:$0xff]
        %v289 = vld [vmem:[%s219 + $0x8] sm:$0xff]
        %v290 = vld [vmem:[%s219 + $0x10] sm:$0xff]
        %v291 = vld [vmem:[%s219 + $0x18] sm:$0xff]
        %v292 = vld [vmem:[%s219 + $0x20] sm:$0xff]
        %v293 = vld [vmem:[%s219 + $0x28] sm:$0xff]
        %v294 = vld [vmem:[%s219 + $0x30] sm:$0xff]
        %v295 = vld [vmem:[%s219 + $0x38] sm:$0xff]
        %v296 = vadd.f32 %v288, %v289
        %297 = vadd.xlane.f32.xlu0 %v296
        %v298 = vpop.xlane.xlu0 %297
        %v299 = vadd.f32 %v290, %v291
        %300 = vadd.xlane.f32.xlu0 %v299
        %v301 = vpop.xlane.xlu0 %300
        %v302 = vadd.f32 %v292, %v293
        %303 = vadd.xlane.f32.xlu0 %v302
        %v304 = vpop.xlane.xlu0 %303
        %v305 = vadd.f32 %v294, %v295
        %306 = vadd.xlane.f32.xlu0 %v305
        %v307 = vpop.xlane.xlu0 %306
        %v308 = vrcp.pop 256.0
        %v309 = vmul.f32 256.0, %v308
        %v310 = vsub.f32 1.0, %v309
        %v311 = vmul.f32 %v308, %v310
        %v312 = vadd.f32 %v308, %v311
        %vm313 = vweird.f32 %v308
        %v314 = vsel %vm313, %v308, %v312
        %v315 = vmul.f32 %v298, %v314
        %v316 = vmul.f32 %v301, %v314
        %v317 = vmul.f32 %v304, %v314
        %v318 = vmul.f32 %v307, %v314
        %v319 = vmax.f32 %v288, %v289
        %320 = vmax.xlane.f32.xlu0 %v319
        %v321 = vpop.xlane.xlu0 %320
        %v322 = vmax.f32 %v290, %v291
        %323 = vmax.xlane.f32.xlu0 %v322
        %v324 = vpop.xlane.xlu0 %323
        %v325 = vmax.f32 %v292, %v293
        %326 = vmax.xlane.f32.xlu0 %v325
        %v327 = vpop.xlane.xlu0 %326
        %v328 = vmax.f32 %v294, %v295
        %329 = vmax.xlane.f32.xlu0 %v328
        %v330 = vpop.xlane.xlu0 %329
        %v331 = vmul.f32 %v315, %v249
        %v332 = vmul.f32 %v316, %v250
        %v333 = vmul.f32 %v317, %v251
        %v334 = vmul.f32 %v318, %v252
        %vm335 = vcmask 15360
        %v336 = vsel %vm335, %v331, 0.0
        %v337 = vsel %vm335, %v332, 0.0
        %v338 = vadd.f32 %v336, %v337
        %v339 = vsel %vm335, %v333, 0.0
        %v340 = vadd.f32 %v338, %v339
        %v341 = vsel %vm335, %v334, 0.0
        %v342 = vadd.f32 %v340, %v341
        %v343 = vrot.slane %v342, 4
        %v344 = vadd.f32 %v342, %v343
        %v345 = vrot.slane %v344, 2
        %v346 = vadd.f32 %v344, %v345
        %v347 = vrot.slane %v346, 1
        %v348 = vadd.f32 %v346, %v347
        %v349 = vmax.f32 %v348, 0.0
        %v350 = vmul.f32 %v321, %v249
        %v351 = vmul.f32 %v324, %v250
        %v352 = vmul.f32 %v327, %v251
        %v353 = vmul.f32 %v330, %v252
        %v354 = vsel %vm335, %v350, 0.0
        %v355 = vsel %vm335, %v351, 0.0
        %v356 = vadd.f32 %v354, %v355
        %v357 = vsel %vm335, %v352, 0.0
        %v358 = vadd.f32 %v356, %v357
        %v359 = vsel %vm335, %v353, 0.0
        %v360 = vadd.f32 %v358, %v359
        %v361 = vrot.slane %v360, 4
        %v362 = vadd.f32 %v360, %v361
        %v363 = vrot.slane %v362, 2
        %v364 = vadd.f32 %v362, %v363
        %v365 = vrot.slane %v364, 1
        %v366 = vadd.f32 %v364, %v365
        %v367 = vmax.f32 %v366, 0.0
        %v368 = vmul.f32 %v253, %v349
        %v369 = vmul.f32 %v254, %v349
        %v370 = vmul.f32 %v255, %v349
        %v371 = vmul.f32 %v256, %v349
        %v372 = vsel %vm335, %v368, 0.0
        %373 = vadd.xlane.f32.xlu0 %v372
        %v374 = vpop.xlane.xlu0 %373
        %v375 = vsel %vm335, %v369, 0.0
        %376 = vadd.xlane.f32.xlu0 %v375
        %v377 = vpop.xlane.xlu0 %376
        %v378 = vsel %vm335, %v370, 0.0
        %379 = vadd.xlane.f32.xlu0 %v378
        %v380 = vpop.xlane.xlu0 %379
        %v381 = vsel %vm335, %v371, 0.0
        %382 = vadd.xlane.f32.xlu0 %v381
        %v383 = vpop.xlane.xlu0 %382
        %v384 = vmul.f32 %v253, %v367
        %v385 = vmul.f32 %v254, %v367
        %v386 = vmul.f32 %v255, %v367
        %v387 = vmul.f32 %v256, %v367
        %v388 = vsel %vm335, %v384, 0.0
        %389 = vadd.xlane.f32.xlu0 %v388
        %v390 = vpop.xlane.xlu0 %389
        %v391 = vsel %vm335, %v385, 0.0
        %392 = vadd.xlane.f32.xlu0 %v391
        %v393 = vpop.xlane.xlu0 %392
        %v394 = vsel %vm335, %v386, 0.0
        %395 = vadd.xlane.f32.xlu0 %v394
        %v396 = vpop.xlane.xlu0 %395
        %v397 = vsel %vm335, %v387, 0.0
        %398 = vadd.xlane.f32.xlu0 %v397
        %v399 = vpop.xlane.xlu0 %398
        %v400 = vadd.f32 %v374, %v390
        %v401 = vadd.f32 %v377, %v393
        %v402 = vadd.f32 %v380, %v396
        %v403 = vadd.f32 %v383, %v399
        %v404 = vxor.u32 %v400, 2147483648
        %v405 = vxor.u32 %v401, 2147483648
        %v406 = vxor.u32 %v402, 2147483648
        %v407 = vxor.u32 %v403, 2147483648
        %v408 = vmul.f32 %v404, 1.442695
        %v409 = vpow.pop %v408
        %v410 = vmul.f32 %v405, 1.442695
        %v411 = vpow.pop %v410
        %v412 = vmul.f32 %v406, 1.442695
        %v413 = vpow.pop %v412
        %v414 = vmul.f32 %v407, 1.442695
        %v415 = vpow.pop %v414
        %v416 = vadd.f32 %v409, 1.0
        %v417 = vadd.f32 %v411, 1.0
        %v418 = vadd.f32 %v413, 1.0
        %v419 = vadd.f32 %v415, 1.0
        %v420 = vrcp.pop %v416
        %v421 = vmul.f32 %v416, %v420
        %v422 = vsub.f32 1.0, %v421
        %v423 = vmul.f32 %v420, %v422
        %v424 = vadd.f32 %v420, %v423
        %vm425 = vweird.f32 %v416
        %vm426 = vweird.f32 %v420
        %vm427 = vmor %vm425, %vm426
        %v428 = vsel %vm427, %v420, %v424
        %v429 = vand.u32 2147483647, %v416
        %vm430 = vcmp.eq.f32.partialorder %v429, 8.507059e+37
        %v431 = vand.u32 %v416, 2147483648
        %v432 = vor.u32 1.1754944e-38, %v431
        %v433 = vsel %vm430, %v432, %v428
        %v434 = vmul.f32 1.0, %v433
        %v435 = vrcp.pop %v417
        %v436 = vmul.f32 %v417, %v435
        %v437 = vsub.f32 1.0, %v436
        %v438 = vmul.f32 %v435, %v437
        %v439 = vadd.f32 %v435, %v438
        %vm440 = vweird.f32 %v417
        %vm441 = vweird.f32 %v435
        %vm442 = vmor %vm440, %vm441
        %v443 = vsel %vm442, %v435, %v439
        %v444 = vand.u32 2147483647, %v417
        %vm445 = vcmp.eq.f32.partialorder %v444, 8.507059e+37
        %v446 = vand.u32 %v417, 2147483648
        %v447 = vor.u32 1.1754944e-38, %v446
        %v448 = vsel %vm445, %v447, %v443
        %v449 = vmul.f32 1.0, %v448
        %v450 = vrcp.pop %v418
        %v451 = vmul.f32 %v418, %v450
        %v452 = vsub.f32 1.0, %v451
        %v453 = vmul.f32 %v450, %v452
        %v454 = vadd.f32 %v450, %v453
        %vm455 = vweird.f32 %v418
        %vm456 = vweird.f32 %v450
        %vm457 = vmor %vm455, %vm456
        %v458 = vsel %vm457, %v450, %v454
        %v459 = vand.u32 2147483647, %v418
        %vm460 = vcmp.eq.f32.partialorder %v459, 8.507059e+37
        %v461 = vand.u32 %v418, 2147483648
        %v462 = vor.u32 1.1754944e-38, %v461
        %v463 = vsel %vm460, %v462, %v458
        %v464 = vmul.f32 1.0, %v463
        %v465 = vrcp.pop %v419
        %v466 = vmul.f32 %v419, %v465
        %v467 = vsub.f32 1.0, %v466
        %v468 = vmul.f32 %v465, %v467
        %v469 = vadd.f32 %v465, %v468
        %vm470 = vweird.f32 %v419
        %vm471 = vweird.f32 %v465
        %vm472 = vmor %vm470, %vm471
        %v473 = vsel %vm472, %v465, %v469
        %v474 = vand.u32 2147483647, %v419
        %vm475 = vcmp.eq.f32.partialorder %v474, 8.507059e+37
        %v476 = vand.u32 %v419, 2147483648
        %v477 = vor.u32 1.1754944e-38, %v476
        %v478 = vsel %vm475, %v477, %v473
        %v479 = vmul.f32 1.0, %v478
        %v480 = vmul.f32 %v288, %v434
        %v481 = vmul.f32 %v289, %v434
        %v482 = vmul.f32 %v290, %v449
        %v483 = vmul.f32 %v291, %v449
        %v484 = vmul.f32 %v292, %v464
        %v485 = vmul.f32 %v293, %v464
        %v486 = vmul.f32 %v294, %v479
        %v487 = vmul.f32 %v295, %v479
        %v488 = vadd.f32 %v480, %v482
        %v489 = vadd.f32 %v488, %v484
        %v490 = vadd.f32 %v489, %v486
        %v491 = vrot.slane %v490, 4
        %v492 = vadd.f32 %v490, %v491
        %v493 = vrot.slane %v492, 2
        %v494 = vadd.f32 %v492, %v493
        %v495 = vrot.slane %v494, 1
        %v496 = vadd.f32 %v494, %v495
        %v497 = vadd.f32 %v481, %v483
        %v498 = vadd.f32 %v497, %v485
        %v499 = vadd.f32 %v498, %v487
        %v500 = vrot.slane %v499, 4
        %v501 = vadd.f32 %v499, %v500
        %v502 = vrot.slane %v501, 2
        %v503 = vadd.f32 %v501, %v502
        %v504 = vrot.slane %v503, 1
        %v505 = vadd.f32 %v503, %v504
        %v506 = vrcp.pop 32.0
        %v507 = vmul.f32 32.0, %v506
        %v508 = vsub.f32 1.0, %v507
        %v509 = vmul.f32 %v506, %v508
        %v510 = vadd.f32 %v506, %v509
        %vm511 = vweird.f32 %v506
        %v512 = vsel %vm511, %v506, %v510
        %v513 = vmul.f32 %v496, %v512
        %v514 = vmul.f32 %v505, %v512
        %v515 = vmax.f32 %v480, %v484
        %v516 = vmax.f32 %v482, %v486
        %v517 = vmax.f32 %v515, %v516
        %v518 = vrot.slane %v517, 4
        %v519 = vmax.f32 %v517, %v518
        %v520 = vrot.slane %v519, 2
        %v521 = vmax.f32 %v519, %v520
        %v522 = vrot.slane %v521, 1
        %v523 = vmax.f32 %v521, %v522
        %v524 = vmax.f32 %v481, %v485
        %v525 = vmax.f32 %v483, %v487
        %v526 = vmax.f32 %v524, %v525
        %v527 = vrot.slane %v526, 4
        %v528 = vmax.f32 %v526, %v527
        %v529 = vrot.slane %v528, 2
        %v530 = vmax.f32 %v528, %v529
        %v531 = vrot.slane %v530, 1
        %v532 = vmax.f32 %v530, %v531
        %v535 = vrot.slane %v514, 7
        %vm536 = vcmask 1040384
        %v537 = vsel %vm536, %v513, %v535
        %v539 = vlaneseq
        %vm540 = vcmp.ge.s32.totalorder %v539, 0
        %vm541 = vcmp.lt.s32.totalorder %v539, 256
        %vm542 = vmand %vm540, %vm541
        %s543 = scalar_lea.vmem [#allocation2], 2
        %544 = vst.msk [vmem:[%s543] ss:$2 sm:$0x3] %vm542, %v537
        %v547 = vrot.slane %v532, 7
        %v548 = vsel %vm536, %v523, %v547
        %s550 = scalar_lea.vmem [#allocation2], 3
        %551 = vst.msk [vmem:[%s550] ss:$2 sm:$0x3] %vm542, %v548
        %v552 = vld [vmem:[#allocation2] sm:$0xff]
        %554 = vset.pattern.permute.xlu0 0
        %555 = vperm.xlu0 %554, %v257
        %v556 = vpop.permute.xlu0 %555
        %v558 = vunpack.c.l.s4 269488144
        %v559 = vunpack.c.0.s8 %v558
        %v560 = vperm.slane %v556, %v559
        %v562 = vmul.f32 %v552, %v560
        %v563 = vadd.f32 %v562, 0.0
        %564 = vset.pattern.permute.xlu0 7
        %565 = vperm.xlu0 %564, %v257
        %v566 = vpop.permute.xlu0 %565
        %v568 = vunpack.c.l.s4 269488144
        %v569 = vunpack.c.0.s8 %v568
        %v570 = vperm.slane %v566, %v569
        %v572 = vmul.f32 %v552, %v570
        %574 = vrot.lane.b32.xlu0 %v572, 112
        %v575 = vpop.permute.xlu0 %574
        %v576 = vrot.slane %v575, 2
        %vm577 = vcmask 916480
        %v578 = vsel %vm577, %v575, %v576
        %v580 = vadd.f32 %v563, %v578
        %581 = vset.pattern.permute.xlu0 14
        %582 = vperm.xlu0 %581, %v257
        %v583 = vpop.permute.xlu0 %582
        %v585 = vunpack.c.l.s4 269488144
        %v586 = vunpack.c.0.s8 %v585
        %v587 = vperm.slane %v583, %v586
        %v589 = vmul.f32 %v552, %v587
        %591 = vrot.lane.b32.xlu0 %v589, 96
        %v592 = vpop.permute.xlu0 %591
        %v593 = vrot.slane %v592, 2
        %vm594 = vcmask 785408
        %v595 = vsel %vm594, %v592, %v593
        %v597 = vadd.f32 %v580, %v595
        %598 = vset.pattern.permute.xlu0 21
        %599 = vperm.xlu0 %598, %v257
        %v600 = vpop.permute.xlu0 %599
        %v602 = vunpack.c.l.s4 269488144
        %v603 = vunpack.c.0.s8 %v602
        %v604 = vperm.slane %v600, %v603
        %v606 = vmul.f32 %v552, %v604
        %608 = vrot.lane.b32.xlu0 %v606, 80
        %v609 = vpop.permute.xlu0 %608
        %v610 = vrot.slane %v609, 2
        %vm611 = vcmask 654336
        %v612 = vsel %vm611, %v609, %v610
        %v614 = vadd.f32 %v597, %v612
        %615 = vset.pattern.permute.xlu0 28
        %616 = vperm.xlu0 %615, %v257
        %v617 = vpop.permute.xlu0 %616
        %619 = vrot.lane.b32.xlu0 %v552, 115
        %v620 = vpop.permute.xlu0 %619
        %v621 = vrot.slane %v620, 2
        %v622 = vrot.slane %v620, 4
        %vm623 = vcmask 941056
        %v624 = vsel %vm623, %v621, %v622
        %v627 = vunpack.c.l.s4 269488144
        %v628 = vunpack.c.0.s8 %v627
        %v629 = vperm.slane %v617, %v628
        %v631 = vmul.f32 %v624, %v629
        %633 = vrot.lane.b32.xlu0 %v631, 77
        %v634 = vpop.permute.xlu0 %633
        %v635 = vrot.slane %v634, 6
        %vm636 = vcmask 629760
        %v637 = vsel %vm636, %v635, %v634
        %v639 = vadd.f32 %v614, %v637
        %640 = vset.pattern.permute.xlu0 35
        %641 = vperm.xlu0 %640, %v257
        %v642 = vpop.permute.xlu0 %641
        %643 = vrot.lane.b32.xlu0 %v552, 99
        %v644 = vpop.permute.xlu0 %643
        %v645 = vrot.slane %v644, 2
        %v646 = vrot.slane %v644, 4
        %vm647 = vcmask 809984
        %v648 = vsel %vm647, %v645, %v646
        %v651 = vunpack.c.l.s4 269488144
        %v652 = vunpack.c.0.s8 %v651
        %v653 = vperm.slane %v642, %v652
        %v655 = vmul.f32 %v648, %v653
        %657 = vrot.lane.b32.xlu0 %v655, 77
        %v658 = vpop.permute.xlu0 %657
        %v659 = vrot.slane %v658, 6
        %v660 = vsel %vm636, %v659, %v658
        %v662 = vadd.f32 %v639, %v660
        %663 = vset.pattern.permute.xlu0 42
        %664 = vperm.xlu0 %663, %v257
        %v665 = vpop.permute.xlu0 %664
        %666 = vrot.lane.b32.xlu0 %v552, 83
        %v667 = vpop.permute.xlu0 %666
        %v668 = vrot.slane %v667, 2
        %v669 = vrot.slane %v667, 4
        %vm670 = vcmask 678912
        %v671 = vsel %vm670, %v668, %v669
        %v674 = vunpack.c.l.s4 269488144
        %v675 = vunpack.c.0.s8 %v674
        %v676 = vperm.slane %v665, %v675
        %v678 = vmul.f32 %v671, %v676
        %680 = vrot.lane.b32.xlu0 %v678, 77
        %v681 = vpop.permute.xlu0 %680
        %v682 = vrot.slane %v681, 6
        %v683 = vsel %vm636, %v682, %v681
        %v685 = vadd.f32 %v662, %v683
        %v686 = vadd.s32 %v284, 4294967293
        %v687 = vadd.s32 %v285, 4294967293
        %vm688 = vcmp.ge.s32.totalorder %v686, 0
        %vm689 = vcmp.ge.s32.totalorder %v687, 0
        %vm690 = vcmp.lt.s32.totalorder %v686, 16
        %vm691 = vcmp.lt.s32.totalorder %v687, 16
        %vm692 = vmand %vm688, %vm690
        %vm693 = vmand %vm689, %vm691
        %v694 = vsel %vm692, 1.0, 0.0
        %v695 = vsel %vm693, 1.0, 0.0
        %v698 = vrot.slane %v695, 6
        %vm699 = vcmask 1041408
        %v700 = vsel %vm699, %v694, %v698
        %701 = vrot.lane.b32.xlu0 %v700, 77
        %v702 = vpop.permute.xlu0 %701
        %v703 = vrot.slane %v702, 6
        %v704 = vsel %vm636, %v703, %v702
        %v706 = vmul.f32 %v685, %v704
        %v707 = vadd.f32 %v706, 0.0
        %708 = vset.pattern.permute.xlu0 1
        %709 = vperm.xlu0 %708, %v257
        %v710 = vpop.permute.xlu0 %709
        %v712 = vunpack.c.l.s4 269488144
        %v713 = vunpack.c.0.s8 %v712
        %v714 = vperm.slane %v710, %v713
        %v716 = vmul.f32 %v552, %v714
        %v717 = vadd.f32 %v716, 0.0
        %718 = vset.pattern.permute.xlu0 8
        %719 = vperm.xlu0 %718, %v257
        %v720 = vpop.permute.xlu0 %719
        %v722 = vunpack.c.l.s4 269488144
        %v723 = vunpack.c.0.s8 %v722
        %v724 = vperm.slane %v720, %v723
        %v726 = vmul.f32 %v552, %v724
        %728 = vrot.lane.b32.xlu0 %v726, 112
        %v729 = vpop.permute.xlu0 %728
        %v730 = vrot.slane %v729, 2
        %v731 = vsel %vm577, %v729, %v730
        %v733 = vadd.f32 %v717, %v731
        %734 = vset.pattern.permute.xlu0 15
        %735 = vperm.xlu0 %734, %v257
        %v736 = vpop.permute.xlu0 %735
        %v738 = vunpack.c.l.s4 269488144
        %v739 = vunpack.c.0.s8 %v738
        %v740 = vperm.slane %v736, %v739
        %v742 = vmul.f32 %v552, %v740
        %744 = vrot.lane.b32.xlu0 %v742, 96
        %v745 = vpop.permute.xlu0 %744
        %v746 = vrot.slane %v745, 2
        %v747 = vsel %vm594, %v745, %v746
        %v749 = vadd.f32 %v733, %v747
        %750 = vset.pattern.permute.xlu0 22
        %751 = vperm.xlu0 %750, %v257
        %v752 = vpop.permute.xlu0 %751
        %v754 = vunpack.c.l.s4 269488144
        %v755 = vunpack.c.0.s8 %v754
        %v756 = vperm.slane %v752, %v755
        %v758 = vmul.f32 %v552, %v756
        %760 = vrot.lane.b32.xlu0 %v758, 80
        %v761 = vpop.permute.xlu0 %760
        %v762 = vrot.slane %v761, 2
        %v763 = vsel %vm611, %v761, %v762
        %v765 = vadd.f32 %v749, %v763
        %766 = vset.pattern.permute.xlu0 29
        %767 = vperm.xlu0 %766, %v257
        %v768 = vpop.permute.xlu0 %767
        %769 = vrot.lane.b32.xlu0 %v552, 114
        %v770 = vpop.permute.xlu0 %769
        %v771 = vrot.slane %v770, 2
        %v772 = vrot.slane %v770, 4
        %vm773 = vcmask 932864
        %v774 = vsel %vm773, %v771, %v772
        %v777 = vunpack.c.l.s4 269488144
        %v778 = vunpack.c.0.s8 %v777
        %v779 = vperm.slane %v768, %v778
        %v781 = vmul.f32 %v774, %v779
        %783 = vrot.lane.b32.xlu0 %v781, 78
        %v784 = vpop.permute.xlu0 %783
        %v785 = vrot.slane %v784, 6
        %vm786 = vcmask 637952
        %v787 = vsel %vm786, %v785, %v784
        %v789 = vadd.f32 %v765, %v787
        %790 = vset.pattern.permute.xlu0 36
        %791 = vperm.xlu0 %790, %v257
        %v792 = vpop.permute.xlu0 %791
        %793 = vrot.lane.b32.xlu0 %v552, 98
        %v794 = vpop.permute.xlu0 %793
        %v795 = vrot.slane %v794, 2
        %v796 = vrot.slane %v794, 4
        %vm797 = vcmask 801792
        %v798 = vsel %vm797, %v795, %v796
        %v801 = vunpack.c.l.s4 269488144
        %v802 = vunpack.c.0.s8 %v801
        %v803 = vperm.slane %v792, %v802
        %v805 = vmul.f32 %v798, %v803
        %807 = vrot.lane.b32.xlu0 %v805, 78
        %v808 = vpop.permute.xlu0 %807
        %v809 = vrot.slane %v808, 6
        %v810 = vsel %vm786, %v809, %v808
        %v812 = vadd.f32 %v789, %v810
        %813 = vset.pattern.permute.xlu0 43
        %814 = vperm.xlu0 %813, %v257
        %v815 = vpop.permute.xlu0 %814
        %816 = vrot.lane.b32.xlu0 %v552, 82
        %v817 = vpop.permute.xlu0 %816
        %v818 = vrot.slane %v817, 2
        %v819 = vrot.slane %v817, 4
        %vm820 = vcmask 670720
        %v821 = vsel %vm820, %v818, %v819
        %v824 = vunpack.c.l.s4 269488144
        %v825 = vunpack.c.0.s8 %v824
        %v826 = vperm.slane %v815, %v825
        %v828 = vmul.f32 %v821, %v826
        %830 = vrot.lane.b32.xlu0 %v828, 78
        %v831 = vpop.permute.xlu0 %830
        %v832 = vrot.slane %v831, 6
        %v833 = vsel %vm786, %v832, %v831
        %v835 = vadd.f32 %v812, %v833
        %v836 = vadd.s32 %v284, 4294967294
        %v837 = vadd.s32 %v285, 4294967294
        %vm838 = vcmp.ge.s32.totalorder %v836, 0
        %vm839 = vcmp.ge.s32.totalorder %v837, 0
        %vm840 = vcmp.lt.s32.totalorder %v836, 16
        %vm841 = vcmp.lt.s32.totalorder %v837, 16
        %vm842 = vmand %vm838, %vm840
        %vm843 = vmand %vm839, %vm841
        %v844 = vsel %vm842, 1.0, 0.0
        %v845 = vsel %vm843, 1.0, 0.0
        %v848 = vrot.slane %v845, 6
        %v849 = vsel %vm699, %v844, %v848
        %850 = vrot.lane.b32.xlu0 %v849, 78
        %v851 = vpop.permute.xlu0 %850
        %v852 = vrot.slane %v851, 6
        %v853 = vsel %vm786, %v852, %v851
        %v855 = vmul.f32 %v835, %v853
        %857 = vrot.lane.b32.xlu0 %v855, 127
        %v858 = vpop.permute.xlu0 %857
        %v859 = vrot.slane %v858, 2
        %vm860 = vcmask 1039360
        %v861 = vsel %vm860, %v858, %v859
        %v863 = vadd.f32 %v707, %v861
        %864 = vset.pattern.permute.xlu0 2
        %865 = vperm.xlu0 %864, %v257
        %v866 = vpop.permute.xlu0 %865
        %v868 = vunpack.c.l.s4 269488144
        %v869 = vunpack.c.0.s8 %v868
        %v870 = vperm.slane %v866, %v869
        %v872 = vmul.f32 %v552, %v870
        %v873 = vadd.f32 %v872, 0.0
        %874 = vset.pattern.permute.xlu0 9
        %875 = vperm.xlu0 %874, %v257
        %v876 = vpop.permute.xlu0 %875
        %v878 = vunpack.c.l.s4 269488144
        %v879 = vunpack.c.0.s8 %v878
        %v880 = vperm.slane %v876, %v879
        %v882 = vmul.f32 %v552, %v880
        %884 = vrot.lane.b32.xlu0 %v882, 112
        %v885 = vpop.permute.xlu0 %884
        %v886 = vrot.slane %v885, 2
        %v887 = vsel %vm577, %v885, %v886
        %v889 = vadd.f32 %v873, %v887
        %890 = vset.pattern.permute.xlu0 16
        %891 = vperm.xlu0 %890, %v257
        %v892 = vpop.permute.xlu0 %891
        %v894 = vunpack.c.l.s4 269488144
        %v895 = vunpack.c.0.s8 %v894
        %v896 = vperm.slane %v892, %v895
        %v898 = vmul.f32 %v552, %v896
        %900 = vrot.lane.b32.xlu0 %v898, 96
        %v901 = vpop.permute.xlu0 %900
        %v902 = vrot.slane %v901, 2
        %v903 = vsel %vm594, %v901, %v902
        %v905 = vadd.f32 %v889, %v903
        %906 = vset.pattern.permute.xlu0 23
        %907 = vperm.xlu0 %906, %v257
        %v908 = vpop.permute.xlu0 %907
        %v910 = vunpack.c.l.s4 269488144
        %v911 = vunpack.c.0.s8 %v910
        %v912 = vperm.slane %v908, %v911
        %v914 = vmul.f32 %v552, %v912
        %916 = vrot.lane.b32.xlu0 %v914, 80
        %v917 = vpop.permute.xlu0 %916
        %v918 = vrot.slane %v917, 2
        %v919 = vsel %vm611, %v917, %v918
        %v921 = vadd.f32 %v905, %v919
        %922 = vset.pattern.permute.xlu0 30
        %923 = vperm.xlu0 %922, %v257
        %v924 = vpop.permute.xlu0 %923
        %925 = vrot.lane.b32.xlu0 %v552, 113
        %v926 = vpop.permute.xlu0 %925
        %v927 = vrot.slane %v926, 2
        %v928 = vrot.slane %v926, 4
        %vm929 = vcmask 924672
        %v930 = vsel %vm929, %v927, %v928
        %v933 = vunpack.c.l.s4 269488144
        %v934 = vunpack.c.0.s8 %v933
        %v935 = vperm.slane %v924, %v934
        %v937 = vmul.f32 %v930, %v935
        %939 = vrot.lane.b32.xlu0 %v937, 79
        %v940 = vpop.permute.xlu0 %939
        %v941 = vrot.slane %v940, 6
        %vm942 = vcmask 646144
        %v943 = vsel %vm942, %v941, %v940
        %v945 = vadd.f32 %v921, %v943
        %946 = vset.pattern.permute.xlu0 37
        %947 = vperm.xlu0 %946, %v257
        %v948 = vpop.permute.xlu0 %947
        %949 = vrot.lane.b32.xlu0 %v552, 97
        %v950 = vpop.permute.xlu0 %949
        %v951 = vrot.slane %v950, 2
        %v952 = vrot.slane %v950, 4
        %vm953 = vcmask 793600
        %v954 = vsel %vm953, %v951, %v952
        %v957 = vunpack.c.l.s4 269488144
        %v958 = vunpack.c.0.s8 %v957
        %v959 = vperm.slane %v948, %v958
        %v961 = vmul.f32 %v954, %v959
        %963 = vrot.lane.b32.xlu0 %v961, 79
        %v964 = vpop.permute.xlu0 %963
        %v965 = vrot.slane %v964, 6
        %v966 = vsel %vm942, %v965, %v964
        %v968 = vadd.f32 %v945, %v966
        %969 = vset.pattern.permute.xlu0 44
        %970 = vperm.xlu0 %969, %v257
        %v971 = vpop.permute.xlu0 %970
        %972 = vrot.lane.b32.xlu0 %v552, 81
        %v973 = vpop.permute.xlu0 %972
        %v974 = vrot.slane %v973, 2
        %v975 = vrot.slane %v973, 4
        %vm976 = vcmask 662528
        %v977 = vsel %vm976, %v974, %v975
        %v980 = vunpack.c.l.s4 269488144
        %v981 = vunpack.c.0.s8 %v980
        %v982 = vperm.slane %v971, %v981
        %v984 = vmul.f32 %v977, %v982
        %986 = vrot.lane.b32.xlu0 %v984, 79
        %v987 = vpop.permute.xlu0 %986
        %v988 = vrot.slane %v987, 6
        %v989 = vsel %vm942, %v988, %v987
        %v991 = vadd.f32 %v968, %v989
        %v992 = vadd.s32 %v284, 4294967295
        %v993 = vadd.s32 %v285, 4294967295
        %vm994 = vcmp.ge.s32.totalorder %v992, 0
        %vm995 = vcmp.ge.s32.totalorder %v993, 0
        %vm996 = vcmp.lt.s32.totalorder %v992, 16
        %vm997 = vcmp.lt.s32.totalorder %v993, 16
        %vm998 = vmand %vm994, %vm996
        %vm999 = vmand %vm995, %vm997
        %v1000 = vsel %vm998, 1.0, 0.0
        %v1001 = vsel %vm999, 1.0, 0.0
        %v1004 = vrot.slane %v1001, 6
        %v1005 = vsel %vm699, %v1000, %v1004
        %1006 = vrot.lane.b32.xlu0 %v1005, 79
        %v1007 = vpop.permute.xlu0 %1006
        %v1008 = vrot.slane %v1007, 6
        %v1009 = vsel %vm942, %v1008, %v1007
        %v1011 = vmul.f32 %v991, %v1009
        %1013 = vrot.lane.b32.xlu0 %v1011, 126
        %v1014 = vpop.permute.xlu0 %1013
        %v1015 = vrot.slane %v1014, 2
        %vm1016 = vcmask 1031168
        %v1017 = vsel %vm1016, %v1014, %v1015
        %v1019 = vadd.f32 %v863, %v1017
        %1020 = vset.pattern.permute.xlu0 3
        %1021 = vperm.xlu0 %1020, %v257
        %v1022 = vpop.permute.xlu0 %1021
        %v1024 = vunpack.c.l.s4 269488144
        %v1025 = vunpack.c.0.s8 %v1024
        %v1026 = vperm.slane %v1022, %v1025
        %v1028 = vmul.f32 %v552, %v1026
        %v1029 = vadd.f32 %v1028, 0.0
        %1030 = vset.pattern.permute.xlu0 10
        %1031 = vperm.xlu0 %1030, %v257
        %v1032 = vpop.permute.xlu0 %1031
        %v1034 = vunpack.c.l.s4 269488144
        %v1035 = vunpack.c.0.s8 %v1034
        %v1036 = vperm.slane %v1032, %v1035
        %v1038 = vmul.f32 %v552, %v1036
        %1040 = vrot.lane.b32.xlu0 %v1038, 112
        %v1041 = vpop.permute.xlu0 %1040
        %v1042 = vrot.slane %v1041, 2
        %v1043 = vsel %vm577, %v1041, %v1042
        %v1045 = vadd.f32 %v1029, %v1043
        %1046 = vset.pattern.permute.xlu0 17
        %1047 = vperm.xlu0 %1046, %v257
        %v1048 = vpop.permute.xlu0 %1047
        %v1050 = vunpack.c.l.s4 269488144
        %v1051 = vunpack.c.0.s8 %v1050
        %v1052 = vperm.slane %v1048, %v1051
        %v1054 = vmul.f32 %v552, %v1052
        %1056 = vrot.lane.b32.xlu0 %v1054, 96
        %v1057 = vpop.permute.xlu0 %1056
        %v1058 = vrot.slane %v1057, 2
        %v1059 = vsel %vm594, %v1057, %v1058
        %v1061 = vadd.f32 %v1045, %v1059
        %1062 = vset.pattern.permute.xlu0 24
        %1063 = vperm.xlu0 %1062, %v257
        %v1064 = vpop.permute.xlu0 %1063
        %v1065 = vrot.slane %v552, 2
        %v1068 = vunpack.c.l.s4 269488144
        %v1069 = vunpack.c.0.s8 %v1068
        %v1070 = vperm.slane %v1064, %v1069
        %v1072 = vmul.f32 %v1065, %v1070
        %1074 = vrot.lane.b32.xlu0 %v1072, 80
        %v1075 = vpop.permute.xlu0 %1074
        %v1076 = vrot.slane %v1075, 6
        %v1077 = vsel %vm611, %v1076, %v1075
        %v1079 = vadd.f32 %v1061, %v1077
        %1080 = vset.pattern.permute.xlu0 31
        %1081 = vperm.xlu0 %1080, %v257
        %v1082 = vpop.permute.xlu0 %1081
        %1083 = vrot.lane.b32.xlu0 %v552, 112
        %v1084 = vpop.permute.xlu0 %1083
        %v1085 = vrot.slane %v1084, 2
        %v1086 = vrot.slane %v1084, 4
        %v1087 = vsel %vm577, %v1085, %v1086
        %v1090 = vunpack.c.l.s4 269488144
        %v1091 = vunpack.c.0.s8 %v1090
        %v1092 = vperm.slane %v1082, %v1091
        %v1094 = vmul.f32 %v1087, %v1092
        %1096 = vrot.lane.b32.xlu0 %v1094, 80
        %v1097 = vpop.permute.xlu0 %1096
        %v1098 = vrot.slane %v1097, 6
        %v1099 = vsel %vm611, %v1098, %v1097
        %v1101 = vadd.f32 %v1079, %v1099
        %1102 = vset.pattern.permute.xlu0 38
        %1103 = vperm.xlu0 %1102, %v257
        %v1104 = vpop.permute.xlu0 %1103
        %1105 = vrot.lane.b32.xlu0 %v552, 96
        %v1106 = vpop.permute.xlu0 %1105
        %v1107 = vrot.slane %v1106, 2
        %v1108 = vrot.slane %v1106, 4
        %v1109 = vsel %vm594, %v1107, %v1108
        %v1112 = vunpack.c.l.s4 269488144
        %v1113 = vunpack.c.0.s8 %v1112
        %v1114 = vperm.slane %v1104, %v1113
        %v1116 = vmul.f32 %v1109, %v1114
        %1118 = vrot.lane.b32.xlu0 %v1116, 80
        %v1119 = vpop.permute.xlu0 %1118
        %v1120 = vrot.slane %v1119, 6
        %v1121 = vsel %vm611, %v1120, %v1119
        %v1123 = vadd.f32 %v1101, %v1121
        %1124 = vset.pattern.permute.xlu0 45
        %1125 = vperm.xlu0 %1124, %v257
        %v1126 = vpop.permute.xlu0 %1125
        %1127 = vrot.lane.b32.xlu0 %v552, 80
        %v1128 = vpop.permute.xlu0 %1127
        %v1129 = vrot.slane %v1128, 2
        %v1130 = vrot.slane %v1128, 4
        %v1131 = vsel %vm611, %v1129, %v1130
        %v1134 = vunpack.c.l.s4 269488144
        %v1135 = vunpack.c.0.s8 %v1134
        %v1136 = vperm.slane %v1126, %v1135
        %v1138 = vmul.f32 %v1131, %v1136
        %1140 = vrot.lane.b32.xlu0 %v1138, 80
        %v1141 = vpop.permute.xlu0 %1140
        %v1142 = vrot.slane %v1141, 6
        %v1143 = vsel %vm611, %v1142, %v1141
        %v1145 = vadd.f32 %v1123, %v1143
        %vm1146 = vcmp.ge.s32.totalorder %v284, 0
        %vm1147 = vcmp.ge.s32.totalorder %v285, 0
        %vm1148 = vcmp.lt.s32.totalorder %v284, 16
        %vm1149 = vcmp.lt.s32.totalorder %v285, 16
        %vm1150 = vmand %vm1146, %vm1148
        %vm1151 = vmand %vm1147, %vm1149
        %v1152 = vsel %vm1150, 1.0, 0.0
        %v1153 = vsel %vm1151, 1.0, 0.0
        %v1156 = vrot.slane %v1153, 6
        %v1157 = vsel %vm699, %v1152, %v1156
        %1158 = vrot.lane.b32.xlu0 %v1157, 80
        %v1159 = vpop.permute.xlu0 %1158
        %v1160 = vrot.slane %v1159, 6
        %v1161 = vsel %vm611, %v1160, %v1159
        %v1163 = vmul.f32 %v1145, %v1161
        %1165 = vrot.lane.b32.xlu0 %v1163, 125
        %v1166 = vpop.permute.xlu0 %1165
        %v1167 = vrot.slane %v1166, 2
        %vm1168 = vcmask 1022976
        %v1169 = vsel %vm1168, %v1166, %v1167
        %v1171 = vadd.f32 %v1019, %v1169
        %1172 = vset.pattern.permute.xlu0 4
        %1173 = vperm.xlu0 %1172, %v257
        %v1174 = vpop.permute.xlu0 %1173
        %v1176 = vunpack.c.l.s4 269488144
        %v1177 = vunpack.c.0.s8 %v1176
        %v1178 = vperm.slane %v1174, %v1177
        %v1180 = vmul.f32 %v552, %v1178
        %v1181 = vadd.f32 %v1180, 0.0
        %1182 = vset.pattern.permute.xlu0 11
        %1183 = vperm.xlu0 %1182, %v257
        %v1184 = vpop.permute.xlu0 %1183
        %v1186 = vunpack.c.l.s4 269488144
        %v1187 = vunpack.c.0.s8 %v1186
        %v1188 = vperm.slane %v1184, %v1187
        %v1190 = vmul.f32 %v552, %v1188
        %1192 = vrot.lane.b32.xlu0 %v1190, 112
        %v1193 = vpop.permute.xlu0 %1192
        %v1194 = vrot.slane %v1193, 2
        %v1195 = vsel %vm577, %v1193, %v1194
        %v1197 = vadd.f32 %v1181, %v1195
        %1198 = vset.pattern.permute.xlu0 18
        %1199 = vperm.xlu0 %1198, %v257
        %v1200 = vpop.permute.xlu0 %1199
        %v1202 = vunpack.c.l.s4 269488144
        %v1203 = vunpack.c.0.s8 %v1202
        %v1204 = vperm.slane %v1200, %v1203
        %v1206 = vmul.f32 %v552, %v1204
        %1208 = vrot.lane.b32.xlu0 %v1206, 96
        %v1209 = vpop.permute.xlu0 %1208
        %v1210 = vrot.slane %v1209, 2
        %v1211 = vsel %vm594, %v1209, %v1210
        %v1213 = vadd.f32 %v1197, %v1211
        %1214 = vset.pattern.permute.xlu0 25
        %1215 = vperm.xlu0 %1214, %v257
        %v1216 = vpop.permute.xlu0 %1215
        %1217 = vrot.lane.b32.xlu0 %v552, 127
        %v1218 = vpop.permute.xlu0 %1217
        %v1219 = vrot.slane %v1218, 2
        %v1220 = vrot.slane %v1218, 4
        %v1221 = vsel %vm860, %v1219, %v1220
        %v1224 = vunpack.c.l.s4 269488144
        %v1225 = vunpack.c.0.s8 %v1224
        %v1226 = vperm.slane %v1216, %v1225
        %v1228 = vmul.f32 %v1221, %v1226
        %1230 = vrot.lane.b32.xlu0 %v1228, 81
        %v1231 = vpop.permute.xlu0 %1230
        %v1232 = vrot.slane %v1231, 6
        %v1233 = vsel %vm976, %v1232, %v1231
        %v1235 = vadd.f32 %v1213, %v1233
        %1236 = vset.pattern.permute.xlu0 32
        %1237 = vperm.xlu0 %1236, %v257
        %v1238 = vpop.permute.xlu0 %1237
        %1239 = vrot.lane.b32.xlu0 %v552, 111
        %v1240 = vpop.permute.xlu0 %1239
        %v1241 = vrot.slane %v1240, 2
        %v1242 = vrot.slane %v1240, 4
        %vm1243 = vcmask 908288
        %v1244 = vsel %vm1243, %v1241, %v1242
        %v1247 = vunpack.c.l.s4 269488144
        %v1248 = vunpack.c.0.s8 %v1247
        %v1249 = vperm.slane %v1238, %v1248
        %v1251 = vmul.f32 %v1244, %v1249
        %1253 = vrot.lane.b32.xlu0 %v1251, 81
        %v1254 = vpop.permute.xlu0 %1253
        %v1255 = vrot.slane %v1254, 6
        %v1256 = vsel %vm976, %v1255, %v1254
        %v1258 = vadd.f32 %v1235, %v1256
        %1259 = vset.pattern.permute.xlu0 39
        %1260 = vperm.xlu0 %1259, %v257
        %v1261 = vpop.permute.xlu0 %1260
        %1262 = vrot.lane.b32.xlu0 %v552, 95
        %v1263 = vpop.permute.xlu0 %1262
        %v1264 = vrot.slane %v1263, 2
        %v1265 = vrot.slane %v1263, 4
        %vm1266 = vcmask 777216
        %v1267 = vsel %vm1266, %v1264, %v1265
        %v1270 = vunpack.c.l.s4 269488144
        %v1271 = vunpack.c.0.s8 %v1270
        %v1272 = vperm.slane %v1261, %v1271
        %v1274 = vmul.f32 %v1267, %v1272
        %1276 = vrot.lane.b32.xlu0 %v1274, 81
        %v1277 = vpop.permute.xlu0 %1276
        %v1278 = vrot.slane %v1277, 6
        %v1279 = vsel %vm976, %v1278, %v1277
        %v1281 = vadd.f32 %v1258, %v1279
        %1282 = vset.pattern.permute.xlu0 46
        %1283 = vperm.xlu0 %1282, %v257
        %v1284 = vpop.permute.xlu0 %1283
        %1285 = vrot.lane.b32.xlu0 %v552, 79
        %v1286 = vpop.permute.xlu0 %1285
        %v1287 = vrot.slane %v1286, 2
        %v1288 = vrot.slane %v1286, 4
        %v1289 = vsel %vm942, %v1287, %v1288
        %v1292 = vunpack.c.l.s4 269488144
        %v1293 = vunpack.c.0.s8 %v1292
        %v1294 = vperm.slane %v1284, %v1293
        %v1296 = vmul.f32 %v1289, %v1294
        %1298 = vrot.lane.b32.xlu0 %v1296, 81
        %v1299 = vpop.permute.xlu0 %1298
        %v1300 = vrot.slane %v1299, 6
        %v1301 = vsel %vm976, %v1300, %v1299
        %v1303 = vadd.f32 %v1281, %v1301
        %v1304 = vadd.s32 %v284, 1
        %v1305 = vadd.s32 %v285, 1
        %vm1306 = vcmp.ge.s32.totalorder %v1304, 0
        %vm1307 = vcmp.ge.s32.totalorder %v1305, 0
        %vm1308 = vcmp.lt.s32.totalorder %v1304, 16
        %vm1309 = vcmp.lt.s32.totalorder %v1305, 16
        %vm1310 = vmand %vm1306, %vm1308
        %vm1311 = vmand %vm1307, %vm1309
        %v1312 = vsel %vm1310, 1.0, 0.0
        %v1313 = vsel %vm1311, 1.0, 0.0
        %v1316 = vrot.slane %v1313, 6
        %v1317 = vsel %vm699, %v1312, %v1316
        %1318 = vrot.lane.b32.xlu0 %v1317, 81
        %v1319 = vpop.permute.xlu0 %1318
        %v1320 = vrot.slane %v1319, 6
        %v1321 = vsel %vm976, %v1320, %v1319
        %v1323 = vmul.f32 %v1303, %v1321
        %1325 = vrot.lane.b32.xlu0 %v1323, 124
        %v1326 = vpop.permute.xlu0 %1325
        %v1327 = vrot.slane %v1326, 2
        %vm1328 = vcmask 1014784
        %v1329 = vsel %vm1328, %v1326, %v1327
        %v1331 = vadd.f32 %v1171, %v1329
        %1332 = vset.pattern.permute.xlu0 5
        %1333 = vperm.xlu0 %1332, %v257
        %v1334 = vpop.permute.xlu0 %1333
        %v1336 = vunpack.c.l.s4 269488144
        %v1337 = vunpack.c.0.s8 %v1336
        %v1338 = vperm.slane %v1334, %v1337
        %v1340 = vmul.f32 %v552, %v1338
        %v1341 = vadd.f32 %v1340, 0.0
        %1342 = vset.pattern.permute.xlu0 12
        %1343 = vperm.xlu0 %1342, %v257
        %v1344 = vpop.permute.xlu0 %1343
        %v1346 = vunpack.c.l.s4 269488144
        %v1347 = vunpack.c.0.s8 %v1346
        %v1348 = vperm.slane %v1344, %v1347
        %v1350 = vmul.f32 %v552, %v1348
        %1352 = vrot.lane.b32.xlu0 %v1350, 112
        %v1353 = vpop.permute.xlu0 %1352
        %v1354 = vrot.slane %v1353, 2
        %v1355 = vsel %vm577, %v1353, %v1354
        %v1357 = vadd.f32 %v1341, %v1355
        %1358 = vset.pattern.permute.xlu0 19
        %1359 = vperm.xlu0 %1358, %v257
        %v1360 = vpop.permute.xlu0 %1359
        %v1362 = vunpack.c.l.s4 269488144
        %v1363 = vunpack.c.0.s8 %v1362
        %v1364 = vperm.slane %v1360, %v1363
        %v1366 = vmul.f32 %v552, %v1364
        %1368 = vrot.lane.b32.xlu0 %v1366, 96
        %v1369 = vpop.permute.xlu0 %1368
        %v1370 = vrot.slane %v1369, 2
        %v1371 = vsel %vm594, %v1369, %v1370
        %v1373 = vadd.f32 %v1357, %v1371
        %1374 = vset.pattern.permute.xlu0 26
        %1375 = vperm.xlu0 %1374, %v257
        %v1376 = vpop.permute.xlu0 %1375
        %1377 = vrot.lane.b32.xlu0 %v552, 126
        %v1378 = vpop.permute.xlu0 %1377
        %v1379 = vrot.slane %v1378, 2
        %v1380 = vrot.slane %v1378, 4
        %v1381 = vsel %vm1016, %v1379, %v1380
        %v1384 = vunpack.c.l.s4 269488144
        %v1385 = vunpack.c.0.s8 %v1384
        %v1386 = vperm.slane %v1376, %v1385
        %v1388 = vmul.f32 %v1381, %v1386
        %1390 = vrot.lane.b32.xlu0 %v1388, 82
        %v1391 = vpop.permute.xlu0 %1390
        %v1392 = vrot.slane %v1391, 6
        %v1393 = vsel %vm820, %v1392, %v1391
        %v1395 = vadd.f32 %v1373, %v1393
        %1396 = vset.pattern.permute.xlu0 33
        %1397 = vperm.xlu0 %1396, %v257
        %v1398 = vpop.permute.xlu0 %1397
        %1399 = vrot.lane.b32.xlu0 %v552, 110
        %v1400 = vpop.permute.xlu0 %1399
        %v1401 = vrot.slane %v1400, 2
        %v1402 = vrot.slane %v1400, 4
        %vm1403 = vcmask 900096
        %v1404 = vsel %vm1403, %v1401, %v1402
        %v1407 = vunpack.c.l.s4 269488144
        %v1408 = vunpack.c.0.s8 %v1407
        %v1409 = vperm.slane %v1398, %v1408
        %v1411 = vmul.f32 %v1404, %v1409
        %1413 = vrot.lane.b32.xlu0 %v1411, 82
        %v1414 = vpop.permute.xlu0 %1413
        %v1415 = vrot.slane %v1414, 6
        %v1416 = vsel %vm820, %v1415, %v1414
        %v1418 = vadd.f32 %v1395, %v1416
        %1419 = vset.pattern.permute.xlu0 40
        %1420 = vperm.xlu0 %1419, %v257
        %v1421 = vpop.permute.xlu0 %1420
        %1422 = vrot.lane.b32.xlu0 %v552, 94
        %v1423 = vpop.permute.xlu0 %1422
        %v1424 = vrot.slane %v1423, 2
        %v1425 = vrot.slane %v1423, 4
        %vm1426 = vcmask 769024
        %v1427 = vsel %vm1426, %v1424, %v1425
        %v1430 = vunpack.c.l.s4 269488144
        %v1431 = vunpack.c.0.s8 %v1430
        %v1432 = vperm.slane %v1421, %v1431
        %v1434 = vmul.f32 %v1427, %v1432
        %1436 = vrot.lane.b32.xlu0 %v1434, 82
        %v1437 = vpop.permute.xlu0 %1436
        %v1438 = vrot.slane %v1437, 6
        %v1439 = vsel %vm820, %v1438, %v1437
        %v1441 = vadd.f32 %v1418, %v1439
        %1442 = vset.pattern.permute.xlu0 47
        %1443 = vperm.xlu0 %1442, %v257
        %v1444 = vpop.permute.xlu0 %1443
        %1445 = vrot.lane.b32.xlu0 %v552, 78
        %v1446 = vpop.permute.xlu0 %1445
        %v1447 = vrot.slane %v1446, 2
        %v1448 = vrot.slane %v1446, 4
        %v1449 = vsel %vm786, %v1447, %v1448
        %v1452 = vunpack.c.l.s4 269488144
        %v1453 = vunpack.c.0.s8 %v1452
        %v1454 = vperm.slane %v1444, %v1453
        %v1456 = vmul.f32 %v1449, %v1454
        %1458 = vrot.lane.b32.xlu0 %v1456, 82
        %v1459 = vpop.permute.xlu0 %1458
        %v1460 = vrot.slane %v1459, 6
        %v1461 = vsel %vm820, %v1460, %v1459
        %v1463 = vadd.f32 %v1441, %v1461
        %v1464 = vadd.s32 %v284, 2
        %v1465 = vadd.s32 %v285, 2
        %vm1466 = vcmp.ge.s32.totalorder %v1464, 0
        %vm1467 = vcmp.ge.s32.totalorder %v1465, 0
        %vm1468 = vcmp.lt.s32.totalorder %v1464, 16
        %vm1469 = vcmp.lt.s32.totalorder %v1465, 16
        %vm1470 = vmand %vm1466, %vm1468
        %vm1471 = vmand %vm1467, %vm1469
        %v1472 = vsel %vm1470, 1.0, 0.0
        %v1473 = vsel %vm1471, 1.0, 0.0
        %v1476 = vrot.slane %v1473, 6
        %v1477 = vsel %vm699, %v1472, %v1476
        %1478 = vrot.lane.b32.xlu0 %v1477, 82
        %v1479 = vpop.permute.xlu0 %1478
        %v1480 = vrot.slane %v1479, 6
        %v1481 = vsel %vm820, %v1480, %v1479
        %v1483 = vmul.f32 %v1463, %v1481
        %1485 = vrot.lane.b32.xlu0 %v1483, 123
        %v1486 = vpop.permute.xlu0 %1485
        %v1487 = vrot.slane %v1486, 2
        %vm1488 = vcmask 1006592
        %v1489 = vsel %vm1488, %v1486, %v1487
        %v1491 = vadd.f32 %v1331, %v1489
        %1492 = vset.pattern.permute.xlu0 6
        %1493 = vperm.xlu0 %1492, %v257
        %v1494 = vpop.permute.xlu0 %1493
        %v1496 = vunpack.c.l.s4 269488144
        %v1497 = vunpack.c.0.s8 %v1496
        %v1498 = vperm.slane %v1494, %v1497
        %v1500 = vmul.f32 %v552, %v1498
        %v1501 = vadd.f32 %v1500, 0.0
        %1502 = vset.pattern.permute.xlu0 13
        %1503 = vperm.xlu0 %1502, %v257
        %v1504 = vpop.permute.xlu0 %1503
        %v1506 = vunpack.c.l.s4 269488144
        %v1507 = vunpack.c.0.s8 %v1506
        %v1508 = vperm.slane %v1504, %v1507
        %v1510 = vmul.f32 %v552, %v1508
        %1512 = vrot.lane.b32.xlu0 %v1510, 112
        %v1513 = vpop.permute.xlu0 %1512
        %v1514 = vrot.slane %v1513, 2
        %v1515 = vsel %vm577, %v1513, %v1514
        %v1517 = vadd.f32 %v1501, %v1515
        %1518 = vset.pattern.permute.xlu0 20
        %1519 = vperm.xlu0 %1518, %v257
        %v1520 = vpop.permute.xlu0 %1519
        %v1522 = vunpack.c.l.s4 269488144
        %v1523 = vunpack.c.0.s8 %v1522
        %v1524 = vperm.slane %v1520, %v1523
        %v1526 = vmul.f32 %v552, %v1524
        %1528 = vrot.lane.b32.xlu0 %v1526, 96
        %v1529 = vpop.permute.xlu0 %1528
        %v1530 = vrot.slane %v1529, 2
        %v1531 = vsel %vm594, %v1529, %v1530
        %v1533 = vadd.f32 %v1517, %v1531
        %1534 = vset.pattern.permute.xlu0 27
        %1535 = vperm.xlu0 %1534, %v257
        %v1536 = vpop.permute.xlu0 %1535
        %1537 = vrot.lane.b32.xlu0 %v552, 125
        %v1538 = vpop.permute.xlu0 %1537
        %v1539 = vrot.slane %v1538, 2
        %v1540 = vrot.slane %v1538, 4
        %v1541 = vsel %vm1168, %v1539, %v1540
        %v1544 = vunpack.c.l.s4 269488144
        %v1545 = vunpack.c.0.s8 %v1544
        %v1546 = vperm.slane %v1536, %v1545
        %v1548 = vmul.f32 %v1541, %v1546
        %1550 = vrot.lane.b32.xlu0 %v1548, 83
        %v1551 = vpop.permute.xlu0 %1550
        %v1552 = vrot.slane %v1551, 6
        %v1553 = vsel %vm670, %v1552, %v1551
        %v1555 = vadd.f32 %v1533, %v1553
        %1556 = vset.pattern.permute.xlu0 34
        %1557 = vperm.xlu0 %1556, %v257
        %v1558 = vpop.permute.xlu0 %1557
        %1559 = vrot.lane.b32.xlu0 %v552, 109
        %v1560 = vpop.permute.xlu0 %1559
        %v1561 = vrot.slane %v1560, 2
        %v1562 = vrot.slane %v1560, 4
        %vm1563 = vcmask 891904
        %v1564 = vsel %vm1563, %v1561, %v1562
        %v1567 = vunpack.c.l.s4 269488144
        %v1568 = vunpack.c.0.s8 %v1567
        %v1569 = vperm.slane %v1558, %v1568
        %v1571 = vmul.f32 %v1564, %v1569
        %1573 = vrot.lane.b32.xlu0 %v1571, 83
        %v1574 = vpop.permute.xlu0 %1573
        %v1575 = vrot.slane %v1574, 6
        %v1576 = vsel %vm670, %v1575, %v1574
        %v1578 = vadd.f32 %v1555, %v1576
        %1579 = vset.pattern.permute.xlu0 41
        %1580 = vperm.xlu0 %1579, %v257
        %v1581 = vpop.permute.xlu0 %1580
        %1582 = vrot.lane.b32.xlu0 %v552, 93
        %v1583 = vpop.permute.xlu0 %1582
        %v1584 = vrot.slane %v1583, 2
        %v1585 = vrot.slane %v1583, 4
        %vm1586 = vcmask 760832
        %v1587 = vsel %vm1586, %v1584, %v1585
        %v1590 = vunpack.c.l.s4 269488144
        %v1591 = vunpack.c.0.s8 %v1590
        %v1592 = vperm.slane %v1581, %v1591
        %v1594 = vmul.f32 %v1587, %v1592
        %1596 = vrot.lane.b32.xlu0 %v1594, 83
        %v1597 = vpop.permute.xlu0 %1596
        %v1598 = vrot.slane %v1597, 6
        %v1599 = vsel %vm670, %v1598, %v1597
        %v1601 = vadd.f32 %v1578, %v1599
        %1602 = vset.pattern.permute.xlu0 48
        %1603 = vperm.xlu0 %1602, %v257
        %v1604 = vpop.permute.xlu0 %1603
        %1605 = vrot.lane.b32.xlu0 %v552, 77
        %v1606 = vpop.permute.xlu0 %1605
        %v1607 = vrot.slane %v1606, 2
        %v1608 = vrot.slane %v1606, 4
        %v1609 = vsel %vm636, %v1607, %v1608
        %v1612 = vunpack.c.l.s4 269488144
        %v1613 = vunpack.c.0.s8 %v1612
        %v1614 = vperm.slane %v1604, %v1613
        %v1616 = vmul.f32 %v1609, %v1614
        %1618 = vrot.lane.b32.xlu0 %v1616, 83
        %v1619 = vpop.permute.xlu0 %1618
        %v1620 = vrot.slane %v1619, 6
        %v1621 = vsel %vm670, %v1620, %v1619
        %v1623 = vadd.f32 %v1601, %v1621
        %v1624 = vadd.s32 %v284, 3
        %v1625 = vadd.s32 %v285, 3
        %vm1626 = vcmp.ge.s32.totalorder %v1624, 0
        %vm1627 = vcmp.ge.s32.totalorder %v1625, 0
        %vm1628 = vcmp.lt.s32.totalorder %v1624, 16
        %vm1629 = vcmp.lt.s32.totalorder %v1625, 16
        %vm1630 = vmand %vm1626, %vm1628
        %vm1631 = vmand %vm1627, %vm1629
        %v1632 = vsel %vm1630, 1.0, 0.0
        %v1633 = vsel %vm1631, 1.0, 0.0
        %v1636 = vrot.slane %v1633, 6
        %v1637 = vsel %vm699, %v1632, %v1636
        %1638 = vrot.lane.b32.xlu0 %v1637, 83
        %v1639 = vpop.permute.xlu0 %1638
        %v1640 = vrot.slane %v1639, 6
        %v1641 = vsel %vm670, %v1640, %v1639
        %v1643 = vmul.f32 %v1623, %v1641
        %1645 = vrot.lane.b32.xlu0 %v1643, 122
        %v1646 = vpop.permute.xlu0 %1645
        %v1647 = vrot.slane %v1646, 2
        %vm1648 = vcmask 998400
        %v1649 = vsel %vm1648, %v1646, %v1647
        %v1651 = vadd.f32 %v1491, %v1649
        %1653 = vst [vmem:[#allocation1] ss:$4 sm:$0xff] %v1651
        %v1654 = vld.sshfl [vmem:[#allocation1] sm:$0xff pattern:$0x73625140]
        %v1655 = vld.sshfl [vmem:[#allocation1 + $0x8] sm:$0xff pattern:$0x73625140]
        %v1656 = vld.sshfl [vmem:[#allocation1 + $0x10] sm:$0xff pattern:$0x73625140]
        %vm1660 = vcmask 1042024
        %v1661 = vsel %vm1660, %v1654, 0.0
        %v1662 = vrot.slane %v1661, 4
        %v1663 = vadd.f32 %v1661, %v1662
        %v1664 = vrot.slane %v1663, 2
        %v1665 = vadd.f32 %v1663, %v1664
        %v1666 = vrot.slane %v1665, 1
        %v1667 = vadd.f32 %v1665, %v1666
        %v1668 = vsel %vm699, %v1655, 0.0
        %v1669 = vrot.slane %v1668, 4
        %v1670 = vadd.f32 %v1668, %v1669
        %v1671 = vrot.slane %v1670, 2
        %v1672 = vadd.f32 %v1670, %v1671
        %v1673 = vrot.slane %v1672, 1
        %v1674 = vadd.f32 %v1672, %v1673
        %vm1675 = vcmask 623616
        %v1676 = vsel %vm1675, %v1656, 0.0
        %v1677 = vrot.slane %v1676, 4
        %v1678 = vadd.f32 %v1676, %v1677
        %v1679 = vrot.slane %v1678, 2
        %v1680 = vadd.f32 %v1678, %v1679
        %v1681 = vrot.slane %v1680, 1
        %v1682 = vadd.f32 %v1680, %v1681
        %v1683 = vstv %s258
        %v1684 = vadd.f32 %v1667, %v1683
        %v1685 = vadd.f32 %v1674, %v1683
        %v1686 = vadd.f32 %v1682, %v1683
        %v1687 = vxor.u32 %v1684, 2147483648
        %v1688 = vxor.u32 %v1685, 2147483648
        %v1689 = vxor.u32 %v1686, 2147483648
        %v1690 = vmul.f32 %v1687, 1.442695
        %v1691 = vpow.pop %v1690
        %v1692 = vmul.f32 %v1688, 1.442695
        %v1693 = vpow.pop %v1692
        %v1694 = vmul.f32 %v1689, 1.442695
        %v1695 = vpow.pop %v1694
        %v1696 = vadd.f32 %v1691, 1.0
        %v1697 = vadd.f32 %v1693, 1.0
        %v1698 = vadd.f32 %v1695, 1.0
        %v1699 = vrcp.pop %v1696
        %v1700 = vmul.f32 %v1696, %v1699
        %v1701 = vsub.f32 1.0, %v1700
        %v1702 = vmul.f32 %v1699, %v1701
        %v1703 = vadd.f32 %v1699, %v1702
        %vm1704 = vweird.f32 %v1696
        %vm1705 = vweird.f32 %v1699
        %vm1706 = vmor %vm1704, %vm1705
        %v1707 = vsel %vm1706, %v1699, %v1703
        %v1708 = vand.u32 2147483647, %v1696
        %vm1709 = vcmp.eq.f32.partialorder %v1708, 8.507059e+37
        %v1710 = vand.u32 %v1696, 2147483648
        %v1711 = vor.u32 1.1754944e-38, %v1710
        %v1712 = vsel %vm1709, %v1711, %v1707
        %v1713 = vmul.f32 1.0, %v1712
        %v1714 = vrcp.pop %v1697
        %v1715 = vmul.f32 %v1697, %v1714
        %v1716 = vsub.f32 1.0, %v1715
        %v1717 = vmul.f32 %v1714, %v1716
        %v1718 = vadd.f32 %v1714, %v1717
        %vm1719 = vweird.f32 %v1697
        %vm1720 = vweird.f32 %v1714
        %vm1721 = vmor %vm1719, %vm1720
        %v1722 = vsel %vm1721, %v1714, %v1718
        %v1723 = vand.u32 2147483647, %v1697
        %vm1724 = vcmp.eq.f32.partialorder %v1723, 8.507059e+37
        %v1725 = vand.u32 %v1697, 2147483648
        %v1726 = vor.u32 1.1754944e-38, %v1725
        %v1727 = vsel %vm1724, %v1726, %v1722
        %v1728 = vmul.f32 1.0, %v1727
        %v1729 = vrcp.pop %v1698
        %v1730 = vmul.f32 %v1698, %v1729
        %v1731 = vsub.f32 1.0, %v1730
        %v1732 = vmul.f32 %v1729, %v1731
        %v1733 = vadd.f32 %v1729, %v1732
        %vm1734 = vweird.f32 %v1698
        %vm1735 = vweird.f32 %v1729
        %vm1736 = vmor %vm1734, %vm1735
        %v1737 = vsel %vm1736, %v1729, %v1733
        %v1738 = vand.u32 2147483647, %v1698
        %vm1739 = vcmp.eq.f32.partialorder %v1738, 8.507059e+37
        %v1740 = vand.u32 %v1698, 2147483648
        %v1741 = vor.u32 1.1754944e-38, %v1740
        %v1742 = vsel %vm1739, %v1741, %v1737
        %v1743 = vmul.f32 1.0, %v1742
        %v1744 = vld [vmem:[%s219] sm:$0xff]
        %v1745 = vld [vmem:[%s219 + $0x8] sm:$0xff]
        %v1746 = vld [vmem:[%s219 + $0x10] sm:$0xff]
        %v1747 = vld [vmem:[%s219 + $0x18] sm:$0xff]
        %v1748 = vld [vmem:[%s219 + $0x20] sm:$0xff]
        %v1749 = vld [vmem:[%s219 + $0x28] sm:$0xff]
        %v1750 = vld [vmem:[%s219 + $0x30] sm:$0xff]
        %v1751 = vld [vmem:[%s219 + $0x38] sm:$0xff]
        %1755 = vrot.lane.b32.xlu0 %v1713, 51
        %v1756 = vpop.permute.xlu0 %1755
        %1757 = vrot.lane.b32.xlu0 %v1728, 51
        %v1758 = vpop.permute.xlu0 %1757
        %1759 = vrot.lane.b32.xlu0 %v1743, 51
        %v1760 = vpop.permute.xlu0 %1759
        %vm1761 = vcmask 416768
        %v1762 = vsel %vm1761, %v1756, %v1758
        %v1763 = vsel %vm1761, %v1758, %v1760
        %v1766 = vmul.f32 %v1744, %v1762
        %v1767 = vmul.f32 %v1745, %v1763
        %v1768 = vmul.f32 %v1746, %v1762
        %v1769 = vmul.f32 %v1747, %v1763
        %v1770 = vmul.f32 %v1748, %v1762
        %v1771 = vmul.f32 %v1749, %v1763
        %v1772 = vmul.f32 %v1750, %v1762
        %v1773 = vmul.f32 %v1751, %v1763
        %v1774 = vmul.f32 %v1766, %v434
        %v1775 = vmul.f32 %v1767, %v434
        %v1776 = vmul.f32 %v1768, %v449
        %v1777 = vmul.f32 %v1769, %v449
        %v1778 = vmul.f32 %v1770, %v464
        %v1779 = vmul.f32 %v1771, %v464
        %v1780 = vmul.f32 %v1772, %v479
        %v1781 = vmul.f32 %v1773, %v479
        %1782 = vst [vmem:[%s246] sm:$0xff] %v1774
        %1783 = vst [vmem:[%s246 + $0x8] sm:$0xff] %v1775
        %1784 = vst [vmem:[%s246 + $0x10] sm:$0xff] %v1776
        %1785 = vst [vmem:[%s246 + $0x18] sm:$0xff] %v1777
        %1786 = vst [vmem:[%s246 + $0x20] sm:$0xff] %v1778
        %1787 = vst [vmem:[%s246 + $0x28] sm:$0xff] %v1779
        %1788 = vst [vmem:[%s246 + $0x30] sm:$0xff] %v1780
        %1789 = vst [vmem:[%s246 + $0x38] sm:$0xff] %v1781
        %s1790 = scalar_lea.vmem %s219, 64 [#allocation4]
        %v1791 = vld [vmem:[%s1790] sm:$0xff]
        %v1792 = vld [vmem:[%s1790 + $0x8] sm:$0xff]
        %v1793 = vld [vmem:[%s1790 + $0x10] sm:$0xff]
        %v1794 = vld [vmem:[%s1790 + $0x18] sm:$0xff]
        %v1795 = vld [vmem:[%s1790 + $0x20] sm:$0xff]
        %v1796 = vld [vmem:[%s1790 + $0x28] sm:$0xff]
        %v1797 = vld [vmem:[%s1790 + $0x30] sm:$0xff]
        %v1798 = vld [vmem:[%s1790 + $0x38] sm:$0xff]
        %v1799 = vadd.f32 %v1791, %v1792
        %1800 = vadd.xlane.f32.xlu0 %v1799
        %v1801 = vpop.xlane.xlu0 %1800
        %v1802 = vadd.f32 %v1793, %v1794
        %1803 = vadd.xlane.f32.xlu0 %v1802
        %v1804 = vpop.xlane.xlu0 %1803
        %v1805 = vadd.f32 %v1795, %v1796
        %1806 = vadd.xlane.f32.xlu0 %v1805
        %v1807 = vpop.xlane.xlu0 %1806
        %v1808 = vadd.f32 %v1797, %v1798
        %1809 = vadd.xlane.f32.xlu0 %v1808
        %v1810 = vpop.xlane.xlu0 %1809
        %v1811 = vmul.f32 %v1801, %v314
        %v1812 = vmul.f32 %v1804, %v314
        %v1813 = vmul.f32 %v1807, %v314
        %v1814 = vmul.f32 %v1810, %v314
        %v1815 = vmax.f32 %v1791, %v1792
        %1816 = vmax.xlane.f32.xlu0 %v1815
        %v1817 = vpop.xlane.xlu0 %1816
        %v1818 = vmax.f32 %v1793, %v1794
        %1819 = vmax.xlane.f32.xlu0 %v1818
        %v1820 = vpop.xlane.xlu0 %1819
        %v1821 = vmax.f32 %v1795, %v1796
        %1822 = vmax.xlane.f32.xlu0 %v1821
        %v1823 = vpop.xlane.xlu0 %1822
        %v1824 = vmax.f32 %v1797, %v1798
        %1825 = vmax.xlane.f32.xlu0 %v1824
        %v1826 = vpop.xlane.xlu0 %1825
        %v1827 = vmul.f32 %v1811, %v249
        %v1828 = vmul.f32 %v1812, %v250
        %v1829 = vmul.f32 %v1813, %v251
        %v1830 = vmul.f32 %v1814, %v252
        %v1831 = vsel %vm335, %v1827, 0.0
        %v1832 = vsel %vm335, %v1828, 0.0
        %v1833 = vadd.f32 %v1831, %v1832
        %v1834 = vsel %vm335, %v1829, 0.0
        %v1835 = vadd.f32 %v1833, %v1834
        %v1836 = vsel %vm335, %v1830, 0.0
        %v1837 = vadd.f32 %v1835, %v1836
        %v1838 = vrot.slane %v1837, 4
        %v1839 = vadd.f32 %v1837, %v1838
        %v1840 = vrot.slane %v1839, 2
        %v1841 = vadd.f32 %v1839, %v1840
        %v1842 = vrot.slane %v1841, 1
        %v1843 = vadd.f32 %v1841, %v1842
        %v1844 = vmax.f32 %v1843, 0.0
        %v1845 = vmul.f32 %v1817, %v249
        %v1846 = vmul.f32 %v1820, %v250
        %v1847 = vmul.f32 %v1823, %v251
        %v1848 = vmul.f32 %v1826, %v252
        %v1849 = vsel %vm335, %v1845, 0.0
        %v1850 = vsel %vm335, %v1846, 0.0
        %v1851 = vadd.f32 %v1849, %v1850
        %v1852 = vsel %vm335, %v1847, 0.0
        %v1853 = vadd.f32 %v1851, %v1852
        %v1854 = vsel %vm335, %v1848, 0.0
        %v1855 = vadd.f32 %v1853, %v1854
        %v1856 = vrot.slane %v1855, 4
        %v1857 = vadd.f32 %v1855, %v1856
        %v1858 = vrot.slane %v1857, 2
        %v1859 = vadd.f32 %v1857, %v1858
        %v1860 = vrot.slane %v1859, 1
        %v1861 = vadd.f32 %v1859, %v1860
        %v1862 = vmax.f32 %v1861, 0.0
        %v1863 = vmul.f32 %v253, %v1844
        %v1864 = vmul.f32 %v254, %v1844
        %v1865 = vmul.f32 %v255, %v1844
        %v1866 = vmul.f32 %v256, %v1844
        %v1867 = vsel %vm335, %v1863, 0.0
        %1868 = vadd.xlane.f32.xlu0 %v1867
        %v1869 = vpop.xlane.xlu0 %1868
        %v1870 = vsel %vm335, %v1864, 0.0
        %1871 = vadd.xlane.f32.xlu0 %v1870
        %v1872 = vpop.xlane.xlu0 %1871
        %v1873 = vsel %vm335, %v1865, 0.0
        %1874 = vadd.xlane.f32.xlu0 %v1873
        %v1875 = vpop.xlane.xlu0 %1874
        %v1876 = vsel %vm335, %v1866, 0.0
        %1877 = vadd.xlane.f32.xlu0 %v1876
        %v1878 = vpop.xlane.xlu0 %1877
        %v1879 = vmul.f32 %v253, %v1862
        %v1880 = vmul.f32 %v254, %v1862
        %v1881 = vmul.f32 %v255, %v1862
        %v1882 = vmul.f32 %v256, %v1862
        %v1883 = vsel %vm335, %v1879, 0.0
        %1884 = vadd.xlane.f32.xlu0 %v1883
        %v1885 = vpop.xlane.xlu0 %1884
        %v1886 = vsel %vm335, %v1880, 0.0
        %1887 = vadd.xlane.f32.xlu0 %v1886
        %v1888 = vpop.xlane.xlu0 %1887
        %v1889 = vsel %vm335, %v1881, 0.0
        %1890 = vadd.xlane.f32.xlu0 %v1889
        %v1891 = vpop.xlane.xlu0 %1890
        %v1892 = vsel %vm335, %v1882, 0.0
        %1893 = vadd.xlane.f32.xlu0 %v1892
        %v1894 = vpop.xlane.xlu0 %1893
        %v1895 = vadd.f32 %v1869, %v1885
        %v1896 = vadd.f32 %v1872, %v1888
        %v1897 = vadd.f32 %v1875, %v1891
        %v1898 = vadd.f32 %v1878, %v1894
        %v1899 = vxor.u32 %v1895, 2147483648
        %v1900 = vxor.u32 %v1896, 2147483648
        %v1901 = vxor.u32 %v1897, 2147483648
        %v1902 = vxor.u32 %v1898, 2147483648
        %v1903 = vmul.f32 %v1899, 1.442695
        %v1904 = vpow.pop %v1903
        %v1905 = vmul.f32 %v1900, 1.442695
        %v1906 = vpow.pop %v1905
        %v1907 = vmul.f32 %v1901, 1.442695
        %v1908 = vpow.pop %v1907
        %v1909 = vmul.f32 %v1902, 1.442695
        %v1910 = vpow.pop %v1909
        %v1911 = vadd.f32 %v1904, 1.0
        %v1912 = vadd.f32 %v1906, 1.0
        %v1913 = vadd.f32 %v1908, 1.0
        %v1914 = vadd.f32 %v1910, 1.0
        %v1915 = vrcp.pop %v1911
        %v1916 = vmul.f32 %v1911, %v1915
        %v1917 = vsub.f32 1.0, %v1916
        %v1918 = vmul.f32 %v1915, %v1917
        %v1919 = vadd.f32 %v1915, %v1918
        %vm1920 = vweird.f32 %v1911
        %vm1921 = vweird.f32 %v1915
        %vm1922 = vmor %vm1920, %vm1921
        %v1923 = vsel %vm1922, %v1915, %v1919
        %v1924 = vand.u32 2147483647, %v1911
        %vm1925 = vcmp.eq.f32.partialorder %v1924, 8.507059e+37
        %v1926 = vand.u32 %v1911, 2147483648
        %v1927 = vor.u32 1.1754944e-38, %v1926
        %v1928 = vsel %vm1925, %v1927, %v1923
        %v1929 = vmul.f32 1.0, %v1928
        %v1930 = vrcp.pop %v1912
        %v1931 = vmul.f32 %v1912, %v1930
        %v1932 = vsub.f32 1.0, %v1931
        %v1933 = vmul.f32 %v1930, %v1932
        %v1934 = vadd.f32 %v1930, %v1933
        %vm1935 = vweird.f32 %v1912
        %vm1936 = vweird.f32 %v1930
        %vm1937 = vmor %vm1935, %vm1936
        %v1938 = vsel %vm1937, %v1930, %v1934
        %v1939 = vand.u32 2147483647, %v1912
        %vm1940 = vcmp.eq.f32.partialorder %v1939, 8.507059e+37
        %v1941 = vand.u32 %v1912, 2147483648
        %v1942 = vor.u32 1.1754944e-38, %v1941
        %v1943 = vsel %vm1940, %v1942, %v1938
        %v1944 = vmul.f32 1.0, %v1943
        %v1945 = vrcp.pop %v1913
        %v1946 = vmul.f32 %v1913, %v1945
        %v1947 = vsub.f32 1.0, %v1946
        %v1948 = vmul.f32 %v1945, %v1947
        %v1949 = vadd.f32 %v1945, %v1948
        %vm1950 = vweird.f32 %v1913
        %vm1951 = vweird.f32 %v1945
        %vm1952 = vmor %vm1950, %vm1951
        %v1953 = vsel %vm1952, %v1945, %v1949
        %v1954 = vand.u32 2147483647, %v1913
        %vm1955 = vcmp.eq.f32.partialorder %v1954, 8.507059e+37
        %v1956 = vand.u32 %v1913, 2147483648
        %v1957 = vor.u32 1.1754944e-38, %v1956
        %v1958 = vsel %vm1955, %v1957, %v1953
        %v1959 = vmul.f32 1.0, %v1958
        %v1960 = vrcp.pop %v1914
        %v1961 = vmul.f32 %v1914, %v1960
        %v1962 = vsub.f32 1.0, %v1961
        %v1963 = vmul.f32 %v1960, %v1962
        %v1964 = vadd.f32 %v1960, %v1963
        %vm1965 = vweird.f32 %v1914
        %vm1966 = vweird.f32 %v1960
        %vm1967 = vmor %vm1965, %vm1966
        %v1968 = vsel %vm1967, %v1960, %v1964
        %v1969 = vand.u32 2147483647, %v1914
        %vm1970 = vcmp.eq.f32.partialorder %v1969, 8.507059e+37
        %v1971 = vand.u32 %v1914, 2147483648
        %v1972 = vor.u32 1.1754944e-38, %v1971
        %v1973 = vsel %vm1970, %v1972, %v1968
        %v1974 = vmul.f32 1.0, %v1973
        %v1975 = vmul.f32 %v1791, %v1929
        %v1976 = vmul.f32 %v1792, %v1929
        %v1977 = vmul.f32 %v1793, %v1944
        %v1978 = vmul.f32 %v1794, %v1944
        %v1979 = vmul.f32 %v1795, %v1959
        %v1980 = vmul.f32 %v1796, %v1959
        %v1981 = vmul.f32 %v1797, %v1974
        %v1982 = vmul.f32 %v1798, %v1974
        %v1983 = vadd.f32 %v1975, %v1977
        %v1984 = vadd.f32 %v1983, %v1979
        %v1985 = vadd.f32 %v1984, %v1981
        %v1986 = vrot.slane %v1985, 4
        %v1987 = vadd.f32 %v1985, %v1986
        %v1988 = vrot.slane %v1987, 2
        %v1989 = vadd.f32 %v1987, %v1988
        %v1990 = vrot.slane %v1989, 1
        %v1991 = vadd.f32 %v1989, %v1990
        %v1992 = vadd.f32 %v1976, %v1978
        %v1993 = vadd.f32 %v1992, %v1980
        %v1994 = vadd.f32 %v1993, %v1982
        %v1995 = vrot.slane %v1994, 4
        %v1996 = vadd.f32 %v1994, %v1995
        %v1997 = vrot.slane %v1996, 2
        %v1998 = vadd.f32 %v1996, %v1997
        %v1999 = vrot.slane %v1998, 1
        %v2000 = vadd.f32 %v1998, %v1999
        %v2001 = vmul.f32 %v1991, %v512
        %v2002 = vmul.f32 %v2000, %v512
        %v2003 = vmax.f32 %v1975, %v1979
        %v2004 = vmax.f32 %v1977, %v1981
        %v2005 = vmax.f32 %v2003, %v2004
        %v2006 = vrot.slane %v2005, 4
        %v2007 = vmax.f32 %v2005, %v2006
        %v2008 = vrot.slane %v2007, 2
        %v2009 = vmax.f32 %v2007, %v2008
        %v2010 = vrot.slane %v2009, 1
        %v2011 = vmax.f32 %v2009, %v2010
        %v2012 = vmax.f32 %v1976, %v1980
        %v2013 = vmax.f32 %v1978, %v1982
        %v2014 = vmax.f32 %v2012, %v2013
        %v2015 = vrot.slane %v2014, 4
        %v2016 = vmax.f32 %v2014, %v2015
        %v2017 = vrot.slane %v2016, 2
        %v2018 = vmax.f32 %v2016, %v2017
        %v2019 = vrot.slane %v2018, 1
        %v2020 = vmax.f32 %v2018, %v2019
        %v2023 = vrot.slane %v2002, 7
        %v2024 = vsel %vm536, %v2001, %v2023
        %2026 = vst.msk [vmem:[%s543] ss:$2 sm:$0x3] %vm542, %v2024
        %v2029 = vrot.slane %v2020, 7
        %v2030 = vsel %vm536, %v2011, %v2029
        %2032 = vst.msk [vmem:[%s550] ss:$2 sm:$0x3] %vm542, %v2030
        %v2033 = vld [vmem:[#allocation2] sm:$0xff]
        %v2034 = vmul.f32 %v2033, %v560
        %v2035 = vadd.f32 %v2034, 0.0
        %v2036 = vmul.f32 %v2033, %v570
        %2038 = vrot.lane.b32.xlu0 %v2036, 112
        %v2039 = vpop.permute.xlu0 %2038
        %v2040 = vrot.slane %v2039, 2
        %v2041 = vsel %vm577, %v2039, %v2040
        %v2043 = vadd.f32 %v2035, %v2041
        %v2044 = vmul.f32 %v2033, %v587
        %2046 = vrot.lane.b32.xlu0 %v2044, 96
        %v2047 = vpop.permute.xlu0 %2046
        %v2048 = vrot.slane %v2047, 2
        %v2049 = vsel %vm594, %v2047, %v2048
        %v2051 = vadd.f32 %v2043, %v2049
        %v2052 = vmul.f32 %v2033, %v604
        %2054 = vrot.lane.b32.xlu0 %v2052, 80
        %v2055 = vpop.permute.xlu0 %2054
        %v2056 = vrot.slane %v2055, 2
        %v2057 = vsel %vm611, %v2055, %v2056
        %v2059 = vadd.f32 %v2051, %v2057
        %2061 = vrot.lane.b32.xlu0 %v2033, 115
        %v2062 = vpop.permute.xlu0 %2061
        %v2063 = vrot.slane %v2062, 2
        %v2064 = vrot.slane %v2062, 4
        %v2065 = vsel %vm623, %v2063, %v2064
        %v2067 = vmul.f32 %v2065, %v629
        %2069 = vrot.lane.b32.xlu0 %v2067, 77
        %v2070 = vpop.permute.xlu0 %2069
        %v2071 = vrot.slane %v2070, 6
        %v2072 = vsel %vm636, %v2071, %v2070
        %v2074 = vadd.f32 %v2059, %v2072
        %2075 = vrot.lane.b32.xlu0 %v2033, 99
        %v2076 = vpop.permute.xlu0 %2075
        %v2077 = vrot.slane %v2076, 2
        %v2078 = vrot.slane %v2076, 4
        %v2079 = vsel %vm647, %v2077, %v2078
        %v2081 = vmul.f32 %v2079, %v653
        %2083 = vrot.lane.b32.xlu0 %v2081, 77
        %v2084 = vpop.permute.xlu0 %2083
        %v2085 = vrot.slane %v2084, 6
        %v2086 = vsel %vm636, %v2085, %v2084
        %v2088 = vadd.f32 %v2074, %v2086
        %2089 = vrot.lane.b32.xlu0 %v2033, 83
        %v2090 = vpop.permute.xlu0 %2089
        %v2091 = vrot.slane %v2090, 2
        %v2092 = vrot.slane %v2090, 4
        %v2093 = vsel %vm670, %v2091, %v2092
        %v2095 = vmul.f32 %v2093, %v676
        %2097 = vrot.lane.b32.xlu0 %v2095, 77
        %v2098 = vpop.permute.xlu0 %2097
        %v2099 = vrot.slane %v2098, 6
        %v2100 = vsel %vm636, %v2099, %v2098
        %v2102 = vadd.f32 %v2088, %v2100
        %v2103 = vmul.f32 %v2102, %v704
        %v2104 = vadd.f32 %v2103, 0.0
        %v2105 = vmul.f32 %v2033, %v714
        %v2106 = vadd.f32 %v2105, 0.0
        %v2107 = vmul.f32 %v2033, %v724
        %2109 = vrot.lane.b32.xlu0 %v2107, 112
        %v2110 = vpop.permute.xlu0 %2109
        %v2111 = vrot.slane %v2110, 2
        %v2112 = vsel %vm577, %v2110, %v2111
        %v2114 = vadd.f32 %v2106, %v2112
        %v2115 = vmul.f32 %v2033, %v740
        %2117 = vrot.lane.b32.xlu0 %v2115, 96
        %v2118 = vpop.permute.xlu0 %2117
        %v2119 = vrot.slane %v2118, 2
        %v2120 = vsel %vm594, %v2118, %v2119
        %v2122 = vadd.f32 %v2114, %v2120
        %v2123 = vmul.f32 %v2033, %v756
        %2125 = vrot.lane.b32.xlu0 %v2123, 80
        %v2126 = vpop.permute.xlu0 %2125
        %v2127 = vrot.slane %v2126, 2
        %v2128 = vsel %vm611, %v2126, %v2127
        %v2130 = vadd.f32 %v2122, %v2128
        %2131 = vrot.lane.b32.xlu0 %v2033, 114
        %v2132 = vpop.permute.xlu0 %2131
        %v2133 = vrot.slane %v2132, 2
        %v2134 = vrot.slane %v2132, 4
        %v2135 = vsel %vm773, %v2133, %v2134
        %v2137 = vmul.f32 %v2135, %v779
        %2139 = vrot.lane.b32.xlu0 %v2137, 78
        %v2140 = vpop.permute.xlu0 %2139
        %v2141 = vrot.slane %v2140, 6
        %v2142 = vsel %vm786, %v2141, %v2140
        %v2144 = vadd.f32 %v2130, %v2142
        %2145 = vrot.lane.b32.xlu0 %v2033, 98
        %v2146 = vpop.permute.xlu0 %2145
        %v2147 = vrot.slane %v2146, 2
        %v2148 = vrot.slane %v2146, 4
        %v2149 = vsel %vm797, %v2147, %v2148
        %v2151 = vmul.f32 %v2149, %v803
        %2153 = vrot.lane.b32.xlu0 %v2151, 78
        %v2154 = vpop.permute.xlu0 %2153
        %v2155 = vrot.slane %v2154, 6
        %v2156 = vsel %vm786, %v2155, %v2154
        %v2158 = vadd.f32 %v2144, %v2156
        %2159 = vrot.lane.b32.xlu0 %v2033, 82
        %v2160 = vpop.permute.xlu0 %2159
        %v2161 = vrot.slane %v2160, 2
        %v2162 = vrot.slane %v2160, 4
        %v2163 = vsel %vm820, %v2161, %v2162
        %v2165 = vmul.f32 %v2163, %v826
        %2167 = vrot.lane.b32.xlu0 %v2165, 78
        %v2168 = vpop.permute.xlu0 %2167
        %v2169 = vrot.slane %v2168, 6
        %v2170 = vsel %vm786, %v2169, %v2168
        %v2172 = vadd.f32 %v2158, %v2170
        %v2173 = vmul.f32 %v2172, %v853
        %2175 = vrot.lane.b32.xlu0 %v2173, 127
        %v2176 = vpop.permute.xlu0 %2175
        %v2177 = vrot.slane %v2176, 2
        %v2178 = vsel %vm860, %v2176, %v2177
        %v2180 = vadd.f32 %v2104, %v2178
        %v2181 = vmul.f32 %v2033, %v870
        %v2182 = vadd.f32 %v2181, 0.0
        %v2183 = vmul.f32 %v2033, %v880
        %2185 = vrot.lane.b32.xlu0 %v2183, 112
        %v2186 = vpop.permute.xlu0 %2185
        %v2187 = vrot.slane %v2186, 2
        %v2188 = vsel %vm577, %v2186, %v2187
        %v2190 = vadd.f32 %v2182, %v2188
        %v2191 = vmul.f32 %v2033, %v896
        %2193 = vrot.lane.b32.xlu0 %v2191, 96
        %v2194 = vpop.permute.xlu0 %2193
        %v2195 = vrot.slane %v2194, 2
        %v2196 = vsel %vm594, %v2194, %v2195
        %v2198 = vadd.f32 %v2190, %v2196
        %v2199 = vmul.f32 %v2033, %v912
        %2201 = vrot.lane.b32.xlu0 %v2199, 80
        %v2202 = vpop.permute.xlu0 %2201
        %v2203 = vrot.slane %v2202, 2
        %v2204 = vsel %vm611, %v2202, %v2203
        %v2206 = vadd.f32 %v2198, %v2204
        %2207 = vrot.lane.b32.xlu0 %v2033, 113
        %v2208 = vpop.permute.xlu0 %2207
        %v2209 = vrot.slane %v2208, 2
        %v2210 = vrot.slane %v2208, 4
        %v2211 = vsel %vm929, %v2209, %v2210
        %v2213 = vmul.f32 %v2211, %v935
        %2215 = vrot.lane.b32.xlu0 %v2213, 79
        %v2216 = vpop.permute.xlu0 %2215
        %v2217 = vrot.slane %v2216, 6
        %v2218 = vsel %vm942, %v2217, %v2216
        %v2220 = vadd.f32 %v2206, %v2218
        %2221 = vrot.lane.b32.xlu0 %v2033, 97
        %v2222 = vpop.permute.xlu0 %2221
        %v2223 = vrot.slane %v2222, 2
        %v2224 = vrot.slane %v2222, 4
        %v2225 = vsel %vm953, %v2223, %v2224
        %v2227 = vmul.f32 %v2225, %v959
        %2229 = vrot.lane.b32.xlu0 %v2227, 79
        %v2230 = vpop.permute.xlu0 %2229
        %v2231 = vrot.slane %v2230, 6
        %v2232 = vsel %vm942, %v2231, %v2230
        %v2234 = vadd.f32 %v2220, %v2232
        %2235 = vrot.lane.b32.xlu0 %v2033, 81
        %v2236 = vpop.permute.xlu0 %2235
        %v2237 = vrot.slane %v2236, 2
        %v2238 = vrot.slane %v2236, 4
        %v2239 = vsel %vm976, %v2237, %v2238
        %v2241 = vmul.f32 %v2239, %v982
        %2243 = vrot.lane.b32.xlu0 %v2241, 79
        %v2244 = vpop.permute.xlu0 %2243
        %v2245 = vrot.slane %v2244, 6
        %v2246 = vsel %vm942, %v2245, %v2244
        %v2248 = vadd.f32 %v2234, %v2246
        %v2249 = vmul.f32 %v2248, %v1009
        %2251 = vrot.lane.b32.xlu0 %v2249, 126
        %v2252 = vpop.permute.xlu0 %2251
        %v2253 = vrot.slane %v2252, 2
        %v2254 = vsel %vm1016, %v2252, %v2253
        %v2256 = vadd.f32 %v2180, %v2254
        %v2257 = vmul.f32 %v2033, %v1026
        %v2258 = vadd.f32 %v2257, 0.0
        %v2259 = vmul.f32 %v2033, %v1036
        %2261 = vrot.lane.b32.xlu0 %v2259, 112
        %v2262 = vpop.permute.xlu0 %2261
        %v2263 = vrot.slane %v2262, 2
        %v2264 = vsel %vm577, %v2262, %v2263
        %v2266 = vadd.f32 %v2258, %v2264
        %v2267 = vmul.f32 %v2033, %v1052
        %2269 = vrot.lane.b32.xlu0 %v2267, 96
        %v2270 = vpop.permute.xlu0 %2269
        %v2271 = vrot.slane %v2270, 2
        %v2272 = vsel %vm594, %v2270, %v2271
        %v2274 = vadd.f32 %v2266, %v2272
        %v2275 = vrot.slane %v2033, 2
        %v2277 = vmul.f32 %v2275, %v1070
        %2279 = vrot.lane.b32.xlu0 %v2277, 80
        %v2280 = vpop.permute.xlu0 %2279
        %v2281 = vrot.slane %v2280, 6
        %v2282 = vsel %vm611, %v2281, %v2280
        %v2284 = vadd.f32 %v2274, %v2282
        %2285 = vrot.lane.b32.xlu0 %v2033, 112
        %v2286 = vpop.permute.xlu0 %2285
        %v2287 = vrot.slane %v2286, 2
        %v2288 = vrot.slane %v2286, 4
        %v2289 = vsel %vm577, %v2287, %v2288
        %v2291 = vmul.f32 %v2289, %v1092
        %2293 = vrot.lane.b32.xlu0 %v2291, 80
        %v2294 = vpop.permute.xlu0 %2293
        %v2295 = vrot.slane %v2294, 6
        %v2296 = vsel %vm611, %v2295, %v2294
        %v2298 = vadd.f32 %v2284, %v2296
        %2299 = vrot.lane.b32.xlu0 %v2033, 96
        %v2300 = vpop.permute.xlu0 %2299
        %v2301 = vrot.slane %v2300, 2
        %v2302 = vrot.slane %v2300, 4
        %v2303 = vsel %vm594, %v2301, %v2302
        %v2305 = vmul.f32 %v2303, %v1114
        %2307 = vrot.lane.b32.xlu0 %v2305, 80
        %v2308 = vpop.permute.xlu0 %2307
        %v2309 = vrot.slane %v2308, 6
        %v2310 = vsel %vm611, %v2309, %v2308
        %v2312 = vadd.f32 %v2298, %v2310
        %2313 = vrot.lane.b32.xlu0 %v2033, 80
        %v2314 = vpop.permute.xlu0 %2313
        %v2315 = vrot.slane %v2314, 2
        %v2316 = vrot.slane %v2314, 4
        %v2317 = vsel %vm611, %v2315, %v2316
        %v2319 = vmul.f32 %v2317, %v1136
        %2321 = vrot.lane.b32.xlu0 %v2319, 80
        %v2322 = vpop.permute.xlu0 %2321
        %v2323 = vrot.slane %v2322, 6
        %v2324 = vsel %vm611, %v2323, %v2322
        %v2326 = vadd.f32 %v2312, %v2324
        %v2327 = vmul.f32 %v2326, %v1161
        %2329 = vrot.lane.b32.xlu0 %v2327, 125
        %v2330 = vpop.permute.xlu0 %2329
        %v2331 = vrot.slane %v2330, 2
        %v2332 = vsel %vm1168, %v2330, %v2331
        %v2334 = vadd.f32 %v2256, %v2332
        %v2335 = vmul.f32 %v2033, %v1178
        %v2336 = vadd.f32 %v2335, 0.0
        %v2337 = vmul.f32 %v2033, %v1188
        %2339 = vrot.lane.b32.xlu0 %v2337, 112
        %v2340 = vpop.permute.xlu0 %2339
        %v2341 = vrot.slane %v2340, 2
        %v2342 = vsel %vm577, %v2340, %v2341
        %v2344 = vadd.f32 %v2336, %v2342
        %v2345 = vmul.f32 %v2033, %v1204
        %2347 = vrot.lane.b32.xlu0 %v2345, 96
        %v2348 = vpop.permute.xlu0 %2347
        %v2349 = vrot.slane %v2348, 2
        %v2350 = vsel %vm594, %v2348, %v2349
        %v2352 = vadd.f32 %v2344, %v2350
        %2353 = vrot.lane.b32.xlu0 %v2033, 127
        %v2354 = vpop.permute.xlu0 %2353
        %v2355 = vrot.slane %v2354, 2
        %v2356 = vrot.slane %v2354, 4
        %v2357 = vsel %vm860, %v2355, %v2356
        %v2359 = vmul.f32 %v2357, %v1226
        %2361 = vrot.lane.b32.xlu0 %v2359, 81
        %v2362 = vpop.permute.xlu0 %2361
        %v2363 = vrot.slane %v2362, 6
        %v2364 = vsel %vm976, %v2363, %v2362
        %v2366 = vadd.f32 %v2352, %v2364
        %2367 = vrot.lane.b32.xlu0 %v2033, 111
        %v2368 = vpop.permute.xlu0 %2367
        %v2369 = vrot.slane %v2368, 2
        %v2370 = vrot.slane %v2368, 4
        %v2371 = vsel %vm1243, %v2369, %v2370
        %v2373 = vmul.f32 %v2371, %v1249
        %2375 = vrot.lane.b32.xlu0 %v2373, 81
        %v2376 = vpop.permute.xlu0 %2375
        %v2377 = vrot.slane %v2376, 6
        %v2378 = vsel %vm976, %v2377, %v2376
        %v2380 = vadd.f32 %v2366, %v2378
        %2381 = vrot.lane.b32.xlu0 %v2033, 95
        %v2382 = vpop.permute.xlu0 %2381
        %v2383 = vrot.slane %v2382, 2
        %v2384 = vrot.slane %v2382, 4
        %v2385 = vsel %vm1266, %v2383, %v2384
        %v2387 = vmul.f32 %v2385, %v1272
        %2389 = vrot.lane.b32.xlu0 %v2387, 81
        %v2390 = vpop.permute.xlu0 %2389
        %v2391 = vrot.slane %v2390, 6
        %v2392 = vsel %vm976, %v2391, %v2390
        %v2394 = vadd.f32 %v2380, %v2392
        %2395 = vrot.lane.b32.xlu0 %v2033, 79
        %v2396 = vpop.permute.xlu0 %2395
        %v2397 = vrot.slane %v2396, 2
        %v2398 = vrot.slane %v2396, 4
        %v2399 = vsel %vm942, %v2397, %v2398
        %v2401 = vmul.f32 %v2399, %v1294
        %2403 = vrot.lane.b32.xlu0 %v2401, 81
        %v2404 = vpop.permute.xlu0 %2403
        %v2405 = vrot.slane %v2404, 6
        %v2406 = vsel %vm976, %v2405, %v2404
        %v2408 = vadd.f32 %v2394, %v2406
        %v2409 = vmul.f32 %v2408, %v1321
        %2411 = vrot.lane.b32.xlu0 %v2409, 124
        %v2412 = vpop.permute.xlu0 %2411
        %v2413 = vrot.slane %v2412, 2
        %v2414 = vsel %vm1328, %v2412, %v2413
        %v2416 = vadd.f32 %v2334, %v2414
        %v2417 = vmul.f32 %v2033, %v1338
        %v2418 = vadd.f32 %v2417, 0.0
        %v2419 = vmul.f32 %v2033, %v1348
        %2421 = vrot.lane.b32.xlu0 %v2419, 112
        %v2422 = vpop.permute.xlu0 %2421
        %v2423 = vrot.slane %v2422, 2
        %v2424 = vsel %vm577, %v2422, %v2423
        %v2426 = vadd.f32 %v2418, %v2424
        %v2427 = vmul.f32 %v2033, %v1364
        %2429 = vrot.lane.b32.xlu0 %v2427, 96
        %v2430 = vpop.permute.xlu0 %2429
        %v2431 = vrot.slane %v2430, 2
        %v2432 = vsel %vm594, %v2430, %v2431
        %v2434 = vadd.f32 %v2426, %v2432
        %2435 = vrot.lane.b32.xlu0 %v2033, 126
        %v2436 = vpop.permute.xlu0 %2435
        %v2437 = vrot.slane %v2436, 2
        %v2438 = vrot.slane %v2436, 4
        %v2439 = vsel %vm1016, %v2437, %v2438
        %v2441 = vmul.f32 %v2439, %v1386
        %2443 = vrot.lane.b32.xlu0 %v2441, 82
        %v2444 = vpop.permute.xlu0 %2443
        %v2445 = vrot.slane %v2444, 6
        %v2446 = vsel %vm820, %v2445, %v2444
        %v2448 = vadd.f32 %v2434, %v2446
        %2449 = vrot.lane.b32.xlu0 %v2033, 110
        %v2450 = vpop.permute.xlu0 %2449
        %v2451 = vrot.slane %v2450, 2
        %v2452 = vrot.slane %v2450, 4
        %v2453 = vsel %vm1403, %v2451, %v2452
        %v2455 = vmul.f32 %v2453, %v1409
        %2457 = vrot.lane.b32.xlu0 %v2455, 82
        %v2458 = vpop.permute.xlu0 %2457
        %v2459 = vrot.slane %v2458, 6
        %v2460 = vsel %vm820, %v2459, %v2458
        %v2462 = vadd.f32 %v2448, %v2460
        %2463 = vrot.lane.b32.xlu0 %v2033, 94
        %v2464 = vpop.permute.xlu0 %2463
        %v2465 = vrot.slane %v2464, 2
        %v2466 = vrot.slane %v2464, 4
        %v2467 = vsel %vm1426, %v2465, %v2466
        %v2469 = vmul.f32 %v2467, %v1432
        %2471 = vrot.lane.b32.xlu0 %v2469, 82
        %v2472 = vpop.permute.xlu0 %2471
        %v2473 = vrot.slane %v2472, 6
        %v2474 = vsel %vm820, %v2473, %v2472
        %v2476 = vadd.f32 %v2462, %v2474
        %2477 = vrot.lane.b32.xlu0 %v2033, 78
        %v2478 = vpop.permute.xlu0 %2477
        %v2479 = vrot.slane %v2478, 2
        %v2480 = vrot.slane %v2478, 4
        %v2481 = vsel %vm786, %v2479, %v2480
        %v2483 = vmul.f32 %v2481, %v1454
        %2485 = vrot.lane.b32.xlu0 %v2483, 82
        %v2486 = vpop.permute.xlu0 %2485
        %v2487 = vrot.slane %v2486, 6
        %v2488 = vsel %vm820, %v2487, %v2486
        %v2490 = vadd.f32 %v2476, %v2488
        %v2491 = vmul.f32 %v2490, %v1481
        %2493 = vrot.lane.b32.xlu0 %v2491, 123
        %v2494 = vpop.permute.xlu0 %2493
        %v2495 = vrot.slane %v2494, 2
        %v2496 = vsel %vm1488, %v2494, %v2495
        %v2498 = vadd.f32 %v2416, %v2496
        %v2499 = vmul.f32 %v2033, %v1498
        %v2500 = vadd.f32 %v2499, 0.0
        %v2501 = vmul.f32 %v2033, %v1508
        %2503 = vrot.lane.b32.xlu0 %v2501, 112
        %v2504 = vpop.permute.xlu0 %2503
        %v2505 = vrot.slane %v2504, 2
        %v2506 = vsel %vm577, %v2504, %v2505
        %v2508 = vadd.f32 %v2500, %v2506
        %v2509 = vmul.f32 %v2033, %v1524
        %2511 = vrot.lane.b32.xlu0 %v2509, 96
        %v2512 = vpop.permute.xlu0 %2511
        %v2513 = vrot.slane %v2512, 2
        %v2514 = vsel %vm594, %v2512, %v2513
        %v2516 = vadd.f32 %v2508, %v2514
        %2517 = vrot.lane.b32.xlu0 %v2033, 125
        %v2518 = vpop.permute.xlu0 %2517
        %v2519 = vrot.slane %v2518, 2
        %v2520 = vrot.slane %v2518, 4
        %v2521 = vsel %vm1168, %v2519, %v2520
        %v2523 = vmul.f32 %v2521, %v1546
        %2525 = vrot.lane.b32.xlu0 %v2523, 83
        %v2526 = vpop.permute.xlu0 %2525
        %v2527 = vrot.slane %v2526, 6
        %v2528 = vsel %vm670, %v2527, %v2526
        %v2530 = vadd.f32 %v2516, %v2528
        %2531 = vrot.lane.b32.xlu0 %v2033, 109
        %v2532 = vpop.permute.xlu0 %2531
        %v2533 = vrot.slane %v2532, 2
        %v2534 = vrot.slane %v2532, 4
        %v2535 = vsel %vm1563, %v2533, %v2534
        %v2537 = vmul.f32 %v2535, %v1569
        %2539 = vrot.lane.b32.xlu0 %v2537, 83
        %v2540 = vpop.permute.xlu0 %2539
        %v2541 = vrot.slane %v2540, 6
        %v2542 = vsel %vm670, %v2541, %v2540
        %v2544 = vadd.f32 %v2530, %v2542
        %2545 = vrot.lane.b32.xlu0 %v2033, 93
        %v2546 = vpop.permute.xlu0 %2545
        %v2547 = vrot.slane %v2546, 2
        %v2548 = vrot.slane %v2546, 4
        %v2549 = vsel %vm1586, %v2547, %v2548
        %v2551 = vmul.f32 %v2549, %v1592
        %2553 = vrot.lane.b32.xlu0 %v2551, 83
        %v2554 = vpop.permute.xlu0 %2553
        %v2555 = vrot.slane %v2554, 6
        %v2556 = vsel %vm670, %v2555, %v2554
        %v2558 = vadd.f32 %v2544, %v2556
        %2559 = vrot.lane.b32.xlu0 %v2033, 77
        %v2560 = vpop.permute.xlu0 %2559
        %v2561 = vrot.slane %v2560, 2
        %v2562 = vrot.slane %v2560, 4
        %v2563 = vsel %vm636, %v2561, %v2562
        %v2565 = vmul.f32 %v2563, %v1614
        %2567 = vrot.lane.b32.xlu0 %v2565, 83
        %v2568 = vpop.permute.xlu0 %2567
        %v2569 = vrot.slane %v2568, 6
        %v2570 = vsel %vm670, %v2569, %v2568
        %v2572 = vadd.f32 %v2558, %v2570
        %v2573 = vmul.f32 %v2572, %v1641
        %2575 = vrot.lane.b32.xlu0 %v2573, 122
        %v2576 = vpop.permute.xlu0 %2575
        %v2577 = vrot.slane %v2576, 2
        %v2578 = vsel %vm1648, %v2576, %v2577
        %v2580 = vadd.f32 %v2498, %v2578
        %2582 = vst [vmem:[#allocation1] ss:$4 sm:$0xff] %v2580
        %v2583 = vld.sshfl [vmem:[#allocation1] sm:$0xff pattern:$0x73625140]
        %v2584 = vld.sshfl [vmem:[#allocation1 + $0x8] sm:$0xff pattern:$0x73625140]
        %v2585 = vld.sshfl [vmem:[#allocation1 + $0x10] sm:$0xff pattern:$0x73625140]
        %v2589 = vsel %vm1660, %v2583, 0.0
        %v2590 = vrot.slane %v2589, 4
        %v2591 = vadd.f32 %v2589, %v2590
        %v2592 = vrot.slane %v2591, 2
        %v2593 = vadd.f32 %v2591, %v2592
        %v2594 = vrot.slane %v2593, 1
        %v2595 = vadd.f32 %v2593, %v2594
        %v2596 = vsel %vm699, %v2584, 0.0
        %v2597 = vrot.slane %v2596, 4
        %v2598 = vadd.f32 %v2596, %v2597
        %v2599 = vrot.slane %v2598, 2
        %v2600 = vadd.f32 %v2598, %v2599
        %v2601 = vrot.slane %v2600, 1
        %v2602 = vadd.f32 %v2600, %v2601
        %v2603 = vsel %vm1675, %v2585, 0.0
        %v2604 = vrot.slane %v2603, 4
        %v2605 = vadd.f32 %v2603, %v2604
        %v2606 = vrot.slane %v2605, 2
        %v2607 = vadd.f32 %v2605, %v2606
        %v2608 = vrot.slane %v2607, 1
        %v2609 = vadd.f32 %v2607, %v2608
        %v2610 = vadd.f32 %v2595, %v1683
        %v2611 = vadd.f32 %v2602, %v1683
        %v2612 = vadd.f32 %v2609, %v1683
        %v2613 = vxor.u32 %v2610, 2147483648
        %v2614 = vxor.u32 %v2611, 2147483648
        %v2615 = vxor.u32 %v2612, 2147483648
        %v2616 = vmul.f32 %v2613, 1.442695
        %v2617 = vpow.pop %v2616
        %v2618 = vmul.f32 %v2614, 1.442695
        %v2619 = vpow.pop %v2618
        %v2620 = vmul.f32 %v2615, 1.442695
        %v2621 = vpow.pop %v2620
        %v2622 = vadd.f32 %v2617, 1.0
        %v2623 = vadd.f32 %v2619, 1.0
        %v2624 = vadd.f32 %v2621, 1.0
        %v2625 = vrcp.pop %v2622
        %v2626 = vmul.f32 %v2622, %v2625
        %v2627 = vsub.f32 1.0, %v2626
        %v2628 = vmul.f32 %v2625, %v2627
        %v2629 = vadd.f32 %v2625, %v2628
        %vm2630 = vweird.f32 %v2622
        %vm2631 = vweird.f32 %v2625
        %vm2632 = vmor %vm2630, %vm2631
        %v2633 = vsel %vm2632, %v2625, %v2629
        %v2634 = vand.u32 2147483647, %v2622
        %vm2635 = vcmp.eq.f32.partialorder %v2634, 8.507059e+37
        %v2636 = vand.u32 %v2622, 2147483648
        %v2637 = vor.u32 1.1754944e-38, %v2636
        %v2638 = vsel %vm2635, %v2637, %v2633
        %v2639 = vmul.f32 1.0, %v2638
        %v2640 = vrcp.pop %v2623
        %v2641 = vmul.f32 %v2623, %v2640
        %v2642 = vsub.f32 1.0, %v2641
        %v2643 = vmul.f32 %v2640, %v2642
        %v2644 = vadd.f32 %v2640, %v2643
        %vm2645 = vweird.f32 %v2623
        %vm2646 = vweird.f32 %v2640
        %vm2647 = vmor %vm2645, %vm2646
        %v2648 = vsel %vm2647, %v2640, %v2644
        %v2649 = vand.u32 2147483647, %v2623
        %vm2650 = vcmp.eq.f32.partialorder %v2649, 8.507059e+37
        %v2651 = vand.u32 %v2623, 2147483648
        %v2652 = vor.u32 1.1754944e-38, %v2651
        %v2653 = vsel %vm2650, %v2652, %v2648
        %v2654 = vmul.f32 1.0, %v2653
        %v2655 = vrcp.pop %v2624
        %v2656 = vmul.f32 %v2624, %v2655
        %v2657 = vsub.f32 1.0, %v2656
        %v2658 = vmul.f32 %v2655, %v2657
        %v2659 = vadd.f32 %v2655, %v2658
        %vm2660 = vweird.f32 %v2624
        %vm2661 = vweird.f32 %v2655
        %vm2662 = vmor %vm2660, %vm2661
        %v2663 = vsel %vm2662, %v2655, %v2659
        %v2664 = vand.u32 2147483647, %v2624
        %vm2665 = vcmp.eq.f32.partialorder %v2664, 8.507059e+37
        %v2666 = vand.u32 %v2624, 2147483648
        %v2667 = vor.u32 1.1754944e-38, %v2666
        %v2668 = vsel %vm2665, %v2667, %v2663
        %v2669 = vmul.f32 1.0, %v2668
        %v2670 = vld [vmem:[%s1790] sm:$0xff]
        %v2671 = vld [vmem:[%s1790 + $0x8] sm:$0xff]
        %v2672 = vld [vmem:[%s1790 + $0x10] sm:$0xff]
        %v2673 = vld [vmem:[%s1790 + $0x18] sm:$0xff]
        %v2674 = vld [vmem:[%s1790 + $0x20] sm:$0xff]
        %v2675 = vld [vmem:[%s1790 + $0x28] sm:$0xff]
        %v2676 = vld [vmem:[%s1790 + $0x30] sm:$0xff]
        %v2677 = vld [vmem:[%s1790 + $0x38] sm:$0xff]
        %2681 = vrot.lane.b32.xlu0 %v2639, 51
        %v2682 = vpop.permute.xlu0 %2681
        %2683 = vrot.lane.b32.xlu0 %v2654, 51
        %v2684 = vpop.permute.xlu0 %2683
        %2685 = vrot.lane.b32.xlu0 %v2669, 51
        %v2686 = vpop.permute.xlu0 %2685
        %v2687 = vsel %vm1761, %v2682, %v2684
        %v2688 = vsel %vm1761, %v2684, %v2686
        %v2691 = vmul.f32 %v2670, %v2687
        %v2692 = vmul.f32 %v2671, %v2688
        %v2693 = vmul.f32 %v2672, %v2687
        %v2694 = vmul.f32 %v2673, %v2688
        %v2695 = vmul.f32 %v2674, %v2687
        %v2696 = vmul.f32 %v2675, %v2688
        %v2697 = vmul.f32 %v2676, %v2687
        %v2698 = vmul.f32 %v2677, %v2688
        %v2699 = vmul.f32 %v2691, %v1929
        %v2700 = vmul.f32 %v2692, %v1929
        %v2701 = vmul.f32 %v2693, %v1944
        %v2702 = vmul.f32 %v2694, %v1944
        %v2703 = vmul.f32 %v2695, %v1959
        %v2704 = vmul.f32 %v2696, %v1959
        %v2705 = vmul.f32 %v2697, %v1974
        %v2706 = vmul.f32 %v2698, %v1974
        %s2707 = scalar_lea.vmem %s246, 64 [#allocation7]
        %2708 = vst [vmem:[%s2707] sm:$0xff] %v2699
        %2709 = vst [vmem:[%s2707 + $0x8] sm:$0xff] %v2700
        %2710 = vst [vmem:[%s2707 + $0x10] sm:$0xff] %v2701
        %2711 = vst [vmem:[%s2707 + $0x18] sm:$0xff] %v2702
        %2712 = vst [vmem:[%s2707 + $0x20] sm:$0xff] %v2703
        %2713 = vst [vmem:[%s2707 + $0x28] sm:$0xff] %v2704
        %2714 = vst [vmem:[%s2707 + $0x30] sm:$0xff] %v2705
        %2715 = vst [vmem:[%s2707 + $0x38] sm:$0xff] %v2706
        %s2716 = sand.u32 %s141, 1
        %s2717 = scalar_lea.sflag [#allocation6], %s2716
        %s2718 = sand.u32 %s141, 1
        %s2719 = smul.addr %s2718, 128
        %s2720 = scalar_lea.vmem [#allocation7], %s2719
        // Predicated region
        $region45: #{tpu_custom_call.1} parent=39 // pred_check
          %p2721 = pneg %p151
        $region46: #{tpu_custom_call.1} parent=39 // pred_check_branch
          %2723 = sbr.rel (%p2721) target = $region48
        $region47: #{tpu_custom_call.1} parent=39 // pred_region
          %s2724 = smul.u32 2, %s23
          %2726 = vsyncadd %s2717, 0
          %s2727 = smul.addr %s2724, 8
          %s2728 = smul.addr %s2727, 8
          %s2729 = scalar_lea.hbm %s5, %s2728
          %s2730 = sshll.u32 %s2720, 4
          %s2731 = int_to_ptr.vmem [resolvable:$true] %s2730
          %s2732 = sshll.u32 %s2729, 4
          %s2733 = int_to_ptr.hbm [resolvable:$true] %s2732
          %2738 = dma.vmem_to_hbm [thread:$0]  %s2731, 2048, %s2733, %s2717, 256, 256, 16
        $region48: #{tpu_custom_call.1} parent=39 // pred_fallthru
          _
      $region40: #{tpu_custom_call.1} parent=5 // pred_fallthru
        _
      %p2739 = scmp.le.s32.totalorder 2, %s18
      // Predicated region
      $region49: #{tpu_custom_call.1} parent=5 // pred_check
        %p2740 = pneg %p2739
      $region50: #{tpu_custom_call.1} parent=5 // pred_check_branch
        %2742 = sbr.rel (%p2740) target = $region52
      $region51: #{tpu_custom_call.1} parent=5 // pred_region
        %s2743 = ssub.s32 %s18, 2
        // Predicated region
        $region53: #{tpu_custom_call.1} parent=51 // pred_check
          %p2744 = pneg %p157
        $region54: #{tpu_custom_call.1} parent=51 // pred_check_branch
          %2746 = sbr.rel (%p2744) target = $region56
        $region55: #{tpu_custom_call.1} parent=51 // pred_region
          %s2747 = sand.u32 %s142, 1
          %s2748 = scalar_lea.sflag [#allocation6], %s2747
          %s2749 = sand.u32 %s142, 1
          %s2750 = smul.addr %s2749, 128
          %s2751 = scalar_lea.vmem [#allocation7], %s2750
          %2753 = dma.done %s2748, 2048
        $region56: #{tpu_custom_call.1} parent=51 // pred_fallthru
          _
      $region52: #{tpu_custom_call.1} parent=5 // pred_fallthru
        _
    $region6: #{tpu_custom_call.1} parent=1 // loop_footer
      %s22 = sadd.s32 1, %s18
    $region7: #{tpu_custom_call.1} parent=1 // loop_footer_branch
      %17 = sbr.rel target = $region3
    $region8: #{tpu_custom_call.1} parent=1 // loop_exit
      _
    %2754 = vsyncpa [#allocation5], 1
    %s2755 = scalar_lea.sflag [#allocation5], 1
    %2756 = vsyncpa %s2755, 1
    %2757 = vsyncpa [#allocation6], 1
    %s2758 = scalar_lea.sflag [#allocation6], 1
    %2759 = vsyncpa %s2758, 1

</llo_original>
